<compile_context>
chip_gen: v5e
topology: v5e:2x2
jax: 0.10.0
libtpu: 0.0.40
codegen_flags: <defaults>
</compile_context>

<pallas_src>
import math
import functools

import jax
import jax.numpy as jnp
from jax.experimental import pallas as pl
from jax.experimental.pallas import tpu as pltpu


# ----------------------------- Pallas kernels ------------------------------

def _layernorm(x, g, b, eps):
    mean = jnp.mean(x, axis=-1, keepdims=True)
    c = x - mean
    var = jnp.mean(c * c, axis=-1, keepdims=True)       # biased variance (torch)
    return c * jax.lax.rsqrt(var + eps) * g + b


def _pos_encode_kernel(x_ref, pe_ref, o_ref, *, scale):
    # x: (B, S, E); pe: (S, E) broadcast over batch inside the kernel.
    o_ref[...] = x_ref[...] * scale + pe_ref[...][None, :, :]


def _layernorm_kernel(x_ref, g_ref, b_ref, o_ref, *, eps):
    o_ref[...] = _layernorm(x_ref[...], g_ref[...], b_ref[...], eps)


def _attn_block_kernel(x_ref, m_ref, wq_ref, bq_ref, wkv_ref, bkv_ref,
                       wo_ref, bo_ref, g_ref, b_ref, o_ref, *, nhead, eps):
    """One batch element per grid step: out = LayerNorm(x + MHA(x, mem, mem))."""
    x = x_ref[0]                        # (Sq, E)  f32
    mem = m_ref[0]                      # (Skv, E) f32
    E = x.shape[-1]
    Dh = E // nhead
    scale = 1.0 / math.sqrt(Dh)
    cdt = jnp.bfloat16                  # MXU compute dtype (f32 accumulation)

    # Fused projections: one wide matmul for Q, one for K|V.
    q = jnp.dot(x.astype(cdt), wq_ref[...],
                preferred_element_type=jnp.float32) + bq_ref[...]          # (Sq, E)
    kv = jnp.dot(mem.astype(cdt), wkv_ref[...],
                 preferred_element_type=jnp.float32) + bkv_ref[...]        # (Skv, 2E)
    k = kv[:, :E]
    v = kv[:, E:]

    acc = jnp.zeros_like(x)             # sum_h (softmax(Q_h K_h^T) V_h) @ W_o[h]
    for h in range(nhead):              # static unroll over heads
        lo = h * Dh
        qh = (q[:, lo:lo + Dh] * scale).astype(cdt)                        # (Sq, Dh)
        kh = k[:, lo:lo + Dh].astype(cdt)                                  # (Skv, Dh)
        vh = v[:, lo:lo + Dh].astype(cdt)                                  # (Skv, Dh)
        s = jax.lax.dot_general(qh, kh, (((1,), (1,)), ((), ())),
                                preferred_element_type=jnp.float32)        # (Sq, Skv)
        s = s - jnp.max(s, axis=-1, keepdims=True)
        p = jnp.exp(s)
        p = p * pl.reciprocal(jnp.sum(p, axis=-1, keepdims=True), approx=True)
        oh = jnp.dot(p.astype(cdt), vh,
                     preferred_element_type=jnp.float32)                   # (Sq, Dh)
        acc = acc + jnp.dot(oh.astype(cdt), wo_ref[h],
                            preferred_element_type=jnp.float32)            # (Sq, E)

    y = x + acc + bo_ref[...]           # residual + output-projection bias
    o_ref[0] = _layernorm(y, g_ref[...], b_ref[...], eps)


def _ffn_block_kernel(x_ref, w1_ref, b1_ref, w2_ref, b2_ref, g_ref, b_ref,
                      o_ref, *, eps):
    """out = LayerNorm(x + W2·relu(W1·x)); the (M, dff) intermediate stays on-chip."""
    x = x_ref[...]
    cdt = jnp.bfloat16
    h = jnp.dot(x.astype(cdt), w1_ref[...],
                preferred_element_type=jnp.float32) + b1_ref[...]
    h = jnp.maximum(h, 0.0)
    f = jnp.dot(h.astype(cdt), w2_ref[...],
                preferred_element_type=jnp.float32) + b2_ref[...]
    o_ref[...] = _layernorm(x + f, g_ref[...], b_ref[...], eps)


def _ln_linear_kernel(x_ref, g_ref, b_ref, w_ref, bias_ref, o_ref, *, eps):
    """Fused final LayerNorm + output projection (vocab tiled along the grid)."""
    n = _layernorm(x_ref[...], g_ref[...], b_ref[...], eps)
    o_ref[...] = jnp.dot(n.astype(jnp.bfloat16), w_ref[...],
                         preferred_element_type=jnp.float32) + bias_ref[...]


# ------------------------------- wrappers -----------------------------------

def pos_encode(x, pe):
    B, S, E = x.shape
    kernel = functools.partial(_pos_encode_kernel, scale=math.sqrt(E))
    return pl.pallas_call(
        kernel,
        out_shape=jax.ShapeDtypeStruct((B, S, E), jnp.float32),
        grid=(1,),
        in_specs=[pl.BlockSpec((B, S, E), lambda i: (0, 0, 0)),
                  pl.BlockSpec((S, E), lambda i: (0, 0))],
        out_specs=pl.BlockSpec((B, S, E), lambda i: (0, 0, 0)),
    )(x, pe[:S])


def layernorm(x, g, b, eps=1e-5):
    M, E = x.shape
    kernel = functools.partial(_layernorm_kernel, eps=eps)
    return pl.pallas_call(
        kernel,
        out_shape=jax.ShapeDtypeStruct((M, E), jnp.float32),
        grid=(1,),
        in_specs=[pl.BlockSpec((M, E), lambda i: (0, 0)),
                  pl.BlockSpec((1, E), lambda i: (0, 0)),
                  pl.BlockSpec((1, E), lambda i: (0, 0))],
        out_specs=pl.BlockSpec((M, E), lambda i: (0, 0)),
    )(x, g, b)


def attn_block(x, mem, ap, ln_g, ln_b, nhead, eps=1e-5):
    # x: (B, Sq, E), mem: (B, Skv, E) -> LayerNorm(x + MHA(x, mem, mem))
    B, Sq, E = x.shape
    Skv = mem.shape[1]
    Dh = E // nhead
    kernel = functools.partial(_attn_block_kernel, nhead=nhead, eps=eps)
    return pl.pallas_call(
        kernel,
        out_shape=jax.ShapeDtypeStruct((B, Sq, E), jnp.float32),
        grid=(B,),
        in_specs=[pl.BlockSpec((1, Sq, E), lambda b: (b, 0, 0)),
                  pl.BlockSpec((1, Skv, E), lambda b: (b, 0, 0)),
                  pl.BlockSpec((E, E), lambda b: (0, 0)),
                  pl.BlockSpec((1, E), lambda b: (0, 0)),
                  pl.BlockSpec((E, 2 * E), lambda b: (0, 0)),
                  pl.BlockSpec((1, 2 * E), lambda b: (0, 0)),
                  pl.BlockSpec((nhead, Dh, E), lambda b: (0, 0, 0)),
                  pl.BlockSpec((1, E), lambda b: (0, 0)),
                  pl.BlockSpec((1, E), lambda b: (0, 0)),
                  pl.BlockSpec((1, E), lambda b: (0, 0))],
        out_specs=pl.BlockSpec((1, Sq, E), lambda b: (b, 0, 0)),
        compiler_params=pltpu.CompilerParams(
            dimension_semantics=("parallel",)),
    )(x, mem, ap["wq"], ap["bq"], ap["wkv"], ap["bkv"],
      ap["wo"], ap["bo"], ln_g, ln_b)


def ffn_block(x, w1, b1, w2, b2, ln_g, ln_b, eps=1e-5):
    M, E = x.shape
    F = w1.shape[1]
    kernel = functools.partial(_ffn_block_kernel, eps=eps)
    return pl.pallas_call(
        kernel,
        out_shape=jax.ShapeDtypeStruct((M, E), jnp.float32),
        grid=(1,),
        in_specs=[pl.BlockSpec((M, E), lambda i: (0, 0)),
                  pl.BlockSpec((E, F), lambda i: (0, 0)),
                  pl.BlockSpec((1, F), lambda i: (0, 0)),
                  pl.BlockSpec((F, E), lambda i: (0, 0)),
                  pl.BlockSpec((1, E), lambda i: (0, 0)),
                  pl.BlockSpec((1, E), lambda i: (0, 0)),
                  pl.BlockSpec((1, E), lambda i: (0, 0))],
        out_specs=pl.BlockSpec((M, E), lambda i: (0, 0)),
    )(x, w1, b1, w2, b2, ln_g, ln_b)


def ln_linear(x, ln_g, ln_b, w, bias, eps=1e-5):
    M, E = x.shape
    V = w.shape[1]
    tn = 128 if V % 128 == 0 else V     # lane-dense vocab tiles, fits v7x VMEM
    kernel = functools.partial(_ln_linear_kernel, eps=eps)
    return pl.pallas_call(
        kernel,
        out_shape=jax.ShapeDtypeStruct((M, V), jnp.float32),
        grid=(V // tn,),
        in_specs=[pl.BlockSpec((M, E), lambda j: (0, 0)),
                  pl.BlockSpec((1, E), lambda j: (0, 0)),
                  pl.BlockSpec((1, E), lambda j: (0, 0)),
                  pl.BlockSpec((E, tn), lambda j: (0, j)),
                  pl.BlockSpec((1, tn), lambda j: (0, j))],
        out_specs=pl.BlockSpec((M, tn), lambda j: (0, j)),
        compiler_params=pltpu.CompilerParams(
            dimension_semantics=("parallel",)),
    )(x, ln_g, ln_b, w, bias)


# ------------------------------ model pieces -------------------------------

def encoder_layer(x, p, nhead):
    # post-norm TransformerEncoderLayer, activation=relu, dropout=identity
    h = attn_block(x, x, p["self_attn"], p["ln1_g"], p["ln1_b"], nhead)
    B, S, E = h.shape
    h = ffn_block(h.reshape(B * S, E), p["w1"], p["b1"], p["w2"], p["b2"],
                  p["ln2_g"], p["ln2_b"])
    return h.reshape(B, S, E)


def decoder_layer(x, memory, p, nhead):
    # TODO(synk): no causal tgt mask / key_padding_mask (reference forward passes None masks).
    h = attn_block(x, x, p["self_attn"], p["ln1_g"], p["ln1_b"], nhead)
    h = attn_block(h, memory, p["cross_attn"], p["ln2_g"], p["ln2_b"], nhead)
    B, T, E = h.shape
    h = ffn_block(h.reshape(B * T, E), p["w1"], p["b1"], p["w2"], p["b2"],
                  p["ln3_g"], p["ln3_b"])
    return h.reshape(B, T, E)


def transformer_forward(params, src_ids, tgt_ids, nhead):
    pe = params["pe"]
    # embedding lookups (gather) stay in plain JAX; internal layout is batch-first
    src = jnp.take(params["src_emb"], src_ids.T, axis=0)      # (B, S, E)
    src = pos_encode(src, pe)
    mem = src
    for lp in params["enc_layers"]:
        mem = encoder_layer(mem, lp, nhead)
    B, S, E = mem.shape
    mem = layernorm(mem.reshape(B * S, E),
                    params["enc_norm_g"], params["enc_norm_b"]).reshape(B, S, E)

    tgt = jnp.take(params["tgt_emb"], tgt_ids.T, axis=0)      # (B, T, E)
    tgt = pos_encode(tgt, pe)
    out = tgt
    for lp in params["dec_layers"]:
        out = decoder_layer(out, mem, lp, nhead)
    T = out.shape[1]
    logits = ln_linear(out.reshape(B * T, E),
                       params["dec_norm_g"], params["dec_norm_b"],
                       params["out_w"], params["out_b"])       # (B*T, V)
    V = logits.shape[-1]
    return logits.reshape(B, T, V).transpose(1, 0, 2)          # (T, B, V) seq-first


# ---------------------------- parameter init --------------------------------

def xavier_uniform(key, shape):
    limit = math.sqrt(6.0 / (shape[0] + shape[1]))
    return jax.random.uniform(key, shape, jnp.float32, -limit, limit)


def make_pe(max_len, d_model):
    pos = jnp.arange(max_len, dtype=jnp.float32)[:, None]
    div = jnp.exp(jnp.arange(0, d_model, 2, dtype=jnp.float32)
                  * (-math.log(10000.0) / d_model))
    pe = jnp.zeros((max_len, d_model), jnp.float32)
    pe = pe.at[:, 0::2].set(jnp.sin(pos * div))
    pe = pe.at[:, 1::2].set(jnp.cos(pos * div))
    return pe


def init_mha(key, E, nhead):
    k = jax.random.split(key, 3)
    Dh = E // nhead
    return {
        "wq": xavier_uniform(k[0], (E, E)).astype(jnp.bfloat16),
        "bq": jnp.zeros((1, E), jnp.float32),
        "wkv": xavier_uniform(k[1], (E, 2 * E)).astype(jnp.bfloat16),   # fused K|V
        "bkv": jnp.zeros((1, 2 * E), jnp.float32),
        # output projection stored head-major (H, Dh, E): kernel indexes wo[h]
        "wo": xavier_uniform(k[2], (E, E)).reshape(nhead, Dh, E).astype(jnp.bfloat16),
        "bo": jnp.zeros((1, E), jnp.float32),
    }


def init_enc_layer(key, E, dff, nhead):
    k = jax.random.split(key, 3)
    return {"self_attn": init_mha(k[0], E, nhead),
            "w1": xavier_uniform(k[1], (E, dff)).astype(jnp.bfloat16),
            "b1": jnp.zeros((1, dff), jnp.float32),
            "w2": xavier_uniform(k[2], (dff, E)).astype(jnp.bfloat16),
            "b2": jnp.zeros((1, E), jnp.float32),
            "ln1_g": jnp.ones((1, E), jnp.float32), "ln1_b": jnp.zeros((1, E), jnp.float32),
            "ln2_g": jnp.ones((1, E), jnp.float32), "ln2_b": jnp.zeros((1, E), jnp.float32)}


def init_dec_layer(key, E, dff, nhead):
    k = jax.random.split(key, 4)
    return {"self_attn": init_mha(k[0], E, nhead),
            "cross_attn": init_mha(k[1], E, nhead),
            "w1": xavier_uniform(k[2], (E, dff)).astype(jnp.bfloat16),
            "b1": jnp.zeros((1, dff), jnp.float32),
            "w2": xavier_uniform(k[3], (dff, E)).astype(jnp.bfloat16),
            "b2": jnp.zeros((1, E), jnp.float32),
            "ln1_g": jnp.ones((1, E), jnp.float32), "ln1_b": jnp.zeros((1, E), jnp.float32),
            "ln2_g": jnp.ones((1, E), jnp.float32), "ln2_b": jnp.zeros((1, E), jnp.float32),
            "ln3_g": jnp.ones((1, E), jnp.float32), "ln3_b": jnp.zeros((1, E), jnp.float32)}


def init_params(key, E, nhead, n_enc, n_dec, dff, src_vocab, tgt_vocab, max_len):
    keys = jax.random.split(key, 3 + n_enc + n_dec)
    return {
        "src_emb": xavier_uniform(keys[0], (src_vocab, E)),
        "tgt_emb": xavier_uniform(keys[1], (tgt_vocab, E)),
        "out_w": xavier_uniform(keys[2], (E, tgt_vocab)).astype(jnp.bfloat16),
        "out_b": jnp.zeros((1, tgt_vocab), jnp.float32),
        "enc_layers": [init_enc_layer(keys[3 + i], E, dff, nhead) for i in range(n_enc)],
        "dec_layers": [init_dec_layer(keys[3 + n_enc + i], E, dff, nhead) for i in range(n_dec)],
        "enc_norm_g": jnp.ones((1, E), jnp.float32), "enc_norm_b": jnp.zeros((1, E), jnp.float32),
        "dec_norm_g": jnp.ones((1, E), jnp.float32), "dec_norm_b": jnp.zeros((1, E), jnp.float32),
        "pe": make_pe(max_len, E),
    }


# ---------------------------------- main ------------------------------------

if __name__ == "__main__":
    d_model, nhead = 32, 4
    num_enc, num_dec = 2, 2
    dim_ff = 64
    vocab = 128            # small synthetic source/target vocab
    S, T, B = 8, 8, 2

    params = init_params(jax.random.PRNGKey(0), d_model, nhead,
                         num_enc, num_dec, dim_ff, vocab, vocab, max_len=64)

    ks, kt = jax.random.split(jax.random.PRNGKey(0))
    src_ids = jax.random.randint(ks, (S, B), 0, vocab, dtype=jnp.int32)
    tgt_ids = jax.random.randint(kt, (T, B), 0, vocab, dtype=jnp.int32)

    fwd = jax.jit(functools.partial(transformer_forward, nhead=nhead))
    logits = fwd(params, src_ids, tgt_ids)
    jax.block_until_ready(logits)
    assert logits.shape == (T, B, vocab)
    assert bool(jnp.all(jnp.isfinite(logits)))
    print("KERNEL_OK")
</pallas_src>

<mosaic_0001>
module attributes {stable_mosaic.version = 11 : i64} {
  func.func @_pos_encode_kernel(%arg0: i32, %arg1: memref<2x8x32xf32, #tpu.memory_space<vmem>>, %arg2: memref<8x32xf32, #tpu.memory_space<vmem>>, %arg3: memref<2x8x32xf32, #tpu.memory_space<vmem>>) attributes {dimension_semantics = [#tpu.dimension_semantics<arbitrary>], iteration_bounds = array<i64: 1>, scalar_prefetch = 0 : i64, scratch_operands = 0 : i64, tpu.core_type = #tpu.core_type<tc>, window_params = [{pipeline_mode = #tpu.pipeline_mode<synchronous>, transform_indices = @transform_0, window_bounds = array<i64: 2, 8, 32>}, {pipeline_mode = #tpu.pipeline_mode<synchronous>, transform_indices = @transform_1, window_bounds = array<i64: 8, 32>}, {pipeline_mode = #tpu.pipeline_mode<synchronous>, transform_indices = @transform_2, window_bounds = array<i64: 2, 8, 32>}]} {
    %c0 = arith.constant 0 : index
    %c0_0 = arith.constant 0 : index
    %c0_1 = arith.constant 0 : index
    %0 = vector.load %arg1[%c0, %c0_0, %c0_1] : memref<2x8x32xf32, #tpu.memory_space<vmem>>, vector<2x8x32xf32>
    %cst = arith.constant 5.65685415 : f32
    %1 = vector.broadcast %cst : f32 to vector<2x8x32xf32>
    %2 = arith.mulf %0, %1 : vector<2x8x32xf32>
    %c0_2 = arith.constant 0 : index
    %c0_3 = arith.constant 0 : index
    %3 = vector.load %arg2[%c0_2, %c0_3] : memref<8x32xf32, #tpu.memory_space<vmem>>, vector<8x32xf32>
    %4 = vector.shape_cast %3 : vector<8x32xf32> to vector<1x8x32xf32>
    %5 = vector.broadcast %4 : vector<1x8x32xf32> to vector<2x8x32xf32>
    %6 = arith.addf %2, %5 : vector<2x8x32xf32>
    %c0_4 = arith.constant 0 : index
    %c0_5 = arith.constant 0 : index
    %c0_6 = arith.constant 0 : index
    %7 = vector.load %arg3[%c0_4, %c0_5, %c0_6] : memref<2x8x32xf32, #tpu.memory_space<vmem>>, vector<2x8x32xf32>
    tpu.vector_store %arg3[%c0_4, %c0_5, %c0_6], %6 {strides = array<i32>} : memref<2x8x32xf32, #tpu.memory_space<vmem>>, vector<2x8x32xf32>,
    return
  }
  func.func @transform_0(%arg0: i32) -> (i32, i32, i32) {
    %c0_i32 = arith.constant 0 : i32
    %c0_i32_0 = arith.constant 0 : i32
    %c0_i32_1 = arith.constant 0 : i32
    %c0_i32_2 = arith.constant 0 : i32
    return %c0_i32, %c0_i32_0, %c0_i32_1 : i32, i32, i32
  }
  func.func @transform_1(%arg0: i32) -> (i32, i32) {
    %c0_i32 = arith.constant 0 : i32
    %c0_i32_0 = arith.constant 0 : i32
    %c0_i32_1 = arith.constant 0 : i32
    return %c0_i32, %c0_i32_0 : i32, i32
  }
  func.func @transform_2(%arg0: i32) -> (i32, i32, i32) {
    %c0_i32 = arith.constant 0 : i32
    %c0_i32_0 = arith.constant 0 : i32
    %c0_i32_1 = arith.constant 0 : i32
    %c0_i32_2 = arith.constant 0 : i32
    return %c0_i32, %c0_i32_0, %c0_i32_1 : i32, i32, i32
  }
}

module attributes {stable_mosaic.version = 11 : i64} {
  func.func @_attn_block_kernel(%arg0: i32, %arg1: memref<1x8x32xf32, #tpu.memory_space<vmem>>, %arg2: memref<1x8x32xf32, #tpu.memory_space<vmem>>, %arg3: memref<32x32xbf16, #tpu.memory_space<vmem>>, %arg4: memref<1x32xf32, #tpu.memory_space<vmem>>, %arg5: memref<32x64xbf16, #tpu.memory_space<vmem>>, %arg6: memref<1x64xf32, #tpu.memory_space<vmem>>, %arg7: memref<4x8x32xbf16, #tpu.memory_space<vmem>>, %arg8: memref<1x32xf32, #tpu.memory_space<vmem>>, %arg9: memref<1x32xf32, #tpu.memory_space<vmem>>, %arg10: memref<1x32xf32, #tpu.memory_space<vmem>>, %arg11: memref<1x8x32xf32, #tpu.memory_space<vmem>>) attributes {dimension_semantics = [#tpu.dimension_semantics<parallel>], iteration_bounds = array<i64: 2>, scalar_prefetch = 0 : i64, scratch_operands = 0 : i64, tpu.core_type = #tpu.core_type<tc>, window_params = [{transform_indices = @transform_0, window_bounds = array<i64: 1, 8, 32>}, {transform_indices = @transform_1, window_bounds = array<i64: 1, 8, 32>}, {pipeline_mode = #tpu.pipeline_mode<synchronous>, transform_indices = @transform_2, window_bounds = array<i64: 32, 32>}, {pipeline_mode = #tpu.pipeline_mode<synchronous>, transform_indices = @transform_3, window_bounds = array<i64: 1, 32>}, {pipeline_mode = #tpu.pipeline_mode<synchronous>, transform_indices = @transform_4, window_bounds = array<i64: 32, 64>}, {pipeline_mode = #tpu.pipeline_mode<synchronous>, transform_indices = @transform_5, window_bounds = array<i64: 1, 64>}, {pipeline_mode = #tpu.pipeline_mode<synchronous>, transform_indices = @transform_6, window_bounds = array<i64: 4, 8, 32>}, {pipeline_mode = #tpu.pipeline_mode<synchronous>, transform_indices = @transform_7, window_bounds = array<i64: 1, 32>}, {pipeline_mode = #tpu.pipeline_mode<synchronous>, transform_indices = @transform_8, window_bounds = array<i64: 1, 32>}, {pipeline_mode = #tpu.pipeline_mode<synchronous>, transform_indices = @transform_9, window_bounds = array<i64: 1, 32>}, {transform_indices = @transform_10, window_bounds = array<i64: 1, 8, 32>}]} {
    %c0 = arith.constant 0 : index
    %c0_0 = arith.constant 0 : index
    %c0_1 = arith.constant 0 : index
    %0 = vector.load %arg1[%c0, %c0_0, %c0_1] : memref<1x8x32xf32, #tpu.memory_space<vmem>>, vector<1x8x32xf32>
    %1 = vector.shape_cast %0 : vector<1x8x32xf32> to vector<8x32xf32>
    %c0_2 = arith.constant 0 : index
    %c0_3 = arith.constant 0 : index
    %c0_4 = arith.constant 0 : index
    %2 = vector.load %arg2[%c0_2, %c0_3, %c0_4] : memref<1x8x32xf32, #tpu.memory_space<vmem>>, vector<1x8x32xf32>
    %3 = vector.shape_cast %2 : vector<1x8x32xf32> to vector<8x32xf32>
    %4 = arith.truncf %1 : vector<8x32xf32> to vector<8x32xbf16>
    %c0_5 = arith.constant 0 : index
    %c0_6 = arith.constant 0 : index
    %5 = vector.load %arg3[%c0_5, %c0_6] : memref<32x32xbf16, #tpu.memory_space<vmem>>, vector<32x32xbf16>
    %cst = arith.constant dense<0.000000e+00> : vector<8x32xf32>
    %6 = tpu.matmul %4, %5, %cst {dimension_numbers = #tpu.dot_dimension_numbers<[1], [0], [0], [1], [0, 0, 1, 1], [], []>} : vector<8x32xbf16>, vector<32x32xbf16>, vector<8x32xf32> -> vector<8x32xf32>
    %c0_7 = arith.constant 0 : index
    %c0_8 = arith.constant 0 : index
    %7 = vector.load %arg4[%c0_7, %c0_8] : memref<1x32xf32, #tpu.memory_space<vmem>>, vector<1x32xf32>
    %8 = vector.broadcast %7 : vector<1x32xf32> to vector<8x32xf32>
    %9 = arith.addf %6, %8 : vector<8x32xf32>
    %10 = arith.truncf %3 : vector<8x32xf32> to vector<8x32xbf16>
    %c0_9 = arith.constant 0 : index
    %c0_10 = arith.constant 0 : index
    %11 = vector.load %arg5[%c0_9, %c0_10] : memref<32x64xbf16, #tpu.memory_space<vmem>>, vector<32x64xbf16>
    %cst_11 = arith.constant dense<0.000000e+00> : vector<8x64xf32>
    %12 = tpu.matmul %10, %11, %cst_11 {dimension_numbers = #tpu.dot_dimension_numbers<[1], [0], [0], [1], [0, 0, 1, 1], [], []>} : vector<8x32xbf16>, vector<32x64xbf16>, vector<8x64xf32> -> vector<8x64xf32>
    %c0_12 = arith.constant 0 : index
    %c0_13 = arith.constant 0 : index
    %13 = vector.load %arg6[%c0_12, %c0_13] : memref<1x64xf32, #tpu.memory_space<vmem>>, vector<1x64xf32>
    %14 = vector.broadcast %13 : vector<1x64xf32> to vector<8x64xf32>
    %15 = arith.addf %12, %14 : vector<8x64xf32>
    %16 = vector.extract_strided_slice %15 {offsets = [0, 0], sizes = [8, 32], strides = [1, 1]} : vector<8x64xf32> to vector<8x32xf32>
    %17 = vector.extract_strided_slice %15 {offsets = [0, 32], sizes = [8, 32], strides = [1, 1]} : vector<8x64xf32> to vector<8x32xf32>
    %cst_14 = arith.constant 0.000000e+00 : f32
    %18 = vector.broadcast %cst_14 : f32 to vector<8x32xf32>
    %19 = vector.extract_strided_slice %9 {offsets = [0, 0], sizes = [8, 8], strides = [1, 1]} : vector<8x32xf32> to vector<8x8xf32>
    %cst_15 = arith.constant 0.353553385 : f32
    %20 = vector.broadcast %cst_15 : f32 to vector<8x8xf32>
    %21 = arith.mulf %19, %20 : vector<8x8xf32>
    %22 = arith.truncf %21 : vector<8x8xf32> to vector<8x8xbf16>
    %23 = vector.extract_strided_slice %16 {offsets = [0, 0], sizes = [8, 8], strides = [1, 1]} : vector<8x32xf32> to vector<8x8xf32>
    %24 = arith.truncf %23 : vector<8x8xf32> to vector<8x8xbf16>
    %25 = vector.extract_strided_slice %17 {offsets = [0, 0], sizes = [8, 8], strides = [1, 1]} : vector<8x32xf32> to vector<8x8xf32>
    %26 = arith.truncf %25 : vector<8x8xf32> to vector<8x8xbf16>
    %cst_16 = arith.constant dense<0.000000e+00> : vector<8x8xf32>
    %27 = tpu.matmul %22, %24, %cst_16 {dimension_numbers = #tpu.dot_dimension_numbers<[1], [1], [0], [0], [0, 0, 1, 0], [], []>} : vector<8x8xbf16>, vector<8x8xbf16>, vector<8x8xf32> -> vector<8x8xf32>
    %cst_17 = arith.constant dense<0xFF800000> : vector<8xf32>
    %28 = vector.multi_reduction <maximumf>, %27, %cst_17 [1] : vector<8x8xf32> to vector<8xf32>
    %29 = vector.shape_cast %28 : vector<8xf32> to vector<8x1xf32>
    %30 = vector.broadcast %29 : vector<8x1xf32> to vector<8x8xf32>
    %31 = arith.subf %27, %30 : vector<8x8xf32>
    %32 = math.exp %31 : vector<8x8xf32>
    %cst_18 = arith.constant dense<0.000000e+00> : vector<8xf32>
    %33 = vector.multi_reduction <add>, %32, %cst_18 [1] : vector<8x8xf32> to vector<8xf32>
    %34 = vector.shape_cast %33 : vector<8xf32> to vector<8x1xf32>
    %35 = tpu.reciprocal %34 {approx = true} : vector<8x1xf32> -> vector<8x1xf32>
    %36 = vector.broadcast %35 : vector<8x1xf32> to vector<8x8xf32>
    %37 = arith.mulf %32, %36 : vector<8x8xf32>
    %38 = arith.truncf %37 : vector<8x8xf32> to vector<8x8xbf16>
    %cst_19 = arith.constant dense<0.000000e+00> : vector<8x8xf32>
    %39 = tpu.matmul %38, %26, %cst_19 {dimension_numbers = #tpu.dot_dimension_numbers<[1], [0], [0], [1], [0, 0, 1, 1], [], []>} : vector<8x8xbf16>, vector<8x8xbf16>, vector<8x8xf32> -> vector<8x8xf32>
    %40 = arith.truncf %39 : vector<8x8xf32> to vector<8x8xbf16>
    %c0_20 = arith.constant 0 : index
    %c0_21 = arith.constant 0 : index
    %c0_22 = arith.constant 0 : index
    %41 = vector.load %arg7[%c0_20, %c0_21, %c0_22] : memref<4x8x32xbf16, #tpu.memory_space<vmem>>, vector<1x8x32xbf16>
    %42 = vector.shape_cast %41 : vector<1x8x32xbf16> to vector<8x32xbf16>
    %cst_23 = arith.constant dense<0.000000e+00> : vector<8x32xf32>
    %43 = tpu.matmul %40, %42, %cst_23 {dimension_numbers = #tpu.dot_dimension_numbers<[1], [0], [0], [1], [0, 0, 1, 1], [], []>} : vector<8x8xbf16>, vector<8x32xbf16>, vector<8x32xf32> -> vector<8x32xf32>
    %44 = arith.addf %18, %43 : vector<8x32xf32>
    %45 = vector.extract_strided_slice %9 {offsets = [0, 8], sizes = [8, 8], strides = [1, 1]} : vector<8x32xf32> to vector<8x8xf32>
    %cst_24 = arith.constant 0.353553385 : f32
    %46 = vector.broadcast %cst_24 : f32 to vector<8x8xf32>
    %47 = arith.mulf %45, %46 : vector<8x8xf32>
    %48 = arith.truncf %47 : vector<8x8xf32> to vector<8x8xbf16>
    %49 = vector.extract_strided_slice %16 {offsets = [0, 8], sizes = [8, 8], strides = [1, 1]} : vector<8x32xf32> to vector<8x8xf32>
    %50 = arith.truncf %49 : vector<8x8xf32> to vector<8x8xbf16>
    %51 = vector.extract_strided_slice %17 {offsets = [0, 8], sizes = [8, 8], strides = [1, 1]} : vector<8x32xf32> to vector<8x8xf32>
    %52 = arith.truncf %51 : vector<8x8xf32> to vector<8x8xbf16>
    %cst_25 = arith.constant dense<0.000000e+00> : vector<8x8xf32>
    %53 = tpu.matmul %48, %50, %cst_25 {dimension_numbers = #tpu.dot_dimension_numbers<[1], [1], [0], [0], [0, 0, 1, 0], [], []>} : vector<8x8xbf16>, vector<8x8xbf16>, vector<8x8xf32> -> vector<8x8xf32>
    %cst_26 = arith.constant dense<0xFF800000> : vector<8xf32>
    %54 = vector.multi_reduction <maximumf>, %53, %cst_26 [1] : vector<8x8xf32> to vector<8xf32>
    %55 = vector.shape_cast %54 : vector<8xf32> to vector<8x1xf32>
    %56 = vector.broadcast %55 : vector<8x1xf32> to vector<8x8xf32>
    %57 = arith.subf %53, %56 : vector<8x8xf32>
    %58 = math.exp %57 : vector<8x8xf32>
    %cst_27 = arith.constant dense<0.000000e+00> : vector<8xf32>
    %59 = vector.multi_reduction <add>, %58, %cst_27 [1] : vector<8x8xf32> to vector<8xf32>
    %60 = vector.shape_cast %59 : vector<8xf32> to vector<8x1xf32>
    %61 = tpu.reciprocal %60 {approx = true} : vector<8x1xf32> -> vector<8x1xf32>
    %62 = vector.broadcast %61 : vector<8x1xf32> to vector<8x8xf32>
    %63 = arith.mulf %58, %62 : vector<8x8xf32>
    %64 = arith.truncf %63 : vector<8x8xf32> to vector<8x8xbf16>
    %cst_28 = arith.constant dense<0.000000e+00> : vector<8x8xf32>
    %65 = tpu.matmul %64, %52, %cst_28 {dimension_numbers = #tpu.dot_dimension_numbers<[1], [0], [0], [1], [0, 0, 1, 1], [], []>} : vector<8x8xbf16>, vector<8x8xbf16>, vector<8x8xf32> -> vector<8x8xf32>
    %66 = arith.truncf %65 : vector<8x8xf32> to vector<8x8xbf16>
    %c1 = arith.constant 1 : index
    %c0_29 = arith.constant 0 : index
    %c0_30 = arith.constant 0 : index
    %67 = vector.load %arg7[%c1, %c0_29, %c0_30] : memref<4x8x32xbf16, #tpu.memory_space<vmem>>, vector<1x8x32xbf16>
    %68 = vector.shape_cast %67 : vector<1x8x32xbf16> to vector<8x32xbf16>
    %cst_31 = arith.constant dense<0.000000e+00> : vector<8x32xf32>
    %69 = tpu.matmul %66, %68, %cst_31 {dimension_numbers = #tpu.dot_dimension_numbers<[1], [0], [0], [1], [0, 0, 1, 1], [], []>} : vector<8x8xbf16>, vector<8x32xbf16>, vector<8x32xf32> -> vector<8x32xf32>
    %70 = arith.addf %44, %69 : vector<8x32xf32>
    %71 = vector.extract_strided_slice %9 {offsets = [0, 16], sizes = [8, 8], strides = [1, 1]} : vector<8x32xf32> to vector<8x8xf32>
    %cst_32 = arith.constant 0.353553385 : f32
    %72 = vector.broadcast %cst_32 : f32 to vector<8x8xf32>
    %73 = arith.mulf %71, %72 : vector<8x8xf32>
    %74 = arith.truncf %73 : vector<8x8xf32> to vector<8x8xbf16>
    %75 = vector.extract_strided_slice %16 {offsets = [0, 16], sizes = [8, 8], strides = [1, 1]} : vector<8x32xf32> to vector<8x8xf32>
    %76 = arith.truncf %75 : vector<8x8xf32> to vector<8x8xbf16>
    %77 = vector.extract_strided_slice %17 {offsets = [0, 16], sizes = [8, 8], strides = [1, 1]} : vector<8x32xf32> to vector<8x8xf32>
    %78 = arith.truncf %77 : vector<8x8xf32> to vector<8x8xbf16>
    %cst_33 = arith.constant dense<0.000000e+00> : vector<8x8xf32>
    %79 = tpu.matmul %74, %76, %cst_33 {dimension_numbers = #tpu.dot_dimension_numbers<[1], [1], [0], [0], [0, 0, 1, 0], [], []>} : vector<8x8xbf16>, vector<8x8xbf16>, vector<8x8xf32> -> vector<8x8xf32>
    %cst_34 = arith.constant dense<0xFF800000> : vector<8xf32>
    %80 = vector.multi_reduction <maximumf>, %79, %cst_34 [1] : vector<8x8xf32> to vector<8xf32>
    %81 = vector.shape_cast %80 : vector<8xf32> to vector<8x1xf32>
    %82 = vector.broadcast %81 : vector<8x1xf32> to vector<8x8xf32>
    %83 = arith.subf %79, %82 : vector<8x8xf32>
    %84 = math.exp %83 : vector<8x8xf32>
    %cst_35 = arith.constant dense<0.000000e+00> : vector<8xf32>
    %85 = vector.multi_reduction <add>, %84, %cst_35 [1] : vector<8x8xf32> to vector<8xf32>
    %86 = vector.shape_cast %85 : vector<8xf32> to vector<8x1xf32>
    %87 = tpu.reciprocal %86 {approx = true} : vector<8x1xf32> -> vector<8x1xf32>
    %88 = vector.broadcast %87 : vector<8x1xf32> to vector<8x8xf32>
    %89 = arith.mulf %84, %88 : vector<8x8xf32>
    %90 = arith.truncf %89 : vector<8x8xf32> to vector<8x8xbf16>
    %cst_36 = arith.constant dense<0.000000e+00> : vector<8x8xf32>
    %91 = tpu.matmul %90, %78, %cst_36 {dimension_numbers = #tpu.dot_dimension_numbers<[1], [0], [0], [1], [0, 0, 1, 1], [], []>} : vector<8x8xbf16>, vector<8x8xbf16>, vector<8x8xf32> -> vector<8x8xf32>
    %92 = arith.truncf %91 : vector<8x8xf32> to vector<8x8xbf16>
    %c2 = arith.constant 2 : index
    %c0_37 = arith.constant 0 : index
    %c0_38 = arith.constant 0 : index
    %93 = vector.load %arg7[%c2, %c0_37, %c0_38] : memref<4x8x32xbf16, #tpu.memory_space<vmem>>, vector<1x8x32xbf16>
    %94 = vector.shape_cast %93 : vector<1x8x32xbf16> to vector<8x32xbf16>
    %cst_39 = arith.constant dense<0.000000e+00> : vector<8x32xf32>
    %95 = tpu.matmul %92, %94, %cst_39 {dimension_numbers = #tpu.dot_dimension_numbers<[1], [0], [0], [1], [0, 0, 1, 1], [], []>} : vector<8x8xbf16>, vector<8x32xbf16>, vector<8x32xf32> -> vector<8x32xf32>
    %96 = arith.addf %70, %95 : vector<8x32xf32>
    %97 = vector.extract_strided_slice %9 {offsets = [0, 24], sizes = [8, 8], strides = [1, 1]} : vector<8x32xf32> to vector<8x8xf32>
    %cst_40 = arith.constant 0.353553385 : f32
    %98 = vector.broadcast %cst_40 : f32 to vector<8x8xf32>
    %99 = arith.mulf %97, %98 : vector<8x8xf32>
    %100 = arith.truncf %99 : vector<8x8xf32> to vector<8x8xbf16>
    %101 = vector.extract_strided_slice %16 {offsets = [0, 24], sizes = [8, 8], strides = [1, 1]} : vector<8x32xf32> to vector<8x8xf32>
    %102 = arith.truncf %101 : vector<8x8xf32> to vector<8x8xbf16>
    %103 = vector.extract_strided_slice %17 {offsets = [0, 24], sizes = [8, 8], strides = [1, 1]} : vector<8x32xf32> to vector<8x8xf32>
    %104 = arith.truncf %103 : vector<8x8xf32> to vector<8x8xbf16>
    %cst_41 = arith.constant dense<0.000000e+00> : vector<8x8xf32>
    %105 = tpu.matmul %100, %102, %cst_41 {dimension_numbers = #tpu.dot_dimension_numbers<[1], [1], [0], [0], [0, 0, 1, 0], [], []>} : vector<8x8xbf16>, vector<8x8xbf16>, vector<8x8xf32> -> vector<8x8xf32>
    %cst_42 = arith.constant dense<0xFF800000> : vector<8xf32>
    %106 = vector.multi_reduction <maximumf>, %105, %cst_42 [1] : vector<8x8xf32> to vector<8xf32>
    %107 = vector.shape_cast %106 : vector<8xf32> to vector<8x1xf32>
    %108 = vector.broadcast %107 : vector<8x1xf32> to vector<8x8xf32>
    %109 = arith.subf %105, %108 : vector<8x8xf32>
    %110 = math.exp %109 : vector<8x8xf32>
    %cst_43 = arith.constant dense<0.000000e+00> : vector<8xf32>
    %111 = vector.multi_reduction <add>, %110, %cst_43 [1] : vector<8x8xf32> to vector<8xf32>
    %112 = vector.shape_cast %111 : vector<8xf32> to vector<8x1xf32>
    %113 = tpu.reciprocal %112 {approx = true} : vector<8x1xf32> -> vector<8x1xf32>
    %114 = vector.broadcast %113 : vector<8x1xf32> to vector<8x8xf32>
    %115 = arith.mulf %110, %114 : vector<8x8xf32>
    %116 = arith.truncf %115 : vector<8x8xf32> to vector<8x8xbf16>
    %cst_44 = arith.constant dense<0.000000e+00> : vector<8x8xf32>
    %117 = tpu.matmul %116, %104, %cst_44 {dimension_numbers = #tpu.dot_dimension_numbers<[1], [0], [0], [1], [0, 0, 1, 1], [], []>} : vector<8x8xbf16>, vector<8x8xbf16>, vector<8x8xf32> -> vector<8x8xf32>
    %118 = arith.truncf %117 : vector<8x8xf32> to vector<8x8xbf16>
    %c3 = arith.constant 3 : index
    %c0_45 = arith.constant 0 : index
    %c0_46 = arith.constant 0 : index
    %119 = vector.load %arg7[%c3, %c0_45, %c0_46] : memref<4x8x32xbf16, #tpu.memory_space<vmem>>, vector<1x8x32xbf16>
    %120 = vector.shape_cast %119 : vector<1x8x32xbf16> to vector<8x32xbf16>
    %cst_47 = arith.constant dense<0.000000e+00> : vector<8x32xf32>
    %121 = tpu.matmul %118, %120, %cst_47 {dimension_numbers = #tpu.dot_dimension_numbers<[1], [0], [0], [1], [0, 0, 1, 1], [], []>} : vector<8x8xbf16>, vector<8x32xbf16>, vector<8x32xf32> -> vector<8x32xf32>
    %122 = arith.addf %96, %121 : vector<8x32xf32>
    %123 = arith.addf %1, %122 : vector<8x32xf32>
    %c0_48 = arith.constant 0 : index
    %c0_49 = arith.constant 0 : index
    %124 = vector.load %arg8[%c0_48, %c0_49] : memref<1x32xf32, #tpu.memory_space<vmem>>, vector<1x32xf32>
    %125 = vector.broadcast %124 : vector<1x32xf32> to vector<8x32xf32>
    %126 = arith.addf %123, %125 : vector<8x32xf32>
    %c0_50 = arith.constant 0 : index
    %c0_51 = arith.constant 0 : index
    %127 = vector.load %arg9[%c0_50, %c0_51] : memref<1x32xf32, #tpu.memory_space<vmem>>, vector<1x32xf32>
    %c0_52 = arith.constant 0 : index
    %c0_53 = arith.constant 0 : index
    %128 = vector.load %arg10[%c0_52, %c0_53] : memref<1x32xf32, #tpu.memory_space<vmem>>, vector<1x32xf32>
    %cst_54 = arith.constant dense<0.000000e+00> : vector<8xf32>
    %129 = vector.multi_reduction <add>, %126, %cst_54 [1] : vector<8x32xf32> to vector<8xf32>
    %130 = vector.shape_cast %129 : vector<8xf32> to vector<8x1xf32>
    %cst_55 = arith.constant 3.200000e+01 : f32
    %131 = vector.broadcast %cst_55 : f32 to vector<8x1xf32>
    %132 = arith.divf %130, %131 : vector<8x1xf32>
    %133 = vector.broadcast %132 : vector<8x1xf32> to vector<8x32xf32>
    %134 = arith.subf %126, %133 : vector<8x32xf32>
    %135 = arith.mulf %134, %134 : vector<8x32xf32>
    %cst_56 = arith.constant dense<0.000000e+00> : vector<8xf32>
    %136 = vector.multi_reduction <add>, %135, %cst_56 [1] : vector<8x32xf32> to vector<8xf32>
    %137 = vector.shape_cast %136 : vector<8xf32> to vector<8x1xf32>
    %cst_57 = arith.constant 3.200000e+01 : f32
    %138 = vector.broadcast %cst_57 : f32 to vector<8x1xf32>
    %139 = arith.divf %137, %138 : vector<8x1xf32>
    %cst_58 = arith.constant 9.99999974E-6 : f32
    %140 = vector.broadcast %cst_58 : f32 to vector<8x1xf32>
    %141 = arith.addf %139, %140 : vector<8x1xf32>
    %142 = math.rsqrt %141 : vector<8x1xf32>
    %143 = vector.broadcast %142 : vector<8x1xf32> to vector<8x32xf32>
    %144 = arith.mulf %134, %143 : vector<8x32xf32>
    %145 = vector.broadcast %127 : vector<1x32xf32> to vector<8x32xf32>
    %146 = arith.mulf %144, %145 : vector<8x32xf32>
    %147 = vector.broadcast %128 : vector<1x32xf32> to vector<8x32xf32>
    %148 = arith.addf %146, %147 : vector<8x32xf32>
    %c0_59 = arith.constant 0 : index
    %c0_60 = arith.constant 0 : index
    %c0_61 = arith.constant 0 : index
    %149 = vector.load %arg11[%c0_59, %c0_60, %c0_61] : memref<1x8x32xf32, #tpu.memory_space<vmem>>, vector<1x8x32xf32>
    %150 = vector.shape_cast %149 : vector<1x8x32xf32> to vector<8x32xf32>
    %151 = vector.shape_cast %148 : vector<8x32xf32> to vector<1x8x32xf32>
    tpu.vector_store %arg11[%c0_59, %c0_60, %c0_61], %151 {strides = array<i32>} : memref<1x8x32xf32, #tpu.memory_space<vmem>>, vector<1x8x32xf32>,
    return
  }
  func.func @transform_0(%arg0: i32) -> (i32, i32, i32) {
    %c0_i32 = arith.constant 0 : i32
    %c0_i32_0 = arith.constant 0 : i32
    %c0_i32_1 = arith.constant 0 : i32
    return %arg0, %c0_i32, %c0_i32_0 : i32, i32, i32
  }
  func.func @transform_1(%arg0: i32) -> (i32, i32, i32) {
    %c0_i32 = arith.constant 0 : i32
    %c0_i32_0 = arith.constant 0 : i32
    %c0_i32_1 = arith.constant 0 : i32
    return %arg0, %c0_i32, %c0_i32_0 : i32, i32, i32
  }
  func.func @transform_2(%arg0: i32) -> (i32, i32) {
    %c0_i32 = arith.constant 0 : i32
    %c0_i32_0 = arith.constant 0 : i32
    %c0_i32_1 = arith.constant 0 : i32
    return %c0_i32, %c0_i32_0 : i32, i32
  }
  func.func @transform_3(%arg0: i32) -> (i32, i32) {
    %c0_i32 = arith.constant 0 : i32
    %c0_i32_0 = arith.constant 0 : i32
    %c0_i32_1 = arith.constant 0 : i32
    return %c0_i32, %c0_i32_0 : i32, i32
  }
  func.func @transform_4(%arg0: i32) -> (i32, i32) {
    %c0_i32 = arith.constant 0 : i32
    %c0_i32_0 = arith.constant 0 : i32
    %c0_i32_1 = arith.constant 0 : i32
    return %c0_i32, %c0_i32_0 : i32, i32
  }
  func.func @transform_5(%arg0: i32) -> (i32, i32) {
    %c0_i32 = arith.constant 0 : i32
    %c0_i32_0 = arith.constant 0 : i32
    %c0_i32_1 = arith.constant 0 : i32
    return %c0_i32, %c0_i32_0 : i32, i32
  }
  func.func @transform_6(%arg0: i32) -> (i32, i32, i32) {
    %c0_i32 = arith.constant 0 : i32
    %c0_i32_0 = arith.constant 0 : i32
    %c0_i32_1 = arith.constant 0 : i32
    %c0_i32_2 = arith.constant 0 : i32
    return %c0_i32, %c0_i32_0, %c0_i32_1 : i32, i32, i32
  }
  func.func @transform_7(%arg0: i32) -> (i32, i32) {
    %c0_i32 = arith.constant 0 : i32
    %c0_i32_0 = arith.constant 0 : i32
    %c0_i32_1 = arith.constant 0 : i32
    return %c0_i32, %c0_i32_0 : i32, i32
  }
  func.func @transform_8(%arg0: i32) -> (i32, i32) {
    %c0_i32 = arith.constant 0 : i32
    %c0_i32_0 = arith.constant 0 : i32
    %c0_i32_1 = arith.constant 0 : i32
    return %c0_i32, %c0_i32_0 : i32, i32
  }
  func.func @transform_9(%arg0: i32) -> (i32, i32) {
    %c0_i32 = arith.constant 0 : i32
    %c0_i32_0 = arith.constant 0 : i32
    %c0_i32_1 = arith.constant 0 : i32
    return %c0_i32, %c0_i32_0 : i32, i32
  }
  func.func @transform_10(%arg0: i32) -> (i32, i32, i32) {
    %c0_i32 = arith.constant 0 : i32
    %c0_i32_0 = arith.constant 0 : i32
    %c0_i32_1 = arith.constant 0 : i32
    return %arg0, %c0_i32, %c0_i32_0 : i32, i32, i32
  }
}

module attributes {stable_mosaic.version = 11 : i64} {
  func.func @_ffn_block_kernel(%arg0: i32, %arg1: memref<16x32xf32, #tpu.memory_space<vmem>>, %arg2: memref<32x64xbf16, #tpu.memory_space<vmem>>, %arg3: memref<1x64xf32, #tpu.memory_space<vmem>>, %arg4: memref<64x32xbf16, #tpu.memory_space<vmem>>, %arg5: memref<1x32xf32, #tpu.memory_space<vmem>>, %arg6: memref<1x32xf32, #tpu.memory_space<vmem>>, %arg7: memref<1x32xf32, #tpu.memory_space<vmem>>, %arg8: memref<16x32xf32, #tpu.memory_space<vmem>>) attributes {dimension_semantics = [#tpu.dimension_semantics<arbitrary>], iteration_bounds = array<i64: 1>, scalar_prefetch = 0 : i64, scratch_operands = 0 : i64, tpu.core_type = #tpu.core_type<tc>, window_params = [{pipeline_mode = #tpu.pipeline_mode<synchronous>, transform_indices = @transform_0, window_bounds = array<i64: 16, 32>}, {pipeline_mode = #tpu.pipeline_mode<synchronous>, transform_indices = @transform_1, window_bounds = array<i64: 32, 64>}, {pipeline_mode = #tpu.pipeline_mode<synchronous>, transform_indices = @transform_2, window_bounds = array<i64: 1, 64>}, {pipeline_mode = #tpu.pipeline_mode<synchronous>, transform_indices = @transform_3, window_bounds = array<i64: 64, 32>}, {pipeline_mode = #tpu.pipeline_mode<synchronous>, transform_indices = @transform_4, window_bounds = array<i64: 1, 32>}, {pipeline_mode = #tpu.pipeline_mode<synchronous>, transform_indices = @transform_5, window_bounds = array<i64: 1, 32>}, {pipeline_mode = #tpu.pipeline_mode<synchronous>, transform_indices = @transform_6, window_bounds = array<i64: 1, 32>}, {pipeline_mode = #tpu.pipeline_mode<synchronous>, transform_indices = @transform_7, window_bounds = array<i64: 16, 32>}]} {
    %c0 = arith.constant 0 : index
    %c0_0 = arith.constant 0 : index
    %0 = vector.load %arg1[%c0, %c0_0] : memref<16x32xf32, #tpu.memory_space<vmem>>, vector<16x32xf32>
    %1 = arith.truncf %0 : vector<16x32xf32> to vector<16x32xbf16>
    %c0_1 = arith.constant 0 : index
    %c0_2 = arith.constant 0 : index
    %2 = vector.load %arg2[%c0_1, %c0_2] : memref<32x64xbf16, #tpu.memory_space<vmem>>, vector<32x64xbf16>
    %cst = arith.constant dense<0.000000e+00> : vector<16x64xf32>
    %3 = tpu.matmul %1, %2, %cst {dimension_numbers = #tpu.dot_dimension_numbers<[1], [0], [0], [1], [0, 0, 1, 1], [], []>} : vector<16x32xbf16>, vector<32x64xbf16>, vector<16x64xf32> -> vector<16x64xf32>
    %c0_3 = arith.constant 0 : index
    %c0_4 = arith.constant 0 : index
    %4 = vector.load %arg3[%c0_3, %c0_4] : memref<1x64xf32, #tpu.memory_space<vmem>>, vector<1x64xf32>
    %5 = vector.broadcast %4 : vector<1x64xf32> to vector<16x64xf32>
    %6 = arith.addf %3, %5 : vector<16x64xf32>
    %cst_5 = arith.constant 0.000000e+00 : f32
    %7 = vector.broadcast %cst_5 : f32 to vector<16x64xf32>
    %8 = arith.maximumf %6, %7 : vector<16x64xf32>
    %9 = arith.truncf %8 : vector<16x64xf32> to vector<16x64xbf16>
    %c0_6 = arith.constant 0 : index
    %c0_7 = arith.constant 0 : index
    %10 = vector.load %arg4[%c0_6, %c0_7] : memref<64x32xbf16, #tpu.memory_space<vmem>>, vector<64x32xbf16>
    %cst_8 = arith.constant dense<0.000000e+00> : vector<16x32xf32>
    %11 = tpu.matmul %9, %10, %cst_8 {dimension_numbers = #tpu.dot_dimension_numbers<[1], [0], [0], [1], [0, 0, 1, 1], [], []>} : vector<16x64xbf16>, vector<64x32xbf16>, vector<16x32xf32> -> vector<16x32xf32>
    %c0_9 = arith.constant 0 : index
    %c0_10 = arith.constant 0 : index
    %12 = vector.load %arg5[%c0_9, %c0_10] : memref<1x32xf32, #tpu.memory_space<vmem>>, vector<1x32xf32>
    %13 = vector.broadcast %12 : vector<1x32xf32> to vector<16x32xf32>
    %14 = arith.addf %11, %13 : vector<16x32xf32>
    %15 = arith.addf %0, %14 : vector<16x32xf32>
    %c0_11 = arith.constant 0 : index
    %c0_12 = arith.constant 0 : index
    %16 = vector.load %arg6[%c0_11, %c0_12] : memref<1x32xf32, #tpu.memory_space<vmem>>, vector<1x32xf32>
    %c0_13 = arith.constant 0 : index
    %c0_14 = arith.constant 0 : index
    %17 = vector.load %arg7[%c0_13, %c0_14] : memref<1x32xf32, #tpu.memory_space<vmem>>, vector<1x32xf32>
    %cst_15 = arith.constant dense<0.000000e+00> : vector<16xf32>
    %18 = vector.multi_reduction <add>, %15, %cst_15 [1] : vector<16x32xf32> to vector<16xf32>
    %19 = vector.shape_cast %18 : vector<16xf32> to vector<16x1xf32>
    %cst_16 = arith.constant 3.200000e+01 : f32
    %20 = vector.broadcast %cst_16 : f32 to vector<16x1xf32>
    %21 = arith.divf %19, %20 : vector<16x1xf32>
    %22 = vector.broadcast %21 : vector<16x1xf32> to vector<16x32xf32>
    %23 = arith.subf %15, %22 : vector<16x32xf32>
    %24 = arith.mulf %23, %23 : vector<16x32xf32>
    %cst_17 = arith.constant dense<0.000000e+00> : vector<16xf32>
    %25 = vector.multi_reduction <add>, %24, %cst_17 [1] : vector<16x32xf32> to vector<16xf32>
    %26 = vector.shape_cast %25 : vector<16xf32> to vector<16x1xf32>
    %cst_18 = arith.constant 3.200000e+01 : f32
    %27 = vector.broadcast %cst_18 : f32 to vector<16x1xf32>
    %28 = arith.divf %26, %27 : vector<16x1xf32>
    %cst_19 = arith.constant 9.99999974E-6 : f32
    %29 = vector.broadcast %cst_19 : f32 to vector<16x1xf32>
    %30 = arith.addf %28, %29 : vector<16x1xf32>
    %31 = math.rsqrt %30 : vector<16x1xf32>
    %32 = vector.broadcast %31 : vector<16x1xf32> to vector<16x32xf32>
    %33 = arith.mulf %23, %32 : vector<16x32xf32>
    %34 = vector.broadcast %16 : vector<1x32xf32> to vector<16x32xf32>
    %35 = arith.mulf %33, %34 : vector<16x32xf32>
    %36 = vector.broadcast %17 : vector<1x32xf32> to vector<16x32xf32>
    %37 = arith.addf %35, %36 : vector<16x32xf32>
    %c0_20 = arith.constant 0 : index
    %c0_21 = arith.constant 0 : index
    %38 = vector.load %arg8[%c0_20, %c0_21] : memref<16x32xf32, #tpu.memory_space<vmem>>, vector<16x32xf32>
    tpu.vector_store %arg8[%c0_20, %c0_21], %37 {strides = array<i32>} : memref<16x32xf32, #tpu.memory_space<vmem>>, vector<16x32xf32>,
    return
  }
  func.func @transform_0(%arg0: i32) -> (i32, i32) {
    %c0_i32 = arith.constant 0 : i32
    %c0_i32_0 = arith.constant 0 : i32
    %c0_i32_1 = arith.constant 0 : i32
    return %c0_i32, %c0_i32_0 : i32, i32
  }
  func.func @transform_1(%arg0: i32) -> (i32, i32) {
    %c0_i32 = arith.constant 0 : i32
    %c0_i32_0 = arith.constant 0 : i32
    %c0_i32_1 = arith.constant 0 : i32
    return %c0_i32, %c0_i32_0 : i32, i32
  }
  func.func @transform_2(%arg0: i32) -> (i32, i32) {
    %c0_i32 = arith.constant 0 : i32
    %c0_i32_0 = arith.constant 0 : i32
    %c0_i32_1 = arith.constant 0 : i32
    return %c0_i32, %c0_i32_0 : i32, i32
  }
  func.func @transform_3(%arg0: i32) -> (i32, i32) {
    %c0_i32 = arith.constant 0 : i32
    %c0_i32_0 = arith.constant 0 : i32
    %c0_i32_1 = arith.constant 0 : i32
    return %c0_i32, %c0_i32_0 : i32, i32
  }
  func.func @transform_4(%arg0: i32) -> (i32, i32) {
    %c0_i32 = arith.constant 0 : i32
    %c0_i32_0 = arith.constant 0 : i32
    %c0_i32_1 = arith.constant 0 : i32
    return %c0_i32, %c0_i32_0 : i32, i32
  }
  func.func @transform_5(%arg0: i32) -> (i32, i32) {
    %c0_i32 = arith.constant 0 : i32
    %c0_i32_0 = arith.constant 0 : i32
    %c0_i32_1 = arith.constant 0 : i32
    return %c0_i32, %c0_i32_0 : i32, i32
  }
  func.func @transform_6(%arg0: i32) -> (i32, i32) {
    %c0_i32 = arith.constant 0 : i32
    %c0_i32_0 = arith.constant 0 : i32
    %c0_i32_1 = arith.constant 0 : i32
    return %c0_i32, %c0_i32_0 : i32, i32
  }
  func.func @transform_7(%arg0: i32) -> (i32, i32) {
    %c0_i32 = arith.constant 0 : i32
    %c0_i32_0 = arith.constant 0 : i32
    %c0_i32_1 = arith.constant 0 : i32
    return %c0_i32, %c0_i32_0 : i32, i32
  }
}

module attributes {stable_mosaic.version = 11 : i64} {
  func.func @_layernorm_kernel(%arg0: i32, %arg1: memref<16x32xf32, #tpu.memory_space<vmem>>, %arg2: memref<1x32xf32, #tpu.memory_space<vmem>>, %arg3: memref<1x32xf32, #tpu.memory_space<vmem>>, %arg4: memref<16x32xf32, #tpu.memory_space<vmem>>) attributes {dimension_semantics = [#tpu.dimension_semantics<arbitrary>], iteration_bounds = array<i64: 1>, scalar_prefetch = 0 : i64, scratch_operands = 0 : i64, tpu.core_type = #tpu.core_type<tc>, window_params = [{pipeline_mode = #tpu.pipeline_mode<synchronous>, transform_indices = @transform_0, window_bounds = array<i64: 16, 32>}, {pipeline_mode = #tpu.pipeline_mode<synchronous>, transform_indices = @transform_1, window_bounds = array<i64: 1, 32>}, {pipeline_mode = #tpu.pipeline_mode<synchronous>, transform_indices = @transform_2, window_bounds = array<i64: 1, 32>}, {pipeline_mode = #tpu.pipeline_mode<synchronous>, transform_indices = @transform_3, window_bounds = array<i64: 16, 32>}]} {
    %c0 = arith.constant 0 : index
    %c0_0 = arith.constant 0 : index
    %0 = vector.load %arg1[%c0, %c0_0] : memref<16x32xf32, #tpu.memory_space<vmem>>, vector<16x32xf32>
    %c0_1 = arith.constant 0 : index
    %c0_2 = arith.constant 0 : index
    %1 = vector.load %arg2[%c0_1, %c0_2] : memref<1x32xf32, #tpu.memory_space<vmem>>, vector<1x32xf32>
    %c0_3 = arith.constant 0 : index
    %c0_4 = arith.constant 0 : index
    %2 = vector.load %arg3[%c0_3, %c0_4] : memref<1x32xf32, #tpu.memory_space<vmem>>, vector<1x32xf32>
    %cst = arith.constant dense<0.000000e+00> : vector<16xf32>
    %3 = vector.multi_reduction <add>, %0, %cst [1] : vector<16x32xf32> to vector<16xf32>
    %4 = vector.shape_cast %3 : vector<16xf32> to vector<16x1xf32>
    %cst_5 = arith.constant 3.200000e+01 : f32
    %5 = vector.broadcast %cst_5 : f32 to vector<16x1xf32>
    %6 = arith.divf %4, %5 : vector<16x1xf32>
    %7 = vector.broadcast %6 : vector<16x1xf32> to vector<16x32xf32>
    %8 = arith.subf %0, %7 : vector<16x32xf32>
    %9 = arith.mulf %8, %8 : vector<16x32xf32>
    %cst_6 = arith.constant dense<0.000000e+00> : vector<16xf32>
    %10 = vector.multi_reduction <add>, %9, %cst_6 [1] : vector<16x32xf32> to vector<16xf32>
    %11 = vector.shape_cast %10 : vector<16xf32> to vector<16x1xf32>
    %cst_7 = arith.constant 3.200000e+01 : f32
    %12 = vector.broadcast %cst_7 : f32 to vector<16x1xf32>
    %13 = arith.divf %11, %12 : vector<16x1xf32>
    %cst_8 = arith.constant 9.99999974E-6 : f32
    %14 = vector.broadcast %cst_8 : f32 to vector<16x1xf32>
    %15 = arith.addf %13, %14 : vector<16x1xf32>
    %16 = math.rsqrt %15 : vector<16x1xf32>
    %17 = vector.broadcast %16 : vector<16x1xf32> to vector<16x32xf32>
    %18 = arith.mulf %8, %17 : vector<16x32xf32>
    %19 = vector.broadcast %1 : vector<1x32xf32> to vector<16x32xf32>
    %20 = arith.mulf %18, %19 : vector<16x32xf32>
    %21 = vector.broadcast %2 : vector<1x32xf32> to vector<16x32xf32>
    %22 = arith.addf %20, %21 : vector<16x32xf32>
    %c0_9 = arith.constant 0 : index
    %c0_10 = arith.constant 0 : index
    %23 = vector.load %arg4[%c0_9, %c0_10] : memref<16x32xf32, #tpu.memory_space<vmem>>, vector<16x32xf32>
    tpu.vector_store %arg4[%c0_9, %c0_10], %22 {strides = array<i32>} : memref<16x32xf32, #tpu.memory_space<vmem>>, vector<16x32xf32>,
    return
  }
  func.func @transform_0(%arg0: i32) -> (i32, i32) {
    %c0_i32 = arith.constant 0 : i32
    %c0_i32_0 = arith.constant 0 : i32
    %c0_i32_1 = arith.constant 0 : i32
    return %c0_i32, %c0_i32_0 : i32, i32
  }
  func.func @transform_1(%arg0: i32) -> (i32, i32) {
    %c0_i32 = arith.constant 0 : i32
    %c0_i32_0 = arith.constant 0 : i32
    %c0_i32_1 = arith.constant 0 : i32
    return %c0_i32, %c0_i32_0 : i32, i32
  }
  func.func @transform_2(%arg0: i32) -> (i32, i32) {
    %c0_i32 = arith.constant 0 : i32
    %c0_i32_0 = arith.constant 0 : i32
    %c0_i32_1 = arith.constant 0 : i32
    return %c0_i32, %c0_i32_0 : i32, i32
  }
  func.func @transform_3(%arg0: i32) -> (i32, i32) {
    %c0_i32 = arith.constant 0 : i32
    %c0_i32_0 = arith.constant 0 : i32
    %c0_i32_1 = arith.constant 0 : i32
    return %c0_i32, %c0_i32_0 : i32, i32
  }
}

module attributes {stable_mosaic.version = 11 : i64} {
  func.func @_ln_linear_kernel(%arg0: i32, %arg1: memref<16x32xf32, #tpu.memory_space<vmem>>, %arg2: memref<1x32xf32, #tpu.memory_space<vmem>>, %arg3: memref<1x32xf32, #tpu.memory_space<vmem>>, %arg4: memref<32x128xbf16, #tpu.memory_space<vmem>>, %arg5: memref<1x128xf32, #tpu.memory_space<vmem>>, %arg6: memref<16x128xf32, #tpu.memory_space<vmem>>) attributes {dimension_semantics = [#tpu.dimension_semantics<parallel>], iteration_bounds = array<i64: 1>, scalar_prefetch = 0 : i64, scratch_operands = 0 : i64, tpu.core_type = #tpu.core_type<tc>, window_params = [{pipeline_mode = #tpu.pipeline_mode<synchronous>, transform_indices = @transform_0, window_bounds = array<i64: 16, 32>}, {pipeline_mode = #tpu.pipeline_mode<synchronous>, transform_indices = @transform_1, window_bounds = array<i64: 1, 32>}, {pipeline_mode = #tpu.pipeline_mode<synchronous>, transform_indices = @transform_2, window_bounds = array<i64: 1, 32>}, {transform_indices = @transform_3, window_bounds = array<i64: 32, 128>}, {transform_indices = @transform_4, window_bounds = array<i64: 1, 128>}, {transform_indices = @transform_5, window_bounds = array<i64: 16, 128>}]} {
    %c0 = arith.constant 0 : index
    %c0_0 = arith.constant 0 : index
    %0 = vector.load %arg1[%c0, %c0_0] : memref<16x32xf32, #tpu.memory_space<vmem>>, vector<16x32xf32>
    %c0_1 = arith.constant 0 : index
    %c0_2 = arith.constant 0 : index
    %1 = vector.load %arg2[%c0_1, %c0_2] : memref<1x32xf32, #tpu.memory_space<vmem>>, vector<1x32xf32>
    %c0_3 = arith.constant 0 : index
    %c0_4 = arith.constant 0 : index
    %2 = vector.load %arg3[%c0_3, %c0_4] : memref<1x32xf32, #tpu.memory_space<vmem>>, vector<1x32xf32>
    %cst = arith.constant dense<0.000000e+00> : vector<16xf32>
    %3 = vector.multi_reduction <add>, %0, %cst [1] : vector<16x32xf32> to vector<16xf32>
    %4 = vector.shape_cast %3 : vector<16xf32> to vector<16x1xf32>
    %cst_5 = arith.constant 3.200000e+01 : f32
    %5 = vector.broadcast %cst_5 : f32 to vector<16x1xf32>
    %6 = arith.divf %4, %5 : vector<16x1xf32>
    %7 = vector.broadcast %6 : vector<16x1xf32> to vector<16x32xf32>
    %8 = arith.subf %0, %7 : vector<16x32xf32>
    %9 = arith.mulf %8, %8 : vector<16x32xf32>
    %cst_6 = arith.constant dense<0.000000e+00> : vector<16xf32>
    %10 = vector.multi_reduction <add>, %9, %cst_6 [1] : vector<16x32xf32> to vector<16xf32>
    %11 = vector.shape_cast %10 : vector<16xf32> to vector<16x1xf32>
    %cst_7 = arith.constant 3.200000e+01 : f32
    %12 = vector.broadcast %cst_7 : f32 to vector<16x1xf32>
    %13 = arith.divf %11, %12 : vector<16x1xf32>
    %cst_8 = arith.constant 9.99999974E-6 : f32
    %14 = vector.broadcast %cst_8 : f32 to vector<16x1xf32>
    %15 = arith.addf %13, %14 : vector<16x1xf32>
    %16 = math.rsqrt %15 : vector<16x1xf32>
    %17 = vector.broadcast %16 : vector<16x1xf32> to vector<16x32xf32>
    %18 = arith.mulf %8, %17 : vector<16x32xf32>
    %19 = vector.broadcast %1 : vector<1x32xf32> to vector<16x32xf32>
    %20 = arith.mulf %18, %19 : vector<16x32xf32>
    %21 = vector.broadcast %2 : vector<1x32xf32> to vector<16x32xf32>
    %22 = arith.addf %20, %21 : vector<16x32xf32>
    %23 = arith.truncf %22 : vector<16x32xf32> to vector<16x32xbf16>
    %c0_9 = arith.constant 0 : index
    %c0_10 = arith.constant 0 : index
    %24 = vector.load %arg4[%c0_9, %c0_10] : memref<32x128xbf16, #tpu.memory_space<vmem>>, vector<32x128xbf16>
    %cst_11 = arith.constant dense<0.000000e+00> : vector<16x128xf32>
    %25 = tpu.matmul %23, %24, %cst_11 {dimension_numbers = #tpu.dot_dimension_numbers<[1], [0], [0], [1], [0, 0, 1, 1], [], []>} : vector<16x32xbf16>, vector<32x128xbf16>, vector<16x128xf32> -> vector<16x128xf32>
    %c0_12 = arith.constant 0 : index
    %c0_13 = arith.constant 0 : index
    %26 = vector.load %arg5[%c0_12, %c0_13] : memref<1x128xf32, #tpu.memory_space<vmem>>, vector<1x128xf32>
    %27 = vector.broadcast %26 : vector<1x128xf32> to vector<16x128xf32>
    %28 = arith.addf %25, %27 : vector<16x128xf32>
    %c0_14 = arith.constant 0 : index
    %c0_15 = arith.constant 0 : index
    %29 = vector.load %arg6[%c0_14, %c0_15] : memref<16x128xf32, #tpu.memory_space<vmem>>, vector<16x128xf32>
    tpu.vector_store %arg6[%c0_14, %c0_15], %28 {strides = array<i32>} : memref<16x128xf32, #tpu.memory_space<vmem>>, vector<16x128xf32>,
    return
  }
  func.func @transform_0(%arg0: i32) -> (i32, i32) {
    %c0_i32 = arith.constant 0 : i32
    %c0_i32_0 = arith.constant 0 : i32
    %c0_i32_1 = arith.constant 0 : i32
    return %c0_i32, %c0_i32_0 : i32, i32
  }
  func.func @transform_1(%arg0: i32) -> (i32, i32) {
    %c0_i32 = arith.constant 0 : i32
    %c0_i32_0 = arith.constant 0 : i32
    %c0_i32_1 = arith.constant 0 : i32
    return %c0_i32, %c0_i32_0 : i32, i32
  }
  func.func @transform_2(%arg0: i32) -> (i32, i32) {
    %c0_i32 = arith.constant 0 : i32
    %c0_i32_0 = arith.constant 0 : i32
    %c0_i32_1 = arith.constant 0 : i32
    return %c0_i32, %c0_i32_0 : i32, i32
  }
  func.func @transform_3(%arg0: i32) -> (i32, i32) {
    %c0_i32 = arith.constant 0 : i32
    %c0_i32_0 = arith.constant 0 : i32
    return %c0_i32, %arg0 : i32, i32
  }
  func.func @transform_4(%arg0: i32) -> (i32, i32) {
    %c0_i32 = arith.constant 0 : i32
    %c0_i32_0 = arith.constant 0 : i32
    return %c0_i32, %arg0 : i32, i32
  }
  func.func @transform_5(%arg0: i32) -> (i32, i32) {
    %c0_i32 = arith.constant 0 : i32
    %c0_i32_0 = arith.constant 0 : i32
    return %c0_i32, %arg0 : i32, i32
  }
}

module attributes {stable_mosaic.version = 11 : i64} {
  func.func @_attn_block_kernel(%arg0: i32, %arg1: memref<1x8x32xf32, #tpu.memory_space<vmem>>, %arg2: memref<1x8x32xf32, #tpu.memory_space<vmem>>, %arg3: memref<32x32xbf16, #tpu.memory_space<vmem>>, %arg4: memref<1x32xf32, #tpu.memory_space<vmem>>, %arg5: memref<32x64xbf16, #tpu.memory_space<vmem>>, %arg6: memref<1x64xf32, #tpu.memory_space<vmem>>, %arg7: memref<4x8x32xbf16, #tpu.memory_space<vmem>>, %arg8: memref<1x32xf32, #tpu.memory_space<vmem>>, %arg9: memref<1x32xf32, #tpu.memory_space<vmem>>, %arg10: memref<1x32xf32, #tpu.memory_space<vmem>>, %arg11: memref<1x8x32xf32, #tpu.memory_space<vmem>>) attributes {dimension_semantics = [#tpu.dimension_semantics<parallel>], iteration_bounds = array<i64: 2>, scalar_prefetch = 0 : i64, scratch_operands = 0 : i64, tpu.core_type = #tpu.core_type<tc>, window_params = [{transform_indices = @transform_0, window_bounds = array<i64: 1, 8, 32>}, {transform_indices = @transform_1, window_bounds = array<i64: 1, 8, 32>}, {pipeline_mode = #tpu.pipeline_mode<synchronous>, transform_indices = @transform_2, window_bounds = array<i64: 32, 32>}, {pipeline_mode = #tpu.pipeline_mode<synchronous>, transform_indices = @transform_3, window_bounds = array<i64: 1, 32>}, {pipeline_mode = #tpu.pipeline_mode<synchronous>, transform_indices = @transform_4, window_bounds = array<i64: 32, 64>}, {pipeline_mode = #tpu.pipeline_mode<synchronous>, transform_indices = @transform_5, window_bounds = array<i64: 1, 64>}, {pipeline_mode = #tpu.pipeline_mode<synchronous>, transform_indices = @transform_6, window_bounds = array<i64: 4, 8, 32>}, {pipeline_mode = #tpu.pipeline_mode<synchronous>, transform_indices = @transform_7, window_bounds = array<i64: 1, 32>}, {pipeline_mode = #tpu.pipeline_mode<synchronous>, transform_indices = @transform_8, window_bounds = array<i64: 1, 32>}, {pipeline_mode = #tpu.pipeline_mode<synchronous>, transform_indices = @transform_9, window_bounds = array<i64: 1, 32>}, {transform_indices = @transform_10, window_bounds = array<i64: 1, 8, 32>}]} {
    %c0 = arith.constant 0 : index
    %c0_0 = arith.constant 0 : index
    %c0_1 = arith.constant 0 : index
    %0 = vector.load %arg1[%c0, %c0_0, %c0_1] : memref<1x8x32xf32, #tpu.memory_space<vmem>>, vector<1x8x32xf32>
    %1 = vector.shape_cast %0 : vector<1x8x32xf32> to vector<8x32xf32>
    %c0_2 = arith.constant 0 : index
    %c0_3 = arith.constant 0 : index
    %c0_4 = arith.constant 0 : index
    %2 = vector.load %arg2[%c0_2, %c0_3, %c0_4] : memref<1x8x32xf32, #tpu.memory_space<vmem>>, vector<1x8x32xf32>
    %3 = vector.shape_cast %2 : vector<1x8x32xf32> to vector<8x32xf32>
    %4 = arith.truncf %1 : vector<8x32xf32> to vector<8x32xbf16>
    %c0_5 = arith.constant 0 : index
    %c0_6 = arith.constant 0 : index
    %5 = vector.load %arg3[%c0_5, %c0_6] : memref<32x32xbf16, #tpu.memory_space<vmem>>, vector<32x32xbf16>
    %cst = arith.constant dense<0.000000e+00> : vector<8x32xf32>
    %6 = tpu.matmul %4, %5, %cst {dimension_numbers = #tpu.dot_dimension_numbers<[1], [0], [0], [1], [0, 0, 1, 1], [], []>} : vector<8x32xbf16>, vector<32x32xbf16>, vector<8x32xf32> -> vector<8x32xf32>
    %c0_7 = arith.constant 0 : index
    %c0_8 = arith.constant 0 : index
    %7 = vector.load %arg4[%c0_7, %c0_8] : memref<1x32xf32, #tpu.memory_space<vmem>>, vector<1x32xf32>
    %8 = vector.broadcast %7 : vector<1x32xf32> to vector<8x32xf32>
    %9 = arith.addf %6, %8 : vector<8x32xf32>
    %10 = arith.truncf %3 : vector<8x32xf32> to vector<8x32xbf16>
    %c0_9 = arith.constant 0 : index
    %c0_10 = arith.constant 0 : index
    %11 = vector.load %arg5[%c0_9, %c0_10] : memref<32x64xbf16, #tpu.memory_space<vmem>>, vector<32x64xbf16>
    %cst_11 = arith.constant dense<0.000000e+00> : vector<8x64xf32>
    %12 = tpu.matmul %10, %11, %cst_11 {dimension_numbers = #tpu.dot_dimension_numbers<[1], [0], [0], [1], [0, 0, 1, 1], [], []>} : vector<8x32xbf16>, vector<32x64xbf16>, vector<8x64xf32> -> vector<8x64xf32>
    %c0_12 = arith.constant 0 : index
    %c0_13 = arith.constant 0 : index
    %13 = vector.load %arg6[%c0_12, %c0_13] : memref<1x64xf32, #tpu.memory_space<vmem>>, vector<1x64xf32>
    %14 = vector.broadcast %13 : vector<1x64xf32> to vector<8x64xf32>
    %15 = arith.addf %12, %14 : vector<8x64xf32>
    %16 = vector.extract_strided_slice %15 {offsets = [0, 0], sizes = [8, 32], strides = [1, 1]} : vector<8x64xf32> to vector<8x32xf32>
    %17 = vector.extract_strided_slice %15 {offsets = [0, 32], sizes = [8, 32], strides = [1, 1]} : vector<8x64xf32> to vector<8x32xf32>
    %cst_14 = arith.constant 0.000000e+00 : f32
    %18 = vector.broadcast %cst_14 : f32 to vector<8x32xf32>
    %19 = vector.extract_strided_slice %9 {offsets = [0, 0], sizes = [8, 8], strides = [1, 1]} : vector<8x32xf32> to vector<8x8xf32>
    %cst_15 = arith.constant 0.353553385 : f32
    %20 = vector.broadcast %cst_15 : f32 to vector<8x8xf32>
    %21 = arith.mulf %19, %20 : vector<8x8xf32>
    %22 = arith.truncf %21 : vector<8x8xf32> to vector<8x8xbf16>
    %23 = vector.extract_strided_slice %16 {offsets = [0, 0], sizes = [8, 8], strides = [1, 1]} : vector<8x32xf32> to vector<8x8xf32>
    %24 = arith.truncf %23 : vector<8x8xf32> to vector<8x8xbf16>
    %25 = vector.extract_strided_slice %17 {offsets = [0, 0], sizes = [8, 8], strides = [1, 1]} : vector<8x32xf32> to vector<8x8xf32>
    %26 = arith.truncf %25 : vector<8x8xf32> to vector<8x8xbf16>
    %cst_16 = arith.constant dense<0.000000e+00> : vector<8x8xf32>
    %27 = tpu.matmul %22, %24, %cst_16 {dimension_numbers = #tpu.dot_dimension_numbers<[1], [1], [0], [0], [0, 0, 1, 0], [], []>} : vector<8x8xbf16>, vector<8x8xbf16>, vector<8x8xf32> -> vector<8x8xf32>
    %cst_17 = arith.constant dense<0xFF800000> : vector<8xf32>
    %28 = vector.multi_reduction <maximumf>, %27, %cst_17 [1] : vector<8x8xf32> to vector<8xf32>
    %29 = vector.shape_cast %28 : vector<8xf32> to vector<8x1xf32>
    %30 = vector.broadcast %29 : vector<8x1xf32> to vector<8x8xf32>
    %31 = arith.subf %27, %30 : vector<8x8xf32>
    %32 = math.exp %31 : vector<8x8xf32>
    %cst_18 = arith.constant dense<0.000000e+00> : vector<8xf32>
    %33 = vector.multi_reduction <add>, %32, %cst_18 [1] : vector<8x8xf32> to vector<8xf32>
    %34 = vector.shape_cast %33 : vector<8xf32> to vector<8x1xf32>
    %35 = tpu.reciprocal %34 {approx = true} : vector<8x1xf32> -> vector<8x1xf32>
    %36 = vector.broadcast %35 : vector<8x1xf32> to vector<8x8xf32>
    %37 = arith.mulf %32, %36 : vector<8x8xf32>
    %38 = arith.truncf %37 : vector<8x8xf32> to vector<8x8xbf16>
    %cst_19 = arith.constant dense<0.000000e+00> : vector<8x8xf32>
    %39 = tpu.matmul %38, %26, %cst_19 {dimension_numbers = #tpu.dot_dimension_numbers<[1], [0], [0], [1], [0, 0, 1, 1], [], []>} : vector<8x8xbf16>, vector<8x8xbf16>, vector<8x8xf32> -> vector<8x8xf32>
    %40 = arith.truncf %39 : vector<8x8xf32> to vector<8x8xbf16>
    %c0_20 = arith.constant 0 : index
    %c0_21 = arith.constant 0 : index
    %c0_22 = arith.constant 0 : index
    %41 = vector.load %arg7[%c0_20, %c0_21, %c0_22] : memref<4x8x32xbf16, #tpu.memory_space<vmem>>, vector<1x8x32xbf16>
    %42 = vector.shape_cast %41 : vector<1x8x32xbf16> to vector<8x32xbf16>
    %cst_23 = arith.constant dense<0.000000e+00> : vector<8x32xf32>
    %43 = tpu.matmul %40, %42, %cst_23 {dimension_numbers = #tpu.dot_dimension_numbers<[1], [0], [0], [1], [0, 0, 1, 1], [], []>} : vector<8x8xbf16>, vector<8x32xbf16>, vector<8x32xf32> -> vector<8x32xf32>
    %44 = arith.addf %18, %43 : vector<8x32xf32>
    %45 = vector.extract_strided_slice %9 {offsets = [0, 8], sizes = [8, 8], strides = [1, 1]} : vector<8x32xf32> to vector<8x8xf32>
    %cst_24 = arith.constant 0.353553385 : f32
    %46 = vector.broadcast %cst_24 : f32 to vector<8x8xf32>
    %47 = arith.mulf %45, %46 : vector<8x8xf32>
    %48 = arith.truncf %47 : vector<8x8xf32> to vector<8x8xbf16>
    %49 = vector.extract_strided_slice %16 {offsets = [0, 8], sizes = [8, 8], strides = [1, 1]} : vector<8x32xf32> to vector<8x8xf32>
    %50 = arith.truncf %49 : vector<8x8xf32> to vector<8x8xbf16>
    %51 = vector.extract_strided_slice %17 {offsets = [0, 8], sizes = [8, 8], strides = [1, 1]} : vector<8x32xf32> to vector<8x8xf32>
    %52 = arith.truncf %51 : vector<8x8xf32> to vector<8x8xbf16>
    %cst_25 = arith.constant dense<0.000000e+00> : vector<8x8xf32>
    %53 = tpu.matmul %48, %50, %cst_25 {dimension_numbers = #tpu.dot_dimension_numbers<[1], [1], [0], [0], [0, 0, 1, 0], [], []>} : vector<8x8xbf16>, vector<8x8xbf16>, vector<8x8xf32> -> vector<8x8xf32>
    %cst_26 = arith.constant dense<0xFF800000> : vector<8xf32>
    %54 = vector.multi_reduction <maximumf>, %53, %cst_26 [1] : vector<8x8xf32> to vector<8xf32>
    %55 = vector.shape_cast %54 : vector<8xf32> to vector<8x1xf32>
    %56 = vector.broadcast %55 : vector<8x1xf32> to vector<8x8xf32>
    %57 = arith.subf %53, %56 : vector<8x8xf32>
    %58 = math.exp %57 : vector<8x8xf32>
    %cst_27 = arith.constant dense<0.000000e+00> : vector<8xf32>
    %59 = vector.multi_reduction <add>, %58, %cst_27 [1] : vector<8x8xf32> to vector<8xf32>
    %60 = vector.shape_cast %59 : vector<8xf32> to vector<8x1xf32>
    %61 = tpu.reciprocal %60 {approx = true} : vector<8x1xf32> -> vector<8x1xf32>
    %62 = vector.broadcast %61 : vector<8x1xf32> to vector<8x8xf32>
    %63 = arith.mulf %58, %62 : vector<8x8xf32>
    %64 = arith.truncf %63 : vector<8x8xf32> to vector<8x8xbf16>
    %cst_28 = arith.constant dense<0.000000e+00> : vector<8x8xf32>
    %65 = tpu.matmul %64, %52, %cst_28 {dimension_numbers = #tpu.dot_dimension_numbers<[1], [0], [0], [1], [0, 0, 1, 1], [], []>} : vector<8x8xbf16>, vector<8x8xbf16>, vector<8x8xf32> -> vector<8x8xf32>
    %66 = arith.truncf %65 : vector<8x8xf32> to vector<8x8xbf16>
    %c1 = arith.constant 1 : index
    %c0_29 = arith.constant 0 : index
    %c0_30 = arith.constant 0 : index
    %67 = vector.load %arg7[%c1, %c0_29, %c0_30] : memref<4x8x32xbf16, #tpu.memory_space<vmem>>, vector<1x8x32xbf16>
    %68 = vector.shape_cast %67 : vector<1x8x32xbf16> to vector<8x32xbf16>
    %cst_31 = arith.constant dense<0.000000e+00> : vector<8x32xf32>
    %69 = tpu.matmul %66, %68, %cst_31 {dimension_numbers = #tpu.dot_dimension_numbers<[1], [0], [0], [1], [0, 0, 1, 1], [], []>} : vector<8x8xbf16>, vector<8x32xbf16>, vector<8x32xf32> -> vector<8x32xf32>
    %70 = arith.addf %44, %69 : vector<8x32xf32>
    %71 = vector.extract_strided_slice %9 {offsets = [0, 16], sizes = [8, 8], strides = [1, 1]} : vector<8x32xf32> to vector<8x8xf32>
    %cst_32 = arith.constant 0.353553385 : f32
    %72 = vector.broadcast %cst_32 : f32 to vector<8x8xf32>
    %73 = arith.mulf %71, %72 : vector<8x8xf32>
    %74 = arith.truncf %73 : vector<8x8xf32> to vector<8x8xbf16>
    %75 = vector.extract_strided_slice %16 {offsets = [0, 16], sizes = [8, 8], strides = [1, 1]} : vector<8x32xf32> to vector<8x8xf32>
    %76 = arith.truncf %75 : vector<8x8xf32> to vector<8x8xbf16>
    %77 = vector.extract_strided_slice %17 {offsets = [0, 16], sizes = [8, 8], strides = [1, 1]} : vector<8x32xf32> to vector<8x8xf32>
    %78 = arith.truncf %77 : vector<8x8xf32> to vector<8x8xbf16>
    %cst_33 = arith.constant dense<0.000000e+00> : vector<8x8xf32>
    %79 = tpu.matmul %74, %76, %cst_33 {dimension_numbers = #tpu.dot_dimension_numbers<[1], [1], [0], [0], [0, 0, 1, 0], [], []>} : vector<8x8xbf16>, vector<8x8xbf16>, vector<8x8xf32> -> vector<8x8xf32>
    %cst_34 = arith.constant dense<0xFF800000> : vector<8xf32>
    %80 = vector.multi_reduction <maximumf>, %79, %cst_34 [1] : vector<8x8xf32> to vector<8xf32>
    %81 = vector.shape_cast %80 : vector<8xf32> to vector<8x1xf32>
    %82 = vector.broadcast %81 : vector<8x1xf32> to vector<8x8xf32>
    %83 = arith.subf %79, %82 : vector<8x8xf32>
    %84 = math.exp %83 : vector<8x8xf32>
    %cst_35 = arith.constant dense<0.000000e+00> : vector<8xf32>
    %85 = vector.multi_reduction <add>, %84, %cst_35 [1] : vector<8x8xf32> to vector<8xf32>
    %86 = vector.shape_cast %85 : vector<8xf32> to vector<8x1xf32>
    %87 = tpu.reciprocal %86 {approx = true} : vector<8x1xf32> -> vector<8x1xf32>
    %88 = vector.broadcast %87 : vector<8x1xf32> to vector<8x8xf32>
    %89 = arith.mulf %84, %88 : vector<8x8xf32>
    %90 = arith.truncf %89 : vector<8x8xf32> to vector<8x8xbf16>
    %cst_36 = arith.constant dense<0.000000e+00> : vector<8x8xf32>
    %91 = tpu.matmul %90, %78, %cst_36 {dimension_numbers = #tpu.dot_dimension_numbers<[1], [0], [0], [1], [0, 0, 1, 1], [], []>} : vector<8x8xbf16>, vector<8x8xbf16>, vector<8x8xf32> -> vector<8x8xf32>
    %92 = arith.truncf %91 : vector<8x8xf32> to vector<8x8xbf16>
    %c2 = arith.constant 2 : index
    %c0_37 = arith.constant 0 : index
    %c0_38 = arith.constant 0 : index
    %93 = vector.load %arg7[%c2, %c0_37, %c0_38] : memref<4x8x32xbf16, #tpu.memory_space<vmem>>, vector<1x8x32xbf16>
    %94 = vector.shape_cast %93 : vector<1x8x32xbf16> to vector<8x32xbf16>
    %cst_39 = arith.constant dense<0.000000e+00> : vector<8x32xf32>
    %95 = tpu.matmul %92, %94, %cst_39 {dimension_numbers = #tpu.dot_dimension_numbers<[1], [0], [0], [1], [0, 0, 1, 1], [], []>} : vector<8x8xbf16>, vector<8x32xbf16>, vector<8x32xf32> -> vector<8x32xf32>
    %96 = arith.addf %70, %95 : vector<8x32xf32>
    %97 = vector.extract_strided_slice %9 {offsets = [0, 24], sizes = [8, 8], strides = [1, 1]} : vector<8x32xf32> to vector<8x8xf32>
    %cst_40 = arith.constant 0.353553385 : f32
    %98 = vector.broadcast %cst_40 : f32 to vector<8x8xf32>
    %99 = arith.mulf %97, %98 : vector<8x8xf32>
    %100 = arith.truncf %99 : vector<8x8xf32> to vector<8x8xbf16>
    %101 = vector.extract_strided_slice %16 {offsets = [0, 24], sizes = [8, 8], strides = [1, 1]} : vector<8x32xf32> to vector<8x8xf32>
    %102 = arith.truncf %101 : vector<8x8xf32> to vector<8x8xbf16>
    %103 = vector.extract_strided_slice %17 {offsets = [0, 24], sizes = [8, 8], strides = [1, 1]} : vector<8x32xf32> to vector<8x8xf32>
    %104 = arith.truncf %103 : vector<8x8xf32> to vector<8x8xbf16>
    %cst_41 = arith.constant dense<0.000000e+00> : vector<8x8xf32>
    %105 = tpu.matmul %100, %102, %cst_41 {dimension_numbers = #tpu.dot_dimension_numbers<[1], [1], [0], [0], [0, 0, 1, 0], [], []>} : vector<8x8xbf16>, vector<8x8xbf16>, vector<8x8xf32> -> vector<8x8xf32>
    %cst_42 = arith.constant dense<0xFF800000> : vector<8xf32>
    %106 = vector.multi_reduction <maximumf>, %105, %cst_42 [1] : vector<8x8xf32> to vector<8xf32>
    %107 = vector.shape_cast %106 : vector<8xf32> to vector<8x1xf32>
    %108 = vector.broadcast %107 : vector<8x1xf32> to vector<8x8xf32>
    %109 = arith.subf %105, %108 : vector<8x8xf32>
    %110 = math.exp %109 : vector<8x8xf32>
    %cst_43 = arith.constant dense<0.000000e+00> : vector<8xf32>
    %111 = vector.multi_reduction <add>, %110, %cst_43 [1] : vector<8x8xf32> to vector<8xf32>
    %112 = vector.shape_cast %111 : vector<8xf32> to vector<8x1xf32>
    %113 = tpu.reciprocal %112 {approx = true} : vector<8x1xf32> -> vector<8x1xf32>
    %114 = vector.broadcast %113 : vector<8x1xf32> to vector<8x8xf32>
    %115 = arith.mulf %110, %114 : vector<8x8xf32>
    %116 = arith.truncf %115 : vector<8x8xf32> to vector<8x8xbf16>
    %cst_44 = arith.constant dense<0.000000e+00> : vector<8x8xf32>
    %117 = tpu.matmul %116, %104, %cst_44 {dimension_numbers = #tpu.dot_dimension_numbers<[1], [0], [0], [1], [0, 0, 1, 1], [], []>} : vector<8x8xbf16>, vector<8x8xbf16>, vector<8x8xf32> -> vector<8x8xf32>
    %118 = arith.truncf %117 : vector<8x8xf32> to vector<8x8xbf16>
    %c3 = arith.constant 3 : index
    %c0_45 = arith.constant 0 : index
    %c0_46 = arith.constant 0 : index
    %119 = vector.load %arg7[%c3, %c0_45, %c0_46] : memref<4x8x32xbf16, #tpu.memory_space<vmem>>, vector<1x8x32xbf16>
    %120 = vector.shape_cast %119 : vector<1x8x32xbf16> to vector<8x32xbf16>
    %cst_47 = arith.constant dense<0.000000e+00> : vector<8x32xf32>
    %121 = tpu.matmul %118, %120, %cst_47 {dimension_numbers = #tpu.dot_dimension_numbers<[1], [0], [0], [1], [0, 0, 1, 1], [], []>} : vector<8x8xbf16>, vector<8x32xbf16>, vector<8x32xf32> -> vector<8x32xf32>
    %122 = arith.addf %96, %121 : vector<8x32xf32>
    %123 = arith.addf %1, %122 : vector<8x32xf32>
    %c0_48 = arith.constant 0 : index
    %c0_49 = arith.constant 0 : index
    %124 = vector.load %arg8[%c0_48, %c0_49] : memref<1x32xf32, #tpu.memory_space<vmem>>, vector<1x32xf32>
    %125 = vector.broadcast %124 : vector<1x32xf32> to vector<8x32xf32>
    %126 = arith.addf %123, %125 : vector<8x32xf32>
    %c0_50 = arith.constant 0 : index
    %c0_51 = arith.constant 0 : index
    %127 = vector.load %arg9[%c0_50, %c0_51] : memref<1x32xf32, #tpu.memory_space<vmem>>, vector<1x32xf32>
    %c0_52 = arith.constant 0 : index
    %c0_53 = arith.constant 0 : index
    %128 = vector.load %arg10[%c0_52, %c0_53] : memref<1x32xf32, #tpu.memory_space<vmem>>, vector<1x32xf32>
    %cst_54 = arith.constant dense<0.000000e+00> : vector<8xf32>
    %129 = vector.multi_reduction <add>, %126, %cst_54 [1] : vector<8x32xf32> to vector<8xf32>
    %130 = vector.shape_cast %129 : vector<8xf32> to vector<8x1xf32>
    %cst_55 = arith.constant 3.200000e+01 : f32
    %131 = vector.broadcast %cst_55 : f32 to vector<8x1xf32>
    %132 = arith.divf %130, %131 : vector<8x1xf32>
    %133 = vector.broadcast %132 : vector<8x1xf32> to vector<8x32xf32>
    %134 = arith.subf %126, %133 : vector<8x32xf32>
    %135 = arith.mulf %134, %134 : vector<8x32xf32>
    %cst_56 = arith.constant dense<0.000000e+00> : vector<8xf32>
    %136 = vector.multi_reduction <add>, %135, %cst_56 [1] : vector<8x32xf32> to vector<8xf32>
    %137 = vector.shape_cast %136 : vector<8xf32> to vector<8x1xf32>
    %cst_57 = arith.constant 3.200000e+01 : f32
    %138 = vector.broadcast %cst_57 : f32 to vector<8x1xf32>
    %139 = arith.divf %137, %138 : vector<8x1xf32>
    %cst_58 = arith.constant 9.99999974E-6 : f32
    %140 = vector.broadcast %cst_58 : f32 to vector<8x1xf32>
    %141 = arith.addf %139, %140 : vector<8x1xf32>
    %142 = math.rsqrt %141 : vector<8x1xf32>
    %143 = vector.broadcast %142 : vector<8x1xf32> to vector<8x32xf32>
    %144 = arith.mulf %134, %143 : vector<8x32xf32>
    %145 = vector.broadcast %127 : vector<1x32xf32> to vector<8x32xf32>
    %146 = arith.mulf %144, %145 : vector<8x32xf32>
    %147 = vector.broadcast %128 : vector<1x32xf32> to vector<8x32xf32>
    %148 = arith.addf %146, %147 : vector<8x32xf32>
    %c0_59 = arith.constant 0 : index
    %c0_60 = arith.constant 0 : index
    %c0_61 = arith.constant 0 : index
    %149 = vector.load %arg11[%c0_59, %c0_60, %c0_61] : memref<1x8x32xf32, #tpu.memory_space<vmem>>, vector<1x8x32xf32>
    %150 = vector.shape_cast %149 : vector<1x8x32xf32> to vector<8x32xf32>
    %151 = vector.shape_cast %148 : vector<8x32xf32> to vector<1x8x32xf32>
    tpu.vector_store %arg11[%c0_59, %c0_60, %c0_61], %151 {strides = array<i32>} : memref<1x8x32xf32, #tpu.memory_space<vmem>>, vector<1x8x32xf32>,
    return
  }
  func.func @transform_0(%arg0: i32) -> (i32, i32, i32) {
    %c0_i32 = arith.constant 0 : i32
    %c0_i32_0 = arith.constant 0 : i32
    %c0_i32_1 = arith.constant 0 : i32
    return %arg0, %c0_i32, %c0_i32_0 : i32, i32, i32
  }
  func.func @transform_1(%arg0: i32) -> (i32, i32, i32) {
    %c0_i32 = arith.constant 0 : i32
    %c0_i32_0 = arith.constant 0 : i32
    %c0_i32_1 = arith.constant 0 : i32
    return %arg0, %c0_i32, %c0_i32_0 : i32, i32, i32
  }
  func.func @transform_2(%arg0: i32) -> (i32, i32) {
    %c0_i32 = arith.constant 0 : i32
    %c0_i32_0 = arith.constant 0 : i32
    %c0_i32_1 = arith.constant 0 : i32
    return %c0_i32, %c0_i32_0 : i32, i32
  }
  func.func @transform_3(%arg0: i32) -> (i32, i32) {
    %c0_i32 = arith.constant 0 : i32
    %c0_i32_0 = arith.constant 0 : i32
    %c0_i32_1 = arith.constant 0 : i32
    return %c0_i32, %c0_i32_0 : i32, i32
  }
  func.func @transform_4(%arg0: i32) -> (i32, i32) {
    %c0_i32 = arith.constant 0 : i32
    %c0_i32_0 = arith.constant 0 : i32
    %c0_i32_1 = arith.constant 0 : i32
    return %c0_i32, %c0_i32_0 : i32, i32
  }
  func.func @transform_5(%arg0: i32) -> (i32, i32) {
    %c0_i32 = arith.constant 0 : i32
    %c0_i32_0 = arith.constant 0 : i32
    %c0_i32_1 = arith.constant 0 : i32
    return %c0_i32, %c0_i32_0 : i32, i32
  }
  func.func @transform_6(%arg0: i32) -> (i32, i32, i32) {
    %c0_i32 = arith.constant 0 : i32
    %c0_i32_0 = arith.constant 0 : i32
    %c0_i32_1 = arith.constant 0 : i32
    %c0_i32_2 = arith.constant 0 : i32
    return %c0_i32, %c0_i32_0, %c0_i32_1 : i32, i32, i32
  }
  func.func @transform_7(%arg0: i32) -> (i32, i32) {
    %c0_i32 = arith.constant 0 : i32
    %c0_i32_0 = arith.constant 0 : i32
    %c0_i32_1 = arith.constant 0 : i32
    return %c0_i32, %c0_i32_0 : i32, i32
  }
  func.func @transform_8(%arg0: i32) -> (i32, i32) {
    %c0_i32 = arith.constant 0 : i32
    %c0_i32_0 = arith.constant 0 : i32
    %c0_i32_1 = arith.constant 0 : i32
    return %c0_i32, %c0_i32_0 : i32, i32
  }
  func.func @transform_9(%arg0: i32) -> (i32, i32) {
    %c0_i32 = arith.constant 0 : i32
    %c0_i32_0 = arith.constant 0 : i32
    %c0_i32_1 = arith.constant 0 : i32
    return %c0_i32, %c0_i32_0 : i32, i32
  }
  func.func @transform_10(%arg0: i32) -> (i32, i32, i32) {
    %c0_i32 = arith.constant 0 : i32
    %c0_i32_0 = arith.constant 0 : i32
    %c0_i32_1 = arith.constant 0 : i32
    return %arg0, %c0_i32, %c0_i32_0 : i32, i32, i32
  }
}

</mosaic_0001>

<llo_original>
// kernel: transformer_forward.14
$region0: #{transformer_forward.14}
  #allocation0 [shape = 'u32[]', space=smem, size = 0x4, offset = 0x4, fixed_abs, tag = 'smem constant byte address 0x4 - core index']
  #allocation1 [shape = 'u32[72,128]{1,0:T(1,128)}', space=vmem, size = 0x9000, scoped, tag = 'internal scratch']
  %s0 = inlined_call_operand.vmem [shape: f32[2,8,32], index: 0, kind: input, shape index: {}]
  %s1 = inlined_call_operand.vmem [shape: f32[8,32], index: 1, kind: input, shape index: {}]
  %s2 = inlined_call_operand.vmem [shape: f32[2,8,32], index: 2, kind: output, shape index: {}]
  %s3 = sld [smem:[#allocation0]]
  $region18: #{transformer_forward.14} parent=0
    _
  %s5 = ssub.s32 1, %s3
  %s6 = scalar_select 0, %s5, %s3
  // Predicated region
  $region2: #{transformer_forward.14} parent=0 // pred_check
    _
  $region3: #{transformer_forward.14} parent=0 // pred_check_branch
    %8 = sbr.rel (0) target = $region5
  $region4: #{transformer_forward.14} parent=0 // pred_region
    _
  $region5: #{transformer_forward.14} parent=0 // pred_fallthru
    _
  // Predicated region
  $region6: #{transformer_forward.14} parent=0 // pred_check
    _
  $region7: #{transformer_forward.14} parent=0 // pred_check_branch
    %10 = sbr.rel (0) target = $region9
  $region8: #{transformer_forward.14} parent=0 // pred_region
    _
  $region9: #{transformer_forward.14} parent=0 // pred_fallthru
    _
  %v11 = vld [vmem:[%s0] sm:$0xff]
  %v12 = vld [vmem:[%s0 + $0x8] sm:$0xff]
  %v13 = vmul.f32 %v11, 5.656854
  %v14 = vmul.f32 %v12, 5.656854
  %v15 = vld [vmem:[%s1] sm:$0xff]
  %v16 = vadd.f32 %v13, %v15
  %v17 = vadd.f32 %v14, %v15
  %vm18 = vcmask 261120
  %19 = vst.msk [vmem:[%s2] sm:$0xff] %vm18, %v16
  %20 = vst.msk [vmem:[%s2 + $0x8] sm:$0xff] %vm18, %v17
  // Predicated region
  $region10: #{transformer_forward.14} parent=0 // pred_check
    _
  $region11: #{transformer_forward.14} parent=0 // pred_check_branch
    %22 = sbr.rel (0) target = $region13
  $region12: #{transformer_forward.14} parent=0 // pred_region
    _
  $region13: #{transformer_forward.14} parent=0 // pred_fallthru
    _
  // Predicated region
  $region14: #{transformer_forward.14} parent=0 // pred_check
    _
  $region15: #{transformer_forward.14} parent=0 // pred_check_branch
    %24 = sbr.rel (0) target = $region17
  $region16: #{transformer_forward.14} parent=0 // pred_region
    _
  $region17: #{transformer_forward.14} parent=0 // pred_fallthru
    _

// kernel: transformer_forward.19
$region0: #{transformer_forward.19}
  #allocation0 [shape = 'u32[]', space=smem, size = 0x4, offset = 0x4, fixed_abs, tag = 'smem constant byte address 0x4 - core index']
  #allocation1 [shape = 'u32[72,128]{1,0:T(1,128)}', space=vmem, size = 0x9000, scoped, tag = 'internal scratch']
  %s0 = inlined_call_operand.vmem [shape: f32[16,32], index: 0, kind: input, shape index: {}]
  %s1 = inlined_call_operand.vmem [shape: f32[1,32], index: 1, kind: input, shape index: {}]
  %s2 = inlined_call_operand.vmem [shape: f32[1,32], index: 2, kind: input, shape index: {}]
  %s3 = inlined_call_operand.vmem [shape: f32[16,32], index: 3, kind: output, shape index: {}]
  %s4 = sld [smem:[#allocation0]]
  $region22: #{transformer_forward.19} parent=0
    _
  %s6 = ssub.s32 1, %s4
  %s7 = scalar_select 0, %s6, %s4
  // Predicated region
  $region2: #{transformer_forward.19} parent=0 // pred_check
    _
  $region3: #{transformer_forward.19} parent=0 // pred_check_branch
    %9 = sbr.rel (0) target = $region5
  $region4: #{transformer_forward.19} parent=0 // pred_region
    _
  $region5: #{transformer_forward.19} parent=0 // pred_fallthru
    _
  // Predicated region
  $region6: #{transformer_forward.19} parent=0 // pred_check
    _
  $region7: #{transformer_forward.19} parent=0 // pred_check_branch
    %11 = sbr.rel (0) target = $region9
  $region8: #{transformer_forward.19} parent=0 // pred_region
    _
  $region9: #{transformer_forward.19} parent=0 // pred_fallthru
    _
  // Predicated region
  $region10: #{transformer_forward.19} parent=0 // pred_check
    _
  $region11: #{transformer_forward.19} parent=0 // pred_check_branch
    %13 = sbr.rel (0) target = $region13
  $region12: #{transformer_forward.19} parent=0 // pred_region
    _
  $region13: #{transformer_forward.19} parent=0 // pred_fallthru
    _
  %v14 = vld [vmem:[%s0] sm:$0xff]
  %v15 = vld [vmem:[%s0 + $0x8] sm:$0xff]
  %v16 = vld [vmem:[%s1] sm:$0x1]
  %v17 = vld [vmem:[%s2] sm:$0x1]
  %vm18 = vcmask 261120
  %v19 = vsel %vm18, %v14, 0.0
  %20 = vadd.xlane.f32.xlu0 %v19
  %v21 = vpop.xlane.xlu0 %20
  %v22 = vsel %vm18, %v15, 0.0
  %23 = vadd.xlane.f32.xlu0 %v22
  %v24 = vpop.xlane.xlu0 %23
  %v25 = vrcp.pop 32.0
  %v26 = vmul.f32 32.0, %v25
  %v27 = vsub.f32 1.0, %v26
  %v28 = vmul.f32 %v25, %v27
  %v29 = vadd.f32 %v25, %v28
  %vm30 = vweird.f32 %v25
  %v31 = vsel %vm30, %v25, %v29
  %v32 = vmul.f32 %v21, %v31
  %v33 = vmul.f32 %v24, %v31
  %v34 = vsub.f32 %v14, %v32
  %v35 = vsub.f32 %v15, %v33
  %v36 = vmul.f32 %v34, %v34
  %v37 = vmul.f32 %v35, %v35
  %v38 = vsel %vm18, %v36, 0.0
  %39 = vadd.xlane.f32.xlu0 %v38
  %v40 = vpop.xlane.xlu0 %39
  %v41 = vsel %vm18, %v37, 0.0
  %42 = vadd.xlane.f32.xlu0 %v41
  %v43 = vpop.xlane.xlu0 %42
  %v44 = vmul.f32 %v40, %v31
  %v45 = vmul.f32 %v43, %v31
  %v46 = vadd.f32 %v44, 1e-05
  %v47 = vadd.f32 %v45, 1e-05
  %v48 = vrsqrt.pop %v46
  %v49 = vmul.f32 %v48, %v46
  %v50 = vmul.f32 %v49, %v48
  %v51 = vmul.f32 0.5, %v50
  %v52 = vsub.f32 1.5, %v51
  %v53 = vmul.f32 %v48, %v52
  %vm54 = vweird.f32 %v46
  %vm55 = vweird.f32 %v48
  %vm56 = vmor %vm54, %vm55
  %v57 = vsel %vm56, %v48, %v53
  %v58 = vrsqrt.pop %v47
  %v59 = vmul.f32 %v58, %v47
  %v60 = vmul.f32 %v59, %v58
  %v61 = vmul.f32 0.5, %v60
  %v62 = vsub.f32 1.5, %v61
  %v63 = vmul.f32 %v58, %v62
  %vm64 = vweird.f32 %v47
  %vm65 = vweird.f32 %v58
  %vm66 = vmor %vm64, %vm65
  %v67 = vsel %vm66, %v58, %v63
  %v68 = vmul.f32 %v34, %v57
  %v69 = vmul.f32 %v35, %v67
  %v71 = vperm.slane %v16, 0
  %v73 = vmul.f32 %v68, %v71
  %v74 = vmul.f32 %v69, %v71
  %v76 = vperm.slane %v17, 0
  %v78 = vadd.f32 %v73, %v76
  %v79 = vadd.f32 %v74, %v76
  %80 = vst.msk [vmem:[%s3] sm:$0xff] %vm18, %v78
  %81 = vst.msk [vmem:[%s3 + $0x8] sm:$0xff] %vm18, %v79
  // Predicated region
  $region14: #{transformer_forward.19} parent=0 // pred_check
    _
  $region15: #{transformer_forward.19} parent=0 // pred_check_branch
    %83 = sbr.rel (0) target = $region17
  $region16: #{transformer_forward.19} parent=0 // pred_region
    _
  $region17: #{transformer_forward.19} parent=0 // pred_fallthru
    _
  // Predicated region
  $region18: #{transformer_forward.19} parent=0 // pred_check
    _
  $region19: #{transformer_forward.19} parent=0 // pred_check_branch
    %85 = sbr.rel (0) target = $region21
  $region20: #{transformer_forward.19} parent=0 // pred_region
    _
  $region21: #{transformer_forward.19} parent=0 // pred_fallthru
    _

// kernel: transformer_forward.16
$region0: #{transformer_forward.16}
  #allocation0 [shape = 'u32[]', space=smem, size = 0x4, offset = 0x4, fixed_abs, tag = 'smem constant byte address 0x4 - core index']
  #allocation1 [shape = 'u32[72,128]{1,0:T(1,128)}', space=vmem, size = 0x9000, scoped, tag = 'internal scratch']
  %s0 = inlined_call_operand.vmem [shape: f32[16,32], index: 0, kind: input, shape index: {}]
  %s1 = inlined_call_operand.vmem [shape: bf16[32,64], index: 1, kind: input, shape index: {}]
  %s2 = inlined_call_operand.vmem [shape: f32[1,64], index: 2, kind: input, shape index: {}]
  %s3 = inlined_call_operand.vmem [shape: bf16[64,32], index: 3, kind: input, shape index: {}]
  %s4 = inlined_call_operand.vmem [shape: f32[1,32], index: 4, kind: input, shape index: {}]
  %s5 = inlined_call_operand.vmem [shape: f32[1,32], index: 5, kind: input, shape index: {}]
  %s6 = inlined_call_operand.vmem [shape: f32[1,32], index: 6, kind: input, shape index: {}]
  %s7 = inlined_call_operand.vmem [shape: f32[16,32], index: 7, kind: output, shape index: {}]
  %s8 = sld [smem:[#allocation0]]
  $region38: #{transformer_forward.16} parent=0
    _
  %s10 = ssub.s32 1, %s8
  %s11 = scalar_select 0, %s10, %s8
  // Predicated region
  $region2: #{transformer_forward.16} parent=0 // pred_check
    _
  $region3: #{transformer_forward.16} parent=0 // pred_check_branch
    %13 = sbr.rel (0) target = $region5
  $region4: #{transformer_forward.16} parent=0 // pred_region
    _
  $region5: #{transformer_forward.16} parent=0 // pred_fallthru
    _
  // Predicated region
  $region6: #{transformer_forward.16} parent=0 // pred_check
    _
  $region7: #{transformer_forward.16} parent=0 // pred_check_branch
    %15 = sbr.rel (0) target = $region9
  $region8: #{transformer_forward.16} parent=0 // pred_region
    _
  $region9: #{transformer_forward.16} parent=0 // pred_fallthru
    _
  // Predicated region
  $region10: #{transformer_forward.16} parent=0 // pred_check
    _
  $region11: #{transformer_forward.16} parent=0 // pred_check_branch
    %17 = sbr.rel (0) target = $region13
  $region12: #{transformer_forward.16} parent=0 // pred_region
    _
  $region13: #{transformer_forward.16} parent=0 // pred_fallthru
    _
  // Predicated region
  $region14: #{transformer_forward.16} parent=0 // pred_check
    _
  $region15: #{transformer_forward.16} parent=0 // pred_check_branch
    %19 = sbr.rel (0) target = $region17
  $region16: #{transformer_forward.16} parent=0 // pred_region
    _
  $region17: #{transformer_forward.16} parent=0 // pred_fallthru
    _
  // Predicated region
  $region18: #{transformer_forward.16} parent=0 // pred_check
    _
  $region19: #{transformer_forward.16} parent=0 // pred_check_branch
    %21 = sbr.rel (0) target = $region21
  $region20: #{transformer_forward.16} parent=0 // pred_region
    _
  $region21: #{transformer_forward.16} parent=0 // pred_fallthru
    _
  // Predicated region
  $region22: #{transformer_forward.16} parent=0 // pred_check
    _
  $region23: #{transformer_forward.16} parent=0 // pred_check_branch
    %23 = sbr.rel (0) target = $region25
  $region24: #{transformer_forward.16} parent=0 // pred_region
    _
  $region25: #{transformer_forward.16} parent=0 // pred_fallthru
    _
  // Predicated region
  $region26: #{transformer_forward.16} parent=0 // pred_check
    _
  $region27: #{transformer_forward.16} parent=0 // pred_check_branch
    %25 = sbr.rel (0) target = $region29
  $region28: #{transformer_forward.16} parent=0 // pred_region
    _
  $region29: #{transformer_forward.16} parent=0 // pred_fallthru
    _
  %v27 = vld [vmem:[%s0] sm:$0xff]
  %v28 = vld [vmem:[%s0 + $0x8] sm:$0xff]
  %v29 = vpack.c.bf16 %v28, %v27
  %v30 = vld [vmem:[%s1] sm:$0xf]
  %v31 = vld [vmem:[%s1 + $0x4] sm:$0xf]
  %v32 = vld [vmem:[%s1 + $0x8] sm:$0xf]
  %v33 = vld [vmem:[%s1 + $0xc] sm:$0xf]
  %v34 = vld [vmem:[%s2] sm:$0x1]
  %v36 = vperm.slane %v34, 0
  %v42 = vunpack.c.l.b16 %v30
  %v43 = vunpack.c.l.b16 %v31
  %v44 = vunpack.c.l.b16 %v32
  %v45 = vunpack.c.l.b16 %v33
  %v46 = vpack.c.b16 %v43, %v42
  %v47 = vpack.c.b16 %v45, %v44
  %vm50 = vcmask 261120
  %v52 = vsel %vm50, %v29, 0
  %54 = vmatpush.bf16.msra.mxu0 0
  %55 = vmatpush.bf16.msra.mxu0 0
  %56 = vmatpush.bf16.msra.mxu0 0
  %57 = vmatpush.bf16.msra.mxu0 0
  %58 = vmatpush.bf16.msra.mxu0 0
  %59 = vmatpush.bf16.msra.mxu0 0
  %60 = vmatpush.bf16.msra.mxu0 %v47
  %61 = vmatpush.bf16.msra.mxu0 %v46
  %62 = vmatmul.bf16.gmra.mxu0 %v52
  %v63 = vpop.f32.mrf.mxu0
  %v64 = vadd.f32 %v36, %v63
  %v65 = vpop.f32.mrf.mxu0
  %v66 = vadd.f32 %v36, %v65
  %67 = vdwg.mxu0
  %v68 = vmax.f32 %v64, 0.0
  %v69 = vmax.f32 %v66, 0.0
  %v70 = vpack.c.bf16 %v69, %v68
  %v71 = vld [vmem:[%s3] sm:$0xf]
  %v72 = vld [vmem:[%s3 + $0x4] sm:$0xf]
  %v73 = vld [vmem:[%s3 + $0x8] sm:$0xf]
  %v74 = vld [vmem:[%s3 + $0xc] sm:$0xf]
  %v75 = vld [vmem:[%s3 + $0x10] sm:$0xf]
  %v76 = vld [vmem:[%s3 + $0x14] sm:$0xf]
  %v77 = vld [vmem:[%s3 + $0x18] sm:$0xf]
  %v78 = vld [vmem:[%s3 + $0x1c] sm:$0xf]
  %v79 = vld [vmem:[%s4] sm:$0x1]
  %v81 = vperm.slane %v79, 0
  %v91 = vunpack.c.l.b16 %v71
  %v92 = vunpack.c.l.b16 %v72
  %v93 = vunpack.c.l.b16 %v73
  %v94 = vunpack.c.l.b16 %v74
  %v95 = vunpack.c.l.b16 %v75
  %v96 = vunpack.c.l.b16 %v76
  %v97 = vunpack.c.l.b16 %v77
  %v98 = vunpack.c.l.b16 %v78
  %v99 = vpack.c.b16 %v92, %v91
  %v100 = vpack.c.b16 %v94, %v93
  %v101 = vpack.c.b16 %v96, %v95
  %v102 = vpack.c.b16 %v98, %v97
  %vm107 = vcmask 523264
  %v109 = vsel %vm107, %v70, 0
  %111 = vmatpush.bf16.msra.mxu0 0
  %112 = vmatpush.bf16.msra.mxu0 0
  %113 = vmatpush.bf16.msra.mxu0 0
  %114 = vmatpush.bf16.msra.mxu0 0
  %115 = vmatpush.bf16.msra.mxu0 %v102
  %116 = vmatpush.bf16.msra.mxu0 %v101
  %117 = vmatpush.bf16.msra.mxu0 %v100
  %118 = vmatpush.bf16.msra.mxu0 %v99
  %119 = vmatmul.bf16.gmra.mxu0 %v109
  %v120 = vpop.f32.mrf.mxu0
  %v121 = vadd.f32 %v81, %v120
  %v122 = vpop.f32.mrf.mxu0
  %v123 = vadd.f32 %v81, %v122
  %124 = vdwg.mxu0
  %v125 = vadd.f32 %v27, %v121
  %v126 = vadd.f32 %v28, %v123
  %v127 = vld [vmem:[%s5] sm:$0x1]
  %v128 = vld [vmem:[%s6] sm:$0x1]
  %v129 = vsel %vm50, %v125, 0.0
  %130 = vadd.xlane.f32.xlu0 %v129
  %v131 = vpop.xlane.xlu0 %130
  %v132 = vsel %vm50, %v126, 0.0
  %133 = vadd.xlane.f32.xlu0 %v132
  %v134 = vpop.xlane.xlu0 %133
  %v135 = vrcp.pop 32.0
  %v136 = vmul.f32 32.0, %v135
  %v137 = vsub.f32 1.0, %v136
  %v138 = vmul.f32 %v135, %v137
  %v139 = vadd.f32 %v135, %v138
  %vm140 = vweird.f32 %v135
  %v141 = vsel %vm140, %v135, %v139
  %v142 = vmul.f32 %v131, %v141
  %v143 = vmul.f32 %v134, %v141
  %v144 = vsub.f32 %v125, %v142
  %v145 = vsub.f32 %v126, %v143
  %v146 = vmul.f32 %v144, %v144
  %v147 = vmul.f32 %v145, %v145
  %v148 = vsel %vm50, %v146, 0.0
  %149 = vadd.xlane.f32.xlu0 %v148
  %v150 = vpop.xlane.xlu0 %149
  %v151 = vsel %vm50, %v147, 0.0
  %152 = vadd.xlane.f32.xlu0 %v151
  %v153 = vpop.xlane.xlu0 %152
  %v154 = vmul.f32 %v150, %v141
  %v155 = vmul.f32 %v153, %v141
  %v156 = vadd.f32 %v154, 1e-05
  %v157 = vadd.f32 %v155, 1e-05
  %v158 = vrsqrt.pop %v156
  %v159 = vmul.f32 %v158, %v156
  %v160 = vmul.f32 %v159, %v158
  %v161 = vmul.f32 0.5, %v160
  %v162 = vsub.f32 1.5, %v161
  %v163 = vmul.f32 %v158, %v162
  %vm164 = vweird.f32 %v156
  %vm165 = vweird.f32 %v158
  %vm166 = vmor %vm164, %vm165
  %v167 = vsel %vm166, %v158, %v163
  %v168 = vrsqrt.pop %v157
  %v169 = vmul.f32 %v168, %v157
  %v170 = vmul.f32 %v169, %v168
  %v171 = vmul.f32 0.5, %v170
  %v172 = vsub.f32 1.5, %v171
  %v173 = vmul.f32 %v168, %v172
  %vm174 = vweird.f32 %v157
  %vm175 = vweird.f32 %v168
  %vm176 = vmor %vm174, %vm175
  %v177 = vsel %vm176, %v168, %v173
  %v178 = vmul.f32 %v144, %v167
  %v179 = vmul.f32 %v145, %v177
  %v181 = vperm.slane %v127, 0
  %v183 = vmul.f32 %v178, %v181
  %v184 = vmul.f32 %v179, %v181
  %v186 = vperm.slane %v128, 0
  %v188 = vadd.f32 %v183, %v186
  %v189 = vadd.f32 %v184, %v186
  %190 = vst.msk [vmem:[%s7] sm:$0xff] %vm50, %v188
  %191 = vst.msk [vmem:[%s7 + $0x8] sm:$0xff] %vm50, %v189
  // Predicated region
  $region30: #{transformer_forward.16} parent=0 // pred_check
    _
  $region31: #{transformer_forward.16} parent=0 // pred_check_branch
    %193 = sbr.rel (0) target = $region33
  $region32: #{transformer_forward.16} parent=0 // pred_region
    _
  $region33: #{transformer_forward.16} parent=0 // pred_fallthru
    _
  // Predicated region
  $region34: #{transformer_forward.16} parent=0 // pred_check
    _
  $region35: #{transformer_forward.16} parent=0 // pred_check_branch
    %195 = sbr.rel (0) target = $region37
  $region36: #{transformer_forward.16} parent=0 // pred_region
    _
  $region37: #{transformer_forward.16} parent=0 // pred_fallthru
    _

// kernel: transformer_forward.15
$region0: #{transformer_forward.15}
  #allocation0 [shape = 'u32[]', space=smem, size = 0x4, offset = 0x4, fixed_abs, tag = 'smem constant byte address 0x4 - core index']
  #allocation1 [shape = 'u32[72,128]{1,0:T(1,128)}', space=vmem, size = 0x9000, scoped, tag = 'internal scratch']
  %s0 = inlined_call_operand.vmem [shape: f32[2,8,32], index: 0, kind: input, shape index: {}, may-alias: {0,1}]
  %s1 = inlined_call_operand.vmem [shape: f32[2,8,32], index: 1, kind: input, shape index: {}, may-alias: {0,1}]
  %s2 = inlined_call_operand.vmem [shape: bf16[32,32], index: 2, kind: input, shape index: {}]
  %s3 = inlined_call_operand.vmem [shape: f32[1,32], index: 3, kind: input, shape index: {}]
  %s4 = inlined_call_operand.vmem [shape: bf16[32,64], index: 4, kind: input, shape index: {}]
  %s5 = inlined_call_operand.vmem [shape: f32[1,64], index: 5, kind: input, shape index: {}]
  %s6 = inlined_call_operand.vmem [shape: bf16[4,8,32], index: 6, kind: input, shape index: {}]
  %s7 = inlined_call_operand.vmem [shape: f32[1,32], index: 7, kind: input, shape index: {}]
  %s8 = inlined_call_operand.vmem [shape: f32[1,32], index: 8, kind: input, shape index: {}]
  %s9 = inlined_call_operand.vmem [shape: f32[1,32], index: 9, kind: input, shape index: {}]
  %s10 = inlined_call_operand.vmem [shape: f32[2,8,32], index: 10, kind: output, shape index: {}]
  %s11 = sld [smem:[#allocation0]]
  $region73: #{transformer_forward.15} parent=0
    _
  %s13 = ssub.s32 1, %s11
  %s14 = scalar_select 0, %s13, %s11
  loop: start=0, step=1, limit=4
  $region2: #{transformer_forward.15} parent=0 // loop_pre_header
    _
  $region3: #{transformer_forward.15} parent=0 // loop_header
    %s16 = sphi 0, %s20
    %p17 = scmp.ge.s32.totalorder %s16, 4
    %s26 = sphi 0, %s28
    %s29 = sphi 0, %s26
    %s30 = sphi 0, %s29
    %s46 = sphi 0, %s30
    %s52 = sphi 0, %s54
    %s55 = sphi 0, %s52
    %s56 = sphi 0, %s55
    %s72 = sphi 0, %s56
    %s76 = sphi 0, %s76
    %s78 = sphi 0, %s76
    %s79 = sphi 0, %s78
    %s93 = sphi 0, %s79
    %s97 = sphi 0, %s97
    %s99 = sphi 0, %s97
    %s100 = sphi 0, %s99
    %s114 = sphi 0, %s100
    %s118 = sphi 0, %s118
    %s120 = sphi 0, %s118
    %s121 = sphi 0, %s120
    %s135 = sphi 0, %s121
    %s139 = sphi 0, %s139
    %s141 = sphi 0, %s139
    %s142 = sphi 0, %s141
    %s156 = sphi 0, %s142
    %s160 = sphi 0, %s160
    %s162 = sphi 0, %s160
    %s163 = sphi 0, %s162
    %s177 = sphi 0, %s163
    %s181 = sphi 0, %s181
    %s183 = sphi 0, %s181
    %s184 = sphi 0, %s183
    %s198 = sphi 0, %s184
    %s202 = sphi 0, %s202
    %s204 = sphi 0, %s202
    %s205 = sphi 0, %s204
    %s219 = sphi 0, %s205
    %s223 = sphi 0, %s223
    %s225 = sphi 0, %s223
    %s226 = sphi 0, %s225
    %s240 = sphi 0, %s226
    %s246 = sphi 0, %s248
    %s249 = sphi 0, %s246
    %s250 = sphi 0, %s249
    %s266 = sphi 0, %s250
  $region4: #{transformer_forward.15} parent=0 // loop_header_branch
    %19 = sbr.rel (%p17) target = $region8
  $region5: #{transformer_forward.15} parent=0 // loop_body
    %s21 = ssub.s32 %s16, 1
    %s22 = ssub.s32 %s16, 2
    %s23 = sadd.s32 %s16, 1
    %s24 = ssub.s32 %s16, %s23
    %p25 = scmp.eq.s32.totalorder %s24, 0
    %s27 = sadd.s32 %s26, 1
    %s28 = scalar_select %p25, %s26, %s27
    %p31 = pneg %p25
    %p32 = scmp.eq.s32.totalorder %s16, 1
    %p33 = por %p31, %p32
    %p34 = scmp.ne.s32.totalorder %s26, %s29
    %p35 = scmp.eq.s32.totalorder %s16, 0
    %p36 = por %p34, %p35
    %p37 = scmp.ne.s32.totalorder %s26, %s29
    %p38 = scmp.eq.s32.totalorder %s21, 1
    %p39 = por %p37, %p38
    %p40 = scmp.ne.s32.totalorder %s29, %s30
    %p41 = scmp.eq.s32.totalorder %s21, 0
    %p42 = por %p40, %p41
    %p43 = scmp.ne.s32.totalorder %s29, %s30
    %p44 = scmp.eq.s32.totalorder %s22, 1
    %p45 = por %p43, %p44
    %p47 = scmp.ne.s32.totalorder %s30, %s46
    %p48 = scmp.eq.s32.totalorder %s22, 0
    %p49 = por %p47, %p48
    %s50 = ssub.s32 %s16, %s23
    %p51 = scmp.eq.s32.totalorder %s50, 0
    %s53 = sadd.s32 %s52, 1
    %s54 = scalar_select %p51, %s52, %s53
    %p57 = pneg %p51
    %p58 = scmp.eq.s32.totalorder %s16, 1
    %p59 = por %p57, %p58
    %p60 = scmp.ne.s32.totalorder %s52, %s55
    %p61 = scmp.eq.s32.totalorder %s16, 0
    %p62 = por %p60, %p61
    %p63 = scmp.ne.s32.totalorder %s52, %s55
    %p64 = scmp.eq.s32.totalorder %s21, 1
    %p65 = por %p63, %p64
    %p66 = scmp.ne.s32.totalorder %s55, %s56
    %p67 = scmp.eq.s32.totalorder %s21, 0
    %p68 = por %p66, %p67
    %p69 = scmp.ne.s32.totalorder %s55, %s56
    %p70 = scmp.eq.s32.totalorder %s22, 1
    %p71 = por %p69, %p70
    %p73 = scmp.ne.s32.totalorder %s56, %s72
    %p74 = scmp.eq.s32.totalorder %s22, 0
    %p75 = por %p73, %p74
    %s77 = sadd.s32 %s76, 1
    %p80 = scmp.eq.s32.totalorder %s16, 1
    %p81 = scmp.ne.s32.totalorder %s76, %s78
    %p82 = scmp.eq.s32.totalorder %s16, 0
    %p83 = por %p81, %p82
    %p84 = scmp.ne.s32.totalorder %s76, %s78
    %p85 = scmp.eq.s32.totalorder %s21, 1
    %p86 = por %p84, %p85
    %p87 = scmp.ne.s32.totalorder %s78, %s79
    %p88 = scmp.eq.s32.totalorder %s21, 0
    %p89 = por %p87, %p88
    %p90 = scmp.ne.s32.totalorder %s78, %s79
    %p91 = scmp.eq.s32.totalorder %s22, 1
    %p92 = por %p90, %p91
    %p94 = scmp.ne.s32.totalorder %s79, %s93
    %p95 = scmp.eq.s32.totalorder %s22, 0
    %p96 = por %p94, %p95
    %s98 = sadd.s32 %s97, 1
    %p101 = scmp.eq.s32.totalorder %s16, 1
    %p102 = scmp.ne.s32.totalorder %s97, %s99
    %p103 = scmp.eq.s32.totalorder %s16, 0
    %p104 = por %p102, %p103
    %p105 = scmp.ne.s32.totalorder %s97, %s99
    %p106 = scmp.eq.s32.totalorder %s21, 1
    %p107 = por %p105, %p106
    %p108 = scmp.ne.s32.totalorder %s99, %s100
    %p109 = scmp.eq.s32.totalorder %s21, 0
    %p110 = por %p108, %p109
    %p111 = scmp.ne.s32.totalorder %s99, %s100
    %p112 = scmp.eq.s32.totalorder %s22, 1
    %p113 = por %p111, %p112
    %p115 = scmp.ne.s32.totalorder %s100, %s114
    %p116 = scmp.eq.s32.totalorder %s22, 0
    %p117 = por %p115, %p116
    %s119 = sadd.s32 %s118, 1
    %p122 = scmp.eq.s32.totalorder %s16, 1
    %p123 = scmp.ne.s32.totalorder %s118, %s120
    %p124 = scmp.eq.s32.totalorder %s16, 0
    %p125 = por %p123, %p124
    %p126 = scmp.ne.s32.totalorder %s118, %s120
    %p127 = scmp.eq.s32.totalorder %s21, 1
    %p128 = por %p126, %p127
    %p129 = scmp.ne.s32.totalorder %s120, %s121
    %p130 = scmp.eq.s32.totalorder %s21, 0
    %p131 = por %p129, %p130
    %p132 = scmp.ne.s32.totalorder %s120, %s121
    %p133 = scmp.eq.s32.totalorder %s22, 1
    %p134 = por %p132, %p133
    %p136 = scmp.ne.s32.totalorder %s121, %s135
    %p137 = scmp.eq.s32.totalorder %s22, 0
    %p138 = por %p136, %p137
    %s140 = sadd.s32 %s139, 1
    %p143 = scmp.eq.s32.totalorder %s16, 1
    %p144 = scmp.ne.s32.totalorder %s139, %s141
    %p145 = scmp.eq.s32.totalorder %s16, 0
    %p146 = por %p144, %p145
    %p147 = scmp.ne.s32.totalorder %s139, %s141
    %p148 = scmp.eq.s32.totalorder %s21, 1
    %p149 = por %p147, %p148
    %p150 = scmp.ne.s32.totalorder %s141, %s142
    %p151 = scmp.eq.s32.totalorder %s21, 0
    %p152 = por %p150, %p151
    %p153 = scmp.ne.s32.totalorder %s141, %s142
    %p154 = scmp.eq.s32.totalorder %s22, 1
    %p155 = por %p153, %p154
    %p157 = scmp.ne.s32.totalorder %s142, %s156
    %p158 = scmp.eq.s32.totalorder %s22, 0
    %p159 = por %p157, %p158
    %s161 = sadd.s32 %s160, 1
    %p164 = scmp.eq.s32.totalorder %s16, 1
    %p165 = scmp.ne.s32.totalorder %s160, %s162
    %p166 = scmp.eq.s32.totalorder %s16, 0
    %p167 = por %p165, %p166
    %p168 = scmp.ne.s32.totalorder %s160, %s162
    %p169 = scmp.eq.s32.totalorder %s21, 1
    %p170 = por %p168, %p169
    %p171 = scmp.ne.s32.totalorder %s162, %s163
    %p172 = scmp.eq.s32.totalorder %s21, 0
    %p173 = por %p171, %p172
    %p174 = scmp.ne.s32.totalorder %s162, %s163
    %p175 = scmp.eq.s32.totalorder %s22, 1
    %p176 = por %p174, %p175
    %p178 = scmp.ne.s32.totalorder %s163, %s177
    %p179 = scmp.eq.s32.totalorder %s22, 0
    %p180 = por %p178, %p179
    %s182 = sadd.s32 %s181, 1
    %p185 = scmp.eq.s32.totalorder %s16, 1
    %p186 = scmp.ne.s32.totalorder %s181, %s183
    %p187 = scmp.eq.s32.totalorder %s16, 0
    %p188 = por %p186, %p187
    %p189 = scmp.ne.s32.totalorder %s181, %s183
    %p190 = scmp.eq.s32.totalorder %s21, 1
    %p191 = por %p189, %p190
    %p192 = scmp.ne.s32.totalorder %s183, %s184
    %p193 = scmp.eq.s32.totalorder %s21, 0
    %p194 = por %p192, %p193
    %p195 = scmp.ne.s32.totalorder %s183, %s184
    %p196 = scmp.eq.s32.totalorder %s22, 1
    %p197 = por %p195, %p196
    %p199 = scmp.ne.s32.totalorder %s184, %s198
    %p200 = scmp.eq.s32.totalorder %s22, 0
    %p201 = por %p199, %p200
    %s203 = sadd.s32 %s202, 1
    %p206 = scmp.eq.s32.totalorder %s16, 1
    %p207 = scmp.ne.s32.totalorder %s202, %s204
    %p208 = scmp.eq.s32.totalorder %s16, 0
    %p209 = por %p207, %p208
    %p210 = scmp.ne.s32.totalorder %s202, %s204
    %p211 = scmp.eq.s32.totalorder %s21, 1
    %p212 = por %p210, %p211
    %p213 = scmp.ne.s32.totalorder %s204, %s205
    %p214 = scmp.eq.s32.totalorder %s21, 0
    %p215 = por %p213, %p214
    %p216 = scmp.ne.s32.totalorder %s204, %s205
    %p217 = scmp.eq.s32.totalorder %s22, 1
    %p218 = por %p216, %p217
    %p220 = scmp.ne.s32.totalorder %s205, %s219
    %p221 = scmp.eq.s32.totalorder %s22, 0
    %p222 = por %p220, %p221
    %s224 = sadd.s32 %s223, 1
    %p227 = scmp.eq.s32.totalorder %s16, 1
    %p228 = scmp.ne.s32.totalorder %s223, %s225
    %p229 = scmp.eq.s32.totalorder %s16, 0
    %p230 = por %p228, %p229
    %p231 = scmp.ne.s32.totalorder %s223, %s225
    %p232 = scmp.eq.s32.totalorder %s21, 1
    %p233 = por %p231, %p232
    %p234 = scmp.ne.s32.totalorder %s225, %s226
    %p235 = scmp.eq.s32.totalorder %s21, 0
    %p236 = por %p234, %p235
    %p237 = scmp.ne.s32.totalorder %s225, %s226
    %p238 = scmp.eq.s32.totalorder %s22, 1
    %p239 = por %p237, %p238
    %p241 = scmp.ne.s32.totalorder %s226, %s240
    %p242 = scmp.eq.s32.totalorder %s22, 0
    %p243 = por %p241, %p242
    %s244 = ssub.s32 %s16, %s23
    %p245 = scmp.eq.s32.totalorder %s244, 0
    %s247 = sadd.s32 %s246, 1
    %s248 = scalar_select %p245, %s246, %s247
    %p251 = pneg %p245
    %p252 = scmp.eq.s32.totalorder %s16, 1
    %p253 = por %p251, %p252
    %p254 = scmp.ne.s32.totalorder %s246, %s249
    %p255 = scmp.eq.s32.totalorder %s16, 0
    %p256 = por %p254, %p255
    %p257 = scmp.ne.s32.totalorder %s246, %s249
    %p258 = scmp.eq.s32.totalorder %s21, 1
    %p259 = por %p257, %p258
    %p260 = scmp.ne.s32.totalorder %s249, %s250
    %p261 = scmp.eq.s32.totalorder %s21, 0
    %p262 = por %p260, %p261
    %p263 = scmp.ne.s32.totalorder %s249, %s250
    %p264 = scmp.eq.s32.totalorder %s22, 1
    %p265 = por %p263, %p264
    %p267 = scmp.ne.s32.totalorder %s250, %s266
    %p268 = scmp.eq.s32.totalorder %s22, 0
    %p269 = por %p267, %p268
    %p270 = scmp.le.s32.totalorder 1, %s16
    %p271 = scmp.lt.s32.totalorder %s16, 3
    %p272 = pnand %p270, %p271
    %p273 = pneg %p272
    // Predicated region
    $region9: #{transformer_forward.15} parent=5 // pred_check
      _
    $region10: #{transformer_forward.15} parent=5 // pred_check_branch
      %275 = sbr.rel (%p272) target = $region12
    $region11: #{transformer_forward.15} parent=5 // pred_region
      %s276 = ssub.s32 %s16, 1
      // Predicated region
      $region13: #{transformer_forward.15} parent=11 // pred_check
        %p277 = pneg %p89
      $region14: #{transformer_forward.15} parent=11 // pred_check_branch
        %279 = sbr.rel (%p277) target = $region16
      $region15: #{transformer_forward.15} parent=11 // pred_region
        _
      $region16: #{transformer_forward.15} parent=11 // pred_fallthru
        _
      // Predicated region
      $region17: #{transformer_forward.15} parent=11 // pred_check
        %p280 = pneg %p110
      $region18: #{transformer_forward.15} parent=11 // pred_check_branch
        %282 = sbr.rel (%p280) target = $region20
      $region19: #{transformer_forward.15} parent=11 // pred_region
        _
      $region20: #{transformer_forward.15} parent=11 // pred_fallthru
        _
      // Predicated region
      $region21: #{transformer_forward.15} parent=11 // pred_check
        %p283 = pneg %p131
      $region22: #{transformer_forward.15} parent=11 // pred_check_branch
        %285 = sbr.rel (%p283) target = $region24
      $region23: #{transformer_forward.15} parent=11 // pred_region
        _
      $region24: #{transformer_forward.15} parent=11 // pred_fallthru
        _
      // Predicated region
      $region25: #{transformer_forward.15} parent=11 // pred_check
        %p286 = pneg %p152
      $region26: #{transformer_forward.15} parent=11 // pred_check_branch
        %288 = sbr.rel (%p286) target = $region28
      $region27: #{transformer_forward.15} parent=11 // pred_region
        _
      $region28: #{transformer_forward.15} parent=11 // pred_fallthru
        _
      // Predicated region
      $region29: #{transformer_forward.15} parent=11 // pred_check
        %p289 = pneg %p173
      $region30: #{transformer_forward.15} parent=11 // pred_check_branch
        %291 = sbr.rel (%p289) target = $region32
      $region31: #{transformer_forward.15} parent=11 // pred_region
        _
      $region32: #{transformer_forward.15} parent=11 // pred_fallthru
        _
      // Predicated region
      $region33: #{transformer_forward.15} parent=11 // pred_check
        %p292 = pneg %p194
      $region34: #{transformer_forward.15} parent=11 // pred_check_branch
        %294 = sbr.rel (%p292) target = $region36
      $region35: #{transformer_forward.15} parent=11 // pred_region
        _
      $region36: #{transformer_forward.15} parent=11 // pred_fallthru
        _
      // Predicated region
      $region37: #{transformer_forward.15} parent=11 // pred_check
        %p295 = pneg %p215
      $region38: #{transformer_forward.15} parent=11 // pred_check_branch
        %297 = sbr.rel (%p295) target = $region40
      $region39: #{transformer_forward.15} parent=11 // pred_region
        _
      $region40: #{transformer_forward.15} parent=11 // pred_fallthru
        _
      // Predicated region
      $region41: #{transformer_forward.15} parent=11 // pred_check
        %p298 = pneg %p236
      $region42: #{transformer_forward.15} parent=11 // pred_check_branch
        %300 = sbr.rel (%p298) target = $region44
      $region43: #{transformer_forward.15} parent=11 // pred_region
        _
      $region44: #{transformer_forward.15} parent=11 // pred_fallthru
        _
    $region12: #{transformer_forward.15} parent=5 // pred_fallthru
      _
    %p301 = scmp.lt.s32.totalorder %s16, 2
    // Predicated region
    $region45: #{transformer_forward.15} parent=5 // pred_check
      %p302 = pneg %p301
    $region46: #{transformer_forward.15} parent=5 // pred_check_branch
      %304 = sbr.rel (%p302) target = $region48
    $region47: #{transformer_forward.15} parent=5 // pred_region
      // Predicated region
      $region49: #{transformer_forward.15} parent=47 // pred_check
        %p305 = pneg %p36
      $region50: #{transformer_forward.15} parent=47 // pred_check_branch
        %307 = sbr.rel (%p305) target = $region52
      $region51: #{transformer_forward.15} parent=47 // pred_region
        %p308 = scmp.lt.s32.totalorder %s16, 1
        %s309 = scalar_select %p308, %s16, 1
        %s310 = smul.addr %s309, 8
        %s311 = scalar_lea.vmem %s0, %s310
      $region52: #{transformer_forward.15} parent=47 // pred_fallthru
        _
      // Predicated region
      $region53: #{transformer_forward.15} parent=47 // pred_check
        %p312 = pneg %p62
      $region54: #{transformer_forward.15} parent=47 // pred_check_branch
        %314 = sbr.rel (%p312) target = $region56
      $region55: #{transformer_forward.15} parent=47 // pred_region
        %p315 = scmp.lt.s32.totalorder %s16, 1
        %s316 = scalar_select %p315, %s16, 1
        %s317 = smul.addr %s316, 8
        %s318 = scalar_lea.vmem %s1, %s317
      $region56: #{transformer_forward.15} parent=47 // pred_fallthru
        _
    $region48: #{transformer_forward.15} parent=5 // pred_fallthru
      _
    %p319 = scmp.le.s32.totalorder 1, %s16
    %p320 = scmp.lt.s32.totalorder %s16, 3
    %p321 = pnand %p319, %p320
    %p322 = pneg %p321
    // Predicated region
    $region57: #{transformer_forward.15} parent=5 // pred_check
      _
    $region58: #{transformer_forward.15} parent=5 // pred_check_branch
      %324 = sbr.rel (%p321) target = $region60
    $region59: #{transformer_forward.15} parent=5 // pred_region
      %s325 = ssub.s32 %s16, 1
      %p326 = scmp.lt.s32.totalorder %s21, 1
      %s327 = scalar_select %p326, %s21, 1
      %s328 = smul.addr %s327, 8
      %s329 = scalar_lea.vmem %s0, %s328
      %p330 = pneg %p42
      %p331 = pneg %p39
      %p332 = scmp.lt.s32.totalorder %s21, 1
      %s333 = scalar_select %p332, %s21, 1
      %s334 = smul.addr %s333, 8
      %s335 = scalar_lea.vmem %s1, %s334
      %p336 = pneg %p68
      %p337 = pneg %p65
      %p338 = pneg %p89
      %p339 = pneg %p86
      %p340 = pneg %p110
      %p341 = pneg %p107
      %p342 = pneg %p131
      %p343 = pneg %p128
      %p344 = pneg %p152
      %p345 = pneg %p149
      %p346 = pneg %p173
      %p347 = pneg %p170
      %p348 = pneg %p194
      %p349 = pneg %p191
      %p350 = pneg %p215
      %p351 = pneg %p212
      %p352 = pneg %p236
      %p353 = pneg %p233
      %p354 = pneg %p262
      %p355 = pneg %p259
      %p356 = scmp.lt.s32.totalorder %s21, 1
      %s357 = scalar_select %p356, %s21, 1
      %s358 = smul.addr %s357, 8
      %s359 = scalar_lea.vmem %s10, %s358
      %p360 = scmp.lt.s32.totalorder %s21, 1
      %s361 = scalar_select %p360, %s21, 1
      %s362 = smul.addr %s361, 8
      %s363 = scalar_lea.vmem %s0, %s362
      %p364 = scmp.lt.s32.totalorder %s21, 1
      %s365 = scalar_select %p364, %s21, 1
      %s366 = smul.addr %s365, 8
      %s367 = scalar_lea.vmem %s1, %s366
      %p368 = scmp.lt.s32.totalorder %s21, 1
      %s369 = scalar_select %p368, %s21, 1
      %s370 = smul.addr %s369, 8
      %s371 = scalar_lea.vmem %s10, %s370
      %v373 = vld [vmem:[%s363] sm:$0xff]
      %v374 = vld [vmem:[%s367] sm:$0xff]
      %v375 = vpack.c.bf16 %v373, %v373
      %v376 = vld [vmem:[%s2] sm:$0xf]
      %v377 = vld [vmem:[%s2 + $0x4] sm:$0xf]
      %v378 = vld [vmem:[%s2 + $0x8] sm:$0xf]
      %v379 = vld [vmem:[%s2 + $0xc] sm:$0xf]
      %v380 = vld [vmem:[%s3] sm:$0x1]
      %v382 = vperm.slane %v380, 0
      %v388 = vunpack.c.l.b16 %v376
      %v389 = vunpack.c.l.b16 %v377
      %v390 = vunpack.c.l.b16 %v378
      %v391 = vunpack.c.l.b16 %v379
      %v392 = vpack.c.b16 %v389, %v388
      %v393 = vpack.c.b16 %v391, %v390
      %vm396 = vcmask 261120
      %v398 = vsel %vm396, %v375, 0
      %400 = vmatpush.bf16.msra.mxu0 0
      %401 = vmatpush.bf16.msra.mxu0 0
      %402 = vmatpush.bf16.msra.mxu0 0
      %403 = vmatpush.bf16.msra.mxu0 0
      %404 = vmatpush.bf16.msra.mxu0 0
      %405 = vmatpush.bf16.msra.mxu0 0
      %406 = vmatpush.bf16.msra.mxu0 %v393
      %407 = vmatpush.bf16.msra.mxu0 %v392
      %408 = vmatmul.bf16.gmra.mxu0 %v398
      %v409 = vpop.f32.mrf.mxu0
      %v410 = vadd.f32 %v382, %v409
      %v411 = vpop.f32.mrf.mxu0
      %412 = vdwg.mxu0
      %v413 = vpack.c.bf16 %v374, %v374
      %v414 = vld [vmem:[%s4] sm:$0xf]
      %v415 = vld [vmem:[%s4 + $0x4] sm:$0xf]
      %v416 = vld [vmem:[%s4 + $0x8] sm:$0xf]
      %v417 = vld [vmem:[%s4 + $0xc] sm:$0xf]
      %v418 = vld [vmem:[%s5] sm:$0x1]
      %v420 = vperm.slane %v418, 0
      %v426 = vunpack.c.l.b16 %v414
      %v427 = vunpack.c.l.b16 %v415
      %v428 = vunpack.c.l.b16 %v416
      %v429 = vunpack.c.l.b16 %v417
      %v430 = vpack.c.b16 %v427, %v426
      %v431 = vpack.c.b16 %v429, %v428
      %v435 = vsel %vm396, %v413, 0
      %437 = vmatpush.bf16.msra.mxu0 0
      %438 = vmatpush.bf16.msra.mxu0 0
      %439 = vmatpush.bf16.msra.mxu0 0
      %440 = vmatpush.bf16.msra.mxu0 0
      %441 = vmatpush.bf16.msra.mxu0 0
      %442 = vmatpush.bf16.msra.mxu0 0
      %443 = vmatpush.bf16.msra.mxu0 %v431
      %444 = vmatpush.bf16.msra.mxu0 %v430
      %445 = vmatmul.bf16.gmra.mxu0 %v435
      %v446 = vpop.f32.mrf.mxu0
      %v447 = vadd.f32 %v420, %v446
      %v448 = vpop.f32.mrf.mxu0
      %449 = vdwg.mxu0
      %v450 = vmul.f32 %v410, 0.35355338
      %v451 = vpack.c.bf16 %v450, %v450
      %v452 = vpack.c.bf16 %v447, %v447
      %vm453 = vcmask 64512
      %v455 = vsel %vm453, %v451, 0
      %v458 = vsel %vm453, %v452, 0
      %460 = vmatpush.bf16.xpose.msra.mxu0 0
      %461 = vmatpush.bf16.xpose.msra.mxu0 0
      %462 = vmatpush.bf16.xpose.msra.mxu0 0
      %463 = vmatpush.bf16.xpose.msra.mxu0 0
      %464 = vmatpush.bf16.xpose.msra.mxu0 0
      %465 = vmatpush.bf16.xpose.msra.mxu0 0
      %466 = vmatpush.bf16.xpose.msra.mxu0 0
      %467 = vmatpush.bf16.xpose.msra.mxu0 %v458
      %468 = vmatmul.bf16.gmra.mxu0 %v455
      %v469 = vpop.f32.mrf.mxu0
      %v470 = vadd.f32 0.0, %v469
      %v471 = vpop.f32.mrf.mxu0
      %472 = vdwg.mxu0
      %v473 = vsel %vm453, %v470, -inf
      %474 = vmax.xlane.f32.xlu0 %v473
      %v475 = vpop.xlane.xlu0 %474
      %v476 = vsub.f32 %v470, %v475
      %v477 = vmul.f32 %v476, 1.442695
      %v478 = vpow.pop %v477
      %v479 = vsel %vm453, %v478, 0.0
      %480 = vadd.xlane.f32.xlu0 %v479
      %v481 = vpop.xlane.xlu0 %480
      %v482 = vrcp.pop %v481
      %v483 = vmul.f32 %v478, %v482
      %v484 = vpack.c.bf16 %v483, %v483
      %486 = vrot.lane.b32.xlu0 %v452, 96
      %v487 = vpop.permute.xlu0 %486
      %v489 = vsel %vm453, %v484, 0
      %vm491 = vcmask 1043456
      %v493 = vsel %vm491, %v487, 0
      %495 = vmatpush.bf16.msra.mxu0 0
      %496 = vmatpush.bf16.msra.mxu0 0
      %497 = vmatpush.bf16.msra.mxu0 0
      %498 = vmatpush.bf16.msra.mxu0 0
      %499 = vmatpush.bf16.msra.mxu0 0
      %500 = vmatpush.bf16.msra.mxu0 0
      %501 = vmatpush.bf16.msra.mxu0 0
      %502 = vmatpush.bf16.msra.mxu0 %v493
      %503 = vmatmul.bf16.gmra.mxu0 %v489
      %v504 = vpop.f32.mrf.mxu0
      %v505 = vadd.f32 0.0, %v504
      %v506 = vpop.f32.mrf.mxu0
      %507 = vdwg.mxu0
      %v508 = vpack.c.bf16 %v505, %v505
      %v509 = vld [vmem:[%s6] sm:$0xf]
      %511 = vrot.lane.b32.xlu0 %v451, 120
      %v512 = vpop.permute.xlu0 %511
      %513 = vrot.lane.b32.xlu0 %v452, 120
      %v514 = vpop.permute.xlu0 %513
      %v516 = vsel %vm453, %v512, 0
      %v519 = vsel %vm453, %v514, 0
      %521 = vmatpush.bf16.xpose.msra.mxu0 0
      %522 = vmatpush.bf16.xpose.msra.mxu0 0
      %523 = vmatpush.bf16.xpose.msra.mxu0 0
      %524 = vmatpush.bf16.xpose.msra.mxu0 0
      %525 = vmatpush.bf16.xpose.msra.mxu0 0
      %526 = vmatpush.bf16.xpose.msra.mxu0 0
      %527 = vmatpush.bf16.xpose.msra.mxu0 0
      %528 = vmatpush.bf16.xpose.msra.mxu0 %v519
      %529 = vmatmul.bf16.gmra.mxu0 %v516
      %v530 = vpop.f32.mrf.mxu0
      %v531 = vadd.f32 0.0, %v530
      %v532 = vpop.f32.mrf.mxu0
      %533 = vdwg.mxu0
      %v534 = vsel %vm453, %v531, -inf
      %535 = vmax.xlane.f32.xlu0 %v534
      %v536 = vpop.xlane.xlu0 %535
      %v537 = vsub.f32 %v531, %v536
      %v538 = vmul.f32 %v537, 1.442695
      %v539 = vpow.pop %v538
      %v540 = vsel %vm453, %v539, 0.0
      %541 = vadd.xlane.f32.xlu0 %v540
      %v542 = vpop.xlane.xlu0 %541
      %v543 = vrcp.pop %v542
      %v544 = vmul.f32 %v539, %v543
      %v545 = vpack.c.bf16 %v544, %v544
      %546 = vrot.lane.b32.xlu0 %v452, 88
      %v547 = vpop.permute.xlu0 %546
      %v549 = vsel %vm453, %v545, 0
      %v552 = vsel %vm491, %v547, 0
      %554 = vmatpush.bf16.msra.mxu0 0
      %555 = vmatpush.bf16.msra.mxu0 0
      %556 = vmatpush.bf16.msra.mxu0 0
      %557 = vmatpush.bf16.msra.mxu0 0
      %558 = vmatpush.bf16.msra.mxu0 0
      %559 = vmatpush.bf16.msra.mxu0 0
      %560 = vmatpush.bf16.msra.mxu0 0
      %561 = vmatpush.bf16.msra.mxu0 %v552
      %562 = vmatmul.bf16.gmra.mxu0 %v549
      %v563 = vpop.f32.mrf.mxu0
      %v564 = vadd.f32 0.0, %v563
      %v565 = vpop.f32.mrf.mxu0
      %566 = vdwg.mxu0
      %v567 = vpack.c.bf16 %v564, %v564
      %s568 = scalar_lea.vmem %s6, 4
      %v569 = vld [vmem:[%s568] sm:$0xf]
      %v571 = vsel %vm453, %v567, 0
      %v574 = vsel %vm491, %v569, 0
      %576 = vmatpush.bf16.msra.mxu0 0
      %577 = vmatpush.bf16.msra.mxu0 0
      %578 = vmatpush.bf16.msra.mxu0 0
      %579 = vmatpush.bf16.msra.mxu0 0
      %580 = vmatpush.bf16.msra.mxu0 0
      %581 = vmatpush.bf16.msra.mxu0 0
      %582 = vmatpush.bf16.msra.mxu0 0
      %583 = vmatpush.bf16.msra.mxu0 %v574
      %584 = vmatmul.bf16.gmra.mxu0 %v571
      %v585 = vpop.f32.mrf.mxu0
      %v586 = vadd.f32 0.0, %v585
      %v587 = vpop.f32.mrf.mxu0
      %588 = vdwg.mxu0
      %v590 = vsel %vm453, %v508, 0
      %v593 = vsel %vm491, %v509, 0
      %595 = vmatpush.bf16.msra.mxu0 0
      %596 = vmatpush.bf16.msra.mxu0 0
      %597 = vmatpush.bf16.msra.mxu0 0
      %598 = vmatpush.bf16.msra.mxu0 0
      %599 = vmatpush.bf16.msra.mxu0 0
      %600 = vmatpush.bf16.msra.mxu0 0
      %601 = vmatpush.bf16.msra.mxu0 0
      %602 = vmatpush.bf16.msra.mxu0 %v593
      %603 = vmatmul.bf16.gmra.mxu0 %v590
      %v604 = vpop.f32.mrf.mxu0
      %v605 = vadd.f32 %v586, %v604
      %v606 = vpop.f32.mrf.mxu0
      %607 = vdwg.mxu0
      %608 = vrot.lane.b32.xlu0 %v451, 112
      %v609 = vpop.permute.xlu0 %608
      %610 = vrot.lane.b32.xlu0 %v452, 112
      %v611 = vpop.permute.xlu0 %610
      %v613 = vsel %vm453, %v609, 0
      %v616 = vsel %vm453, %v611, 0
      %618 = vmatpush.bf16.xpose.msra.mxu0 0
      %619 = vmatpush.bf16.xpose.msra.mxu0 0
      %620 = vmatpush.bf16.xpose.msra.mxu0 0
      %621 = vmatpush.bf16.xpose.msra.mxu0 0
      %622 = vmatpush.bf16.xpose.msra.mxu0 0
      %623 = vmatpush.bf16.xpose.msra.mxu0 0
      %624 = vmatpush.bf16.xpose.msra.mxu0 0
      %625 = vmatpush.bf16.xpose.msra.mxu0 %v616
      %626 = vmatmul.bf16.gmra.mxu0 %v613
      %v627 = vpop.f32.mrf.mxu0
      %v628 = vadd.f32 0.0, %v627
      %v629 = vpop.f32.mrf.mxu0
      %630 = vdwg.mxu0
      %v631 = vsel %vm453, %v628, -inf
      %632 = vmax.xlane.f32.xlu0 %v631
      %v633 = vpop.xlane.xlu0 %632
      %v634 = vsub.f32 %v628, %v633
      %v635 = vmul.f32 %v634, 1.442695
      %v636 = vpow.pop %v635
      %v637 = vsel %vm453, %v636, 0.0
      %638 = vadd.xlane.f32.xlu0 %v637
      %v639 = vpop.xlane.xlu0 %638
      %v640 = vrcp.pop %v639
      %v641 = vmul.f32 %v636, %v640
      %v642 = vpack.c.bf16 %v641, %v641
      %643 = vrot.lane.b32.xlu0 %v452, 80
      %v644 = vpop.permute.xlu0 %643
      %v646 = vsel %vm453, %v642, 0
      %v649 = vsel %vm491, %v644, 0
      %651 = vmatpush.bf16.msra.mxu0 0
      %652 = vmatpush.bf16.msra.mxu0 0
      %653 = vmatpush.bf16.msra.mxu0 0
      %654 = vmatpush.bf16.msra.mxu0 0
      %655 = vmatpush.bf16.msra.mxu0 0
      %656 = vmatpush.bf16.msra.mxu0 0
      %657 = vmatpush.bf16.msra.mxu0 0
      %658 = vmatpush.bf16.msra.mxu0 %v649
      %659 = vmatmul.bf16.gmra.mxu0 %v646
      %v660 = vpop.f32.mrf.mxu0
      %v661 = vadd.f32 0.0, %v660
      %v662 = vpop.f32.mrf.mxu0
      %663 = vdwg.mxu0
      %v664 = vpack.c.bf16 %v661, %v661
      %s665 = scalar_lea.vmem %s6, 8
      %v666 = vld [vmem:[%s665] sm:$0xf]
      %v668 = vsel %vm453, %v664, 0
      %v671 = vsel %vm491, %v666, 0
      %673 = vmatpush.bf16.msra.mxu0 0
      %674 = vmatpush.bf16.msra.mxu0 0
      %675 = vmatpush.bf16.msra.mxu0 0
      %676 = vmatpush.bf16.msra.mxu0 0
      %677 = vmatpush.bf16.msra.mxu0 0
      %678 = vmatpush.bf16.msra.mxu0 0
      %679 = vmatpush.bf16.msra.mxu0 0
      %680 = vmatpush.bf16.msra.mxu0 %v671
      %681 = vmatmul.bf16.gmra.mxu0 %v668
      %v682 = vpop.f32.mrf.mxu0
      %v683 = vadd.f32 0.0, %v682
      %v684 = vpop.f32.mrf.mxu0
      %685 = vdwg.mxu0
      %v686 = vadd.f32 %v605, %v683
      %687 = vrot.lane.b32.xlu0 %v451, 104
      %v688 = vpop.permute.xlu0 %687
      %689 = vrot.lane.b32.xlu0 %v452, 104
      %v690 = vpop.permute.xlu0 %689
      %v692 = vsel %vm453, %v688, 0
      %v695 = vsel %vm453, %v690, 0
      %697 = vmatpush.bf16.xpose.msra.mxu0 0
      %698 = vmatpush.bf16.xpose.msra.mxu0 0
      %699 = vmatpush.bf16.xpose.msra.mxu0 0
      %700 = vmatpush.bf16.xpose.msra.mxu0 0
      %701 = vmatpush.bf16.xpose.msra.mxu0 0
      %702 = vmatpush.bf16.xpose.msra.mxu0 0
      %703 = vmatpush.bf16.xpose.msra.mxu0 0
      %704 = vmatpush.bf16.xpose.msra.mxu0 %v695
      %705 = vmatmul.bf16.gmra.mxu0 %v692
      %v706 = vpop.f32.mrf.mxu0
      %v707 = vadd.f32 0.0, %v706
      %v708 = vpop.f32.mrf.mxu0
      %709 = vdwg.mxu0
      %v710 = vsel %vm453, %v707, -inf
      %711 = vmax.xlane.f32.xlu0 %v710
      %v712 = vpop.xlane.xlu0 %711
      %v713 = vsub.f32 %v707, %v712
      %v714 = vmul.f32 %v713, 1.442695
      %v715 = vpow.pop %v714
      %v716 = vsel %vm453, %v715, 0.0
      %717 = vadd.xlane.f32.xlu0 %v716
      %v718 = vpop.xlane.xlu0 %717
      %v719 = vrcp.pop %v718
      %v720 = vmul.f32 %v715, %v719
      %v721 = vpack.c.bf16 %v720, %v720
      %722 = vrot.lane.b32.xlu0 %v452, 72
      %v723 = vpop.permute.xlu0 %722
      %v725 = vsel %vm453, %v721, 0
      %v728 = vsel %vm491, %v723, 0
      %730 = vmatpush.bf16.msra.mxu0 0
      %731 = vmatpush.bf16.msra.mxu0 0
      %732 = vmatpush.bf16.msra.mxu0 0
      %733 = vmatpush.bf16.msra.mxu0 0
      %734 = vmatpush.bf16.msra.mxu0 0
      %735 = vmatpush.bf16.msra.mxu0 0
      %736 = vmatpush.bf16.msra.mxu0 0
      %737 = vmatpush.bf16.msra.mxu0 %v728
      %738 = vmatmul.bf16.gmra.mxu0 %v725
      %v739 = vpop.f32.mrf.mxu0
      %v740 = vadd.f32 0.0, %v739
      %v741 = vpop.f32.mrf.mxu0
      %742 = vdwg.mxu0
      %v743 = vpack.c.bf16 %v740, %v740
      %s744 = scalar_lea.vmem %s6, 12
      %v745 = vld [vmem:[%s744] sm:$0xf]
      %v747 = vsel %vm453, %v743, 0
      %v750 = vsel %vm491, %v745, 0
      %752 = vmatpush.bf16.msra.mxu0 0
      %753 = vmatpush.bf16.msra.mxu0 0
      %754 = vmatpush.bf16.msra.mxu0 0
      %755 = vmatpush.bf16.msra.mxu0 0
      %756 = vmatpush.bf16.msra.mxu0 0
      %757 = vmatpush.bf16.msra.mxu0 0
      %758 = vmatpush.bf16.msra.mxu0 0
      %759 = vmatpush.bf16.msra.mxu0 %v750
      %760 = vmatmul.bf16.gmra.mxu0 %v747
      %v761 = vpop.f32.mrf.mxu0
      %v762 = vadd.f32 0.0, %v761
      %v763 = vpop.f32.mrf.mxu0
      %764 = vdwg.mxu0
      %v765 = vadd.f32 %v686, %v762
      %v766 = vadd.f32 %v373, %v765
      %v767 = vld [vmem:[%s7] sm:$0x1]
      %v769 = vperm.slane %v767, 0
      %v771 = vadd.f32 %v766, %v769
      %v772 = vld [vmem:[%s8] sm:$0x1]
      %v773 = vld [vmem:[%s9] sm:$0x1]
      %v774 = vsel %vm396, %v771, 0.0
      %775 = vadd.xlane.f32.xlu0 %v774
      %v776 = vpop.xlane.xlu0 %775
      %v777 = vrcp.pop 32.0
      %v778 = vmul.f32 32.0, %v777
      %v779 = vsub.f32 1.0, %v778
      %v780 = vmul.f32 %v777, %v779
      %v781 = vadd.f32 %v777, %v780
      %vm782 = vweird.f32 %v777
      %v783 = vsel %vm782, %v777, %v781
      %v784 = vmul.f32 %v776, %v783
      %v785 = vsub.f32 %v771, %v784
      %v786 = vmul.f32 %v785, %v785
      %v787 = vsel %vm396, %v786, 0.0
      %788 = vadd.xlane.f32.xlu0 %v787
      %v789 = vpop.xlane.xlu0 %788
      %v790 = vmul.f32 %v789, %v783
      %v791 = vadd.f32 %v790, 1e-05
      %v792 = vrsqrt.pop %v791
      %v793 = vmul.f32 %v792, %v791
      %v794 = vmul.f32 %v793, %v792
      %v795 = vmul.f32 0.5, %v794
      %v796 = vsub.f32 1.5, %v795
      %v797 = vmul.f32 %v792, %v796
      %vm798 = vweird.f32 %v791
      %vm799 = vweird.f32 %v792
      %vm800 = vmor %vm798, %vm799
      %v801 = vsel %vm800, %v792, %v797
      %v802 = vmul.f32 %v785, %v801
      %v804 = vperm.slane %v772, 0
      %v806 = vmul.f32 %v802, %v804
      %v808 = vperm.slane %v773, 0
      %v810 = vadd.f32 %v806, %v808
      %811 = vst.msk [vmem:[%s371] sm:$0xff] %vm396, %v810
      %p812 = scmp.lt.s32.totalorder %s21, 1
      %s813 = scalar_select %p812, %s21, 1
      %s814 = smul.addr %s813, 8
      %s815 = scalar_lea.vmem %s10, %s814
      // Predicated region
      $region61: #{transformer_forward.15} parent=59 // pred_check
        %p816 = pneg %p259
      $region62: #{transformer_forward.15} parent=59 // pred_check_branch
        %818 = sbr.rel (%p816) target = $region64
      $region63: #{transformer_forward.15} parent=59 // pred_region
        _
      $region64: #{transformer_forward.15} parent=59 // pred_fallthru
        _
    $region60: #{transformer_forward.15} parent=5 // pred_fallthru
      _
    %p819 = scmp.le.s32.totalorder 2, %s16
    // Predicated region
    $region65: #{transformer_forward.15} parent=5 // pred_check
      %p820 = pneg %p819
    $region66: #{transformer_forward.15} parent=5 // pred_check_branch
      %822 = sbr.rel (%p820) target = $region68
    $region67: #{transformer_forward.15} parent=5 // pred_region
      %s823 = ssub.s32 %s16, 2
      // Predicated region
      $region69: #{transformer_forward.15} parent=67 // pred_check
        %p824 = pneg %p265
      $region70: #{transformer_forward.15} parent=67 // pred_check_branch
        %826 = sbr.rel (%p824) target = $region72
      $region71: #{transformer_forward.15} parent=67 // pred_region
        %p827 = scmp.lt.s32.totalorder %s22, 1
        %s828 = scalar_select %p827, %s22, 1
        %s829 = smul.addr %s828, 8
        %s830 = scalar_lea.vmem %s10, %s829
      $region72: #{transformer_forward.15} parent=67 // pred_fallthru
        _
    $region68: #{transformer_forward.15} parent=5 // pred_fallthru
      _
  $region6: #{transformer_forward.15} parent=0 // loop_footer
    %s20 = sadd.s32 1, %s16
  $region7: #{transformer_forward.15} parent=0 // loop_footer_branch
    %15 = sbr.rel target = $region3
  $region8: #{transformer_forward.15} parent=0 // loop_exit
    _

// kernel: transformer_forward.27
$region0: #{transformer_forward.27}
  #allocation0 [shape = 'u32[]', space=smem, size = 0x4, offset = 0x4, fixed_abs, tag = 'smem constant byte address 0x4 - core index']
  #allocation1 [shape = 'u32[72,128]{1,0:T(1,128)}', space=vmem, size = 0x9000, scoped, tag = 'internal scratch']
  %s0 = inlined_call_operand.vmem [shape: f32[16,32], index: 0, kind: input, shape index: {}]
  %s1 = inlined_call_operand.vmem [shape: f32[1,32], index: 1, kind: input, shape index: {}]
  %s2 = inlined_call_operand.vmem [shape: f32[1,32], index: 2, kind: input, shape index: {}]
  %s3 = inlined_call_operand.vmem [shape: bf16[32,128], index: 3, kind: input, shape index: {}]
  %s4 = inlined_call_operand.vmem [shape: f32[1,128], index: 4, kind: input, shape index: {}]
  %s5 = inlined_call_operand.vmem [shape: f32[16,128], index: 5, kind: output, shape index: {}]
  %s6 = sld [smem:[#allocation0]]
  $region30: #{transformer_forward.27} parent=0
    _
  %s8 = ssub.s32 1, %s6
  %s9 = scalar_select 0, %s8, %s6
  // Predicated region
  $region2: #{transformer_forward.27} parent=0 // pred_check
    _
  $region3: #{transformer_forward.27} parent=0 // pred_check_branch
    %11 = sbr.rel (0) target = $region5
  $region4: #{transformer_forward.27} parent=0 // pred_region
    _
  $region5: #{transformer_forward.27} parent=0 // pred_fallthru
    _
  // Predicated region
  $region6: #{transformer_forward.27} parent=0 // pred_check
    _
  $region7: #{transformer_forward.27} parent=0 // pred_check_branch
    %13 = sbr.rel (0) target = $region9
  $region8: #{transformer_forward.27} parent=0 // pred_region
    _
  $region9: #{transformer_forward.27} parent=0 // pred_fallthru
    _
  // Predicated region
  $region10: #{transformer_forward.27} parent=0 // pred_check
    _
  $region11: #{transformer_forward.27} parent=0 // pred_check_branch
    %15 = sbr.rel (0) target = $region13
  $region12: #{transformer_forward.27} parent=0 // pred_region
    _
  $region13: #{transformer_forward.27} parent=0 // pred_fallthru
    _
  // Predicated region
  $region14: #{transformer_forward.27} parent=0 // pred_check
    _
  $region15: #{transformer_forward.27} parent=0 // pred_check_branch
    %17 = sbr.rel (0) target = $region17
  $region16: #{transformer_forward.27} parent=0 // pred_region
    _
  $region17: #{transformer_forward.27} parent=0 // pred_fallthru
    _
  // Predicated region
  $region18: #{transformer_forward.27} parent=0 // pred_check
    _
  $region19: #{transformer_forward.27} parent=0 // pred_check_branch
    %19 = sbr.rel (0) target = $region21
  $region20: #{transformer_forward.27} parent=0 // pred_region
    _
  $region21: #{transformer_forward.27} parent=0 // pred_fallthru
    _
  %v21 = vld [vmem:[%s0] sm:$0xff]
  %v22 = vld [vmem:[%s0 + $0x8] sm:$0xff]
  %v23 = vld [vmem:[%s1] sm:$0x1]
  %v24 = vld [vmem:[%s2] sm:$0x1]
  %vm25 = vcmask 261120
  %v26 = vsel %vm25, %v21, 0.0
  %27 = vadd.xlane.f32.xlu0 %v26
  %v28 = vpop.xlane.xlu0 %27
  %v29 = vsel %vm25, %v22, 0.0
  %30 = vadd.xlane.f32.xlu0 %v29
  %v31 = vpop.xlane.xlu0 %30
  %v32 = vrcp.pop 32.0
  %v33 = vmul.f32 32.0, %v32
  %v34 = vsub.f32 1.0, %v33
  %v35 = vmul.f32 %v32, %v34
  %v36 = vadd.f32 %v32, %v35
  %vm37 = vweird.f32 %v32
  %v38 = vsel %vm37, %v32, %v36
  %v39 = vmul.f32 %v28, %v38
  %v40 = vmul.f32 %v31, %v38
  %v41 = vsub.f32 %v21, %v39
  %v42 = vsub.f32 %v22, %v40
  %v43 = vmul.f32 %v41, %v41
  %v44 = vmul.f32 %v42, %v42
  %v45 = vsel %vm25, %v43, 0.0
  %46 = vadd.xlane.f32.xlu0 %v45
  %v47 = vpop.xlane.xlu0 %46
  %v48 = vsel %vm25, %v44, 0.0
  %49 = vadd.xlane.f32.xlu0 %v48
  %v50 = vpop.xlane.xlu0 %49
  %v51 = vmul.f32 %v47, %v38
  %v52 = vmul.f32 %v50, %v38
  %v53 = vadd.f32 %v51, 1e-05
  %v54 = vadd.f32 %v52, 1e-05
  %v55 = vrsqrt.pop %v53
  %v56 = vmul.f32 %v55, %v53
  %v57 = vmul.f32 %v56, %v55
  %v58 = vmul.f32 0.5, %v57
  %v59 = vsub.f32 1.5, %v58
  %v60 = vmul.f32 %v55, %v59
  %vm61 = vweird.f32 %v53
  %vm62 = vweird.f32 %v55
  %vm63 = vmor %vm61, %vm62
  %v64 = vsel %vm63, %v55, %v60
  %v65 = vrsqrt.pop %v54
  %v66 = vmul.f32 %v65, %v54
  %v67 = vmul.f32 %v66, %v65
  %v68 = vmul.f32 0.5, %v67
  %v69 = vsub.f32 1.5, %v68
  %v70 = vmul.f32 %v65, %v69
  %vm71 = vweird.f32 %v54
  %vm72 = vweird.f32 %v65
  %vm73 = vmor %vm71, %vm72
  %v74 = vsel %vm73, %v65, %v70
  %v75 = vmul.f32 %v41, %v64
  %v76 = vmul.f32 %v42, %v74
  %v78 = vperm.slane %v23, 0
  %v80 = vmul.f32 %v75, %v78
  %v81 = vmul.f32 %v76, %v78
  %v83 = vperm.slane %v24, 0
  %v85 = vadd.f32 %v80, %v83
  %v86 = vadd.f32 %v81, %v83
  %v87 = vpack.c.bf16 %v86, %v85
  %v88 = vld [vmem:[%s3] sm:$0xf]
  %v89 = vld [vmem:[%s3 + $0x4] sm:$0xf]
  %v90 = vld [vmem:[%s3 + $0x8] sm:$0xf]
  %v91 = vld [vmem:[%s3 + $0xc] sm:$0xf]
  %v92 = vld [vmem:[%s4] sm:$0x1]
  %v94 = vperm.slane %v92, 0
  %v100 = vunpack.c.l.b16 %v88
  %v101 = vunpack.c.l.b16 %v89
  %v102 = vunpack.c.l.b16 %v90
  %v103 = vunpack.c.l.b16 %v91
  %v104 = vpack.c.b16 %v101, %v100
  %v105 = vpack.c.b16 %v103, %v102
  %v109 = vsel %vm25, %v87, 0
  %111 = vmatpush.bf16.msra.mxu0 0
  %112 = vmatpush.bf16.msra.mxu0 0
  %113 = vmatpush.bf16.msra.mxu0 0
  %114 = vmatpush.bf16.msra.mxu0 0
  %115 = vmatpush.bf16.msra.mxu0 0
  %116 = vmatpush.bf16.msra.mxu0 0
  %117 = vmatpush.bf16.msra.mxu0 %v105
  %118 = vmatpush.bf16.msra.mxu0 %v104
  %119 = vmatmul.bf16.gmra.mxu0 %v109
  %v120 = vpop.f32.mrf.mxu0
  %v121 = vadd.f32 %v94, %v120
  %v122 = vpop.f32.mrf.mxu0
  %v123 = vadd.f32 %v94, %v122
  %124 = vdwg.mxu0
  %125 = vst [vmem:[%s5] sm:$0xff] %v121
  %126 = vst [vmem:[%s5 + $0x8] sm:$0xff] %v123
  // Predicated region
  $region22: #{transformer_forward.27} parent=0 // pred_check
    _
  $region23: #{transformer_forward.27} parent=0 // pred_check_branch
    %128 = sbr.rel (0) target = $region25
  $region24: #{transformer_forward.27} parent=0 // pred_region
    _
  $region25: #{transformer_forward.27} parent=0 // pred_fallthru
    _
  // Predicated region
  $region26: #{transformer_forward.27} parent=0 // pred_check
    _
  $region27: #{transformer_forward.27} parent=0 // pred_check_branch
    %130 = sbr.rel (0) target = $region29
  $region28: #{transformer_forward.27} parent=0 // pred_region
    _
  $region29: #{transformer_forward.27} parent=0 // pred_fallthru
    _

// kernel: transformer_forward.25
$region0: #{transformer_forward.25}
  #allocation0 [shape = 'u32[]', space=smem, size = 0x4, offset = 0x4, fixed_abs, tag = 'smem constant byte address 0x4 - core index']
  #allocation1 [shape = 'u32[72,128]{1,0:T(1,128)}', space=vmem, size = 0x9000, scoped, tag = 'internal scratch']
  %s0 = inlined_call_operand.vmem [shape: f32[2,8,32], index: 0, kind: input, shape index: {}]
  %s1 = inlined_call_operand.vmem [shape: f32[2,8,32], index: 1, kind: input, shape index: {}]
  %s2 = inlined_call_operand.vmem [shape: bf16[32,32], index: 2, kind: input, shape index: {}]
  %s3 = inlined_call_operand.vmem [shape: f32[1,32], index: 3, kind: input, shape index: {}]
  %s4 = inlined_call_operand.vmem [shape: bf16[32,64], index: 4, kind: input, shape index: {}]
  %s5 = inlined_call_operand.vmem [shape: f32[1,64], index: 5, kind: input, shape index: {}]
  %s6 = inlined_call_operand.vmem [shape: bf16[4,8,32], index: 6, kind: input, shape index: {}]
  %s7 = inlined_call_operand.vmem [shape: f32[1,32], index: 7, kind: input, shape index: {}]
  %s8 = inlined_call_operand.vmem [shape: f32[1,32], index: 8, kind: input, shape index: {}]
  %s9 = inlined_call_operand.hbm [shape: f32[1,32], index: 9, kind: input, shape index: {}]
  %s10 = inlined_call_operand.vmem [shape: f32[2,8,32], index: 10, kind: output, shape index: {}]
  %s11 = sld [smem:[#allocation0]]
  $region77: #{transformer_forward.25} parent=0
    _
  %s13 = ssub.s32 1, %s11
  %s14 = scalar_select 0, %s13, %s11
  $region1: #{transformer_forward.25} parent=0
    #allocation2 [shape = 'u8[512]{0}', space=vmem, size = 0x400, scoped, tag = 'input window, operand 9, single buffered']
    #allocation3 [shape = 's32[2]{0}', space=sflag, size = 0x8, scoped, tag = 'scoped memory for transformer_forward.25']
    %15 = vsyncpa [#allocation3], 0
    loop: start=0, step=1, limit=4
    $region2: #{transformer_forward.25} parent=1 // loop_pre_header
      _
    $region3: #{transformer_forward.25} parent=1 // loop_header
      %s17 = sphi 0, %s21
      %p18 = scmp.ge.s32.totalorder %s17, 4
      %s27 = sphi 0, %s29
      %s30 = sphi 0, %s27
      %s31 = sphi 0, %s30
      %s47 = sphi 0, %s31
      %s53 = sphi 0, %s55
      %s56 = sphi 0, %s53
      %s57 = sphi 0, %s56
      %s73 = sphi 0, %s57
      %s77 = sphi 0, %s77
      %s79 = sphi 0, %s77
      %s80 = sphi 0, %s79
      %s94 = sphi 0, %s80
      %s98 = sphi 0, %s98
      %s100 = sphi 0, %s98
      %s101 = sphi 0, %s100
      %s115 = sphi 0, %s101
      %s119 = sphi 0, %s119
      %s121 = sphi 0, %s119
      %s122 = sphi 0, %s121
      %s136 = sphi 0, %s122
      %s140 = sphi 0, %s140
      %s142 = sphi 0, %s140
      %s143 = sphi 0, %s142
      %s157 = sphi 0, %s143
      %s161 = sphi 0, %s161
      %s163 = sphi 0, %s161
      %s164 = sphi 0, %s163
      %s178 = sphi 0, %s164
      %s182 = sphi 0, %s182
      %s184 = sphi 0, %s182
      %s185 = sphi 0, %s184
      %s199 = sphi 0, %s185
      %s203 = sphi 0, %s203
      %s205 = sphi 0, %s203
      %s206 = sphi 0, %s205
      %s220 = sphi 0, %s206
      %s224 = sphi 0, %s224
      %s226 = sphi 0, %s224
      %s227 = sphi 0, %s226
      %s241 = sphi 0, %s227
      %s247 = sphi 0, %s249
      %s250 = sphi 0, %s247
      %s251 = sphi 0, %s250
      %s267 = sphi 0, %s251
    $region4: #{transformer_forward.25} parent=1 // loop_header_branch
      %20 = sbr.rel (%p18) target = $region8
    $region5: #{transformer_forward.25} parent=1 // loop_body
      %s22 = ssub.s32 %s17, 1
      %s23 = ssub.s32 %s17, 2
      %s24 = sadd.s32 %s17, 1
      %s25 = ssub.s32 %s17, %s24
      %p26 = scmp.eq.s32.totalorder %s25, 0
      %s28 = sadd.s32 %s27, 1
      %s29 = scalar_select %p26, %s27, %s28
      %p32 = pneg %p26
      %p33 = scmp.eq.s32.totalorder %s17, 1
      %p34 = por %p32, %p33
      %p35 = scmp.ne.s32.totalorder %s27, %s30
      %p36 = scmp.eq.s32.totalorder %s17, 0
      %p37 = por %p35, %p36
      %p38 = scmp.ne.s32.totalorder %s27, %s30
      %p39 = scmp.eq.s32.totalorder %s22, 1
      %p40 = por %p38, %p39
      %p41 = scmp.ne.s32.totalorder %s30, %s31
      %p42 = scmp.eq.s32.totalorder %s22, 0
      %p43 = por %p41, %p42
      %p44 = scmp.ne.s32.totalorder %s30, %s31
      %p45 = scmp.eq.s32.totalorder %s23, 1
      %p46 = por %p44, %p45
      %p48 = scmp.ne.s32.totalorder %s31, %s47
      %p49 = scmp.eq.s32.totalorder %s23, 0
      %p50 = por %p48, %p49
      %s51 = ssub.s32 %s17, %s24
      %p52 = scmp.eq.s32.totalorder %s51, 0
      %s54 = sadd.s32 %s53, 1
      %s55 = scalar_select %p52, %s53, %s54
      %p58 = pneg %p52
      %p59 = scmp.eq.s32.totalorder %s17, 1
      %p60 = por %p58, %p59
      %p61 = scmp.ne.s32.totalorder %s53, %s56
      %p62 = scmp.eq.s32.totalorder %s17, 0
      %p63 = por %p61, %p62
      %p64 = scmp.ne.s32.totalorder %s53, %s56
      %p65 = scmp.eq.s32.totalorder %s22, 1
      %p66 = por %p64, %p65
      %p67 = scmp.ne.s32.totalorder %s56, %s57
      %p68 = scmp.eq.s32.totalorder %s22, 0
      %p69 = por %p67, %p68
      %p70 = scmp.ne.s32.totalorder %s56, %s57
      %p71 = scmp.eq.s32.totalorder %s23, 1
      %p72 = por %p70, %p71
      %p74 = scmp.ne.s32.totalorder %s57, %s73
      %p75 = scmp.eq.s32.totalorder %s23, 0
      %p76 = por %p74, %p75
      %s78 = sadd.s32 %s77, 1
      %p81 = scmp.eq.s32.totalorder %s17, 1
      %p82 = scmp.ne.s32.totalorder %s77, %s79
      %p83 = scmp.eq.s32.totalorder %s17, 0
      %p84 = por %p82, %p83
      %p85 = scmp.ne.s32.totalorder %s77, %s79
      %p86 = scmp.eq.s32.totalorder %s22, 1
      %p87 = por %p85, %p86
      %p88 = scmp.ne.s32.totalorder %s79, %s80
      %p89 = scmp.eq.s32.totalorder %s22, 0
      %p90 = por %p88, %p89
      %p91 = scmp.ne.s32.totalorder %s79, %s80
      %p92 = scmp.eq.s32.totalorder %s23, 1
      %p93 = por %p91, %p92
      %p95 = scmp.ne.s32.totalorder %s80, %s94
      %p96 = scmp.eq.s32.totalorder %s23, 0
      %p97 = por %p95, %p96
      %s99 = sadd.s32 %s98, 1
      %p102 = scmp.eq.s32.totalorder %s17, 1
      %p103 = scmp.ne.s32.totalorder %s98, %s100
      %p104 = scmp.eq.s32.totalorder %s17, 0
      %p105 = por %p103, %p104
      %p106 = scmp.ne.s32.totalorder %s98, %s100
      %p107 = scmp.eq.s32.totalorder %s22, 1
      %p108 = por %p106, %p107
      %p109 = scmp.ne.s32.totalorder %s100, %s101
      %p110 = scmp.eq.s32.totalorder %s22, 0
      %p111 = por %p109, %p110
      %p112 = scmp.ne.s32.totalorder %s100, %s101
      %p113 = scmp.eq.s32.totalorder %s23, 1
      %p114 = por %p112, %p113
      %p116 = scmp.ne.s32.totalorder %s101, %s115
      %p117 = scmp.eq.s32.totalorder %s23, 0
      %p118 = por %p116, %p117
      %s120 = sadd.s32 %s119, 1
      %p123 = scmp.eq.s32.totalorder %s17, 1
      %p124 = scmp.ne.s32.totalorder %s119, %s121
      %p125 = scmp.eq.s32.totalorder %s17, 0
      %p126 = por %p124, %p125
      %p127 = scmp.ne.s32.totalorder %s119, %s121
      %p128 = scmp.eq.s32.totalorder %s22, 1
      %p129 = por %p127, %p128
      %p130 = scmp.ne.s32.totalorder %s121, %s122
      %p131 = scmp.eq.s32.totalorder %s22, 0
      %p132 = por %p130, %p131
      %p133 = scmp.ne.s32.totalorder %s121, %s122
      %p134 = scmp.eq.s32.totalorder %s23, 1
      %p135 = por %p133, %p134
      %p137 = scmp.ne.s32.totalorder %s122, %s136
      %p138 = scmp.eq.s32.totalorder %s23, 0
      %p139 = por %p137, %p138
      %s141 = sadd.s32 %s140, 1
      %p144 = scmp.eq.s32.totalorder %s17, 1
      %p145 = scmp.ne.s32.totalorder %s140, %s142
      %p146 = scmp.eq.s32.totalorder %s17, 0
      %p147 = por %p145, %p146
      %p148 = scmp.ne.s32.totalorder %s140, %s142
      %p149 = scmp.eq.s32.totalorder %s22, 1
      %p150 = por %p148, %p149
      %p151 = scmp.ne.s32.totalorder %s142, %s143
      %p152 = scmp.eq.s32.totalorder %s22, 0
      %p153 = por %p151, %p152
      %p154 = scmp.ne.s32.totalorder %s142, %s143
      %p155 = scmp.eq.s32.totalorder %s23, 1
      %p156 = por %p154, %p155
      %p158 = scmp.ne.s32.totalorder %s143, %s157
      %p159 = scmp.eq.s32.totalorder %s23, 0
      %p160 = por %p158, %p159
      %s162 = sadd.s32 %s161, 1
      %p165 = scmp.eq.s32.totalorder %s17, 1
      %p166 = scmp.ne.s32.totalorder %s161, %s163
      %p167 = scmp.eq.s32.totalorder %s17, 0
      %p168 = por %p166, %p167
      %p169 = scmp.ne.s32.totalorder %s161, %s163
      %p170 = scmp.eq.s32.totalorder %s22, 1
      %p171 = por %p169, %p170
      %p172 = scmp.ne.s32.totalorder %s163, %s164
      %p173 = scmp.eq.s32.totalorder %s22, 0
      %p174 = por %p172, %p173
      %p175 = scmp.ne.s32.totalorder %s163, %s164
      %p176 = scmp.eq.s32.totalorder %s23, 1
      %p177 = por %p175, %p176
      %p179 = scmp.ne.s32.totalorder %s164, %s178
      %p180 = scmp.eq.s32.totalorder %s23, 0
      %p181 = por %p179, %p180
      %s183 = sadd.s32 %s182, 1
      %p186 = scmp.eq.s32.totalorder %s17, 1
      %p187 = scmp.ne.s32.totalorder %s182, %s184
      %p188 = scmp.eq.s32.totalorder %s17, 0
      %p189 = por %p187, %p188
      %p190 = scmp.ne.s32.totalorder %s182, %s184
      %p191 = scmp.eq.s32.totalorder %s22, 1
      %p192 = por %p190, %p191
      %p193 = scmp.ne.s32.totalorder %s184, %s185
      %p194 = scmp.eq.s32.totalorder %s22, 0
      %p195 = por %p193, %p194
      %p196 = scmp.ne.s32.totalorder %s184, %s185
      %p197 = scmp.eq.s32.totalorder %s23, 1
      %p198 = por %p196, %p197
      %p200 = scmp.ne.s32.totalorder %s185, %s199
      %p201 = scmp.eq.s32.totalorder %s23, 0
      %p202 = por %p200, %p201
      %s204 = sadd.s32 %s203, 1
      %p207 = scmp.eq.s32.totalorder %s17, 1
      %p208 = scmp.ne.s32.totalorder %s203, %s205
      %p209 = scmp.eq.s32.totalorder %s17, 0
      %p210 = por %p208, %p209
      %p211 = scmp.ne.s32.totalorder %s203, %s205
      %p212 = scmp.eq.s32.totalorder %s22, 1
      %p213 = por %p211, %p212
      %p214 = scmp.ne.s32.totalorder %s205, %s206
      %p215 = scmp.eq.s32.totalorder %s22, 0
      %p216 = por %p214, %p215
      %p217 = scmp.ne.s32.totalorder %s205, %s206
      %p218 = scmp.eq.s32.totalorder %s23, 1
      %p219 = por %p217, %p218
      %p221 = scmp.ne.s32.totalorder %s206, %s220
      %p222 = scmp.eq.s32.totalorder %s23, 0
      %p223 = por %p221, %p222
      %s225 = sadd.s32 %s224, 1
      %p228 = scmp.eq.s32.totalorder %s17, 1
      %p229 = scmp.ne.s32.totalorder %s224, %s226
      %p230 = scmp.eq.s32.totalorder %s17, 0
      %p231 = por %p229, %p230
      %p232 = scmp.ne.s32.totalorder %s224, %s226
      %p233 = scmp.eq.s32.totalorder %s22, 1
      %p234 = por %p232, %p233
      %p235 = scmp.ne.s32.totalorder %s226, %s227
      %p236 = scmp.eq.s32.totalorder %s22, 0
      %p237 = por %p235, %p236
      %p238 = scmp.ne.s32.totalorder %s226, %s227
      %p239 = scmp.eq.s32.totalorder %s23, 1
      %p240 = por %p238, %p239
      %p242 = scmp.ne.s32.totalorder %s227, %s241
      %p243 = scmp.eq.s32.totalorder %s23, 0
      %p244 = por %p242, %p243
      %s245 = ssub.s32 %s17, %s24
      %p246 = scmp.eq.s32.totalorder %s245, 0
      %s248 = sadd.s32 %s247, 1
      %s249 = scalar_select %p246, %s247, %s248
      %p252 = pneg %p246
      %p253 = scmp.eq.s32.totalorder %s17, 1
      %p254 = por %p252, %p253
      %p255 = scmp.ne.s32.totalorder %s247, %s250
      %p256 = scmp.eq.s32.totalorder %s17, 0
      %p257 = por %p255, %p256
      %p258 = scmp.ne.s32.totalorder %s247, %s250
      %p259 = scmp.eq.s32.totalorder %s22, 1
      %p260 = por %p258, %p259
      %p261 = scmp.ne.s32.totalorder %s250, %s251
      %p262 = scmp.eq.s32.totalorder %s22, 0
      %p263 = por %p261, %p262
      %p264 = scmp.ne.s32.totalorder %s250, %s251
      %p265 = scmp.eq.s32.totalorder %s23, 1
      %p266 = por %p264, %p265
      %p268 = scmp.ne.s32.totalorder %s251, %s267
      %p269 = scmp.eq.s32.totalorder %s23, 0
      %p270 = por %p268, %p269
      %p271 = scmp.le.s32.totalorder 1, %s17
      %p272 = scmp.lt.s32.totalorder %s17, 3
      %p273 = pnand %p271, %p272
      %p274 = pneg %p273
      // Predicated region
      $region9: #{transformer_forward.25} parent=5 // pred_check
        _
      $region10: #{transformer_forward.25} parent=5 // pred_check_branch
        %276 = sbr.rel (%p273) target = $region12
      $region11: #{transformer_forward.25} parent=5 // pred_region
        %s277 = ssub.s32 %s17, 1
        // Predicated region
        $region13: #{transformer_forward.25} parent=11 // pred_check
          %p278 = pneg %p90
        $region14: #{transformer_forward.25} parent=11 // pred_check_branch
          %280 = sbr.rel (%p278) target = $region16
        $region15: #{transformer_forward.25} parent=11 // pred_region
          _
        $region16: #{transformer_forward.25} parent=11 // pred_fallthru
          _
        // Predicated region
        $region17: #{transformer_forward.25} parent=11 // pred_check
          %p281 = pneg %p111
        $region18: #{transformer_forward.25} parent=11 // pred_check_branch
          %283 = sbr.rel (%p281) target = $region20
        $region19: #{transformer_forward.25} parent=11 // pred_region
          _
        $region20: #{transformer_forward.25} parent=11 // pred_fallthru
          _
        // Predicated region
        $region21: #{transformer_forward.25} parent=11 // pred_check
          %p284 = pneg %p132
        $region22: #{transformer_forward.25} parent=11 // pred_check_branch
          %286 = sbr.rel (%p284) target = $region24
        $region23: #{transformer_forward.25} parent=11 // pred_region
          _
        $region24: #{transformer_forward.25} parent=11 // pred_fallthru
          _
        // Predicated region
        $region25: #{transformer_forward.25} parent=11 // pred_check
          %p287 = pneg %p153
        $region26: #{transformer_forward.25} parent=11 // pred_check_branch
          %289 = sbr.rel (%p287) target = $region28
        $region27: #{transformer_forward.25} parent=11 // pred_region
          _
        $region28: #{transformer_forward.25} parent=11 // pred_fallthru
          _
        // Predicated region
        $region29: #{transformer_forward.25} parent=11 // pred_check
          %p290 = pneg %p174
        $region30: #{transformer_forward.25} parent=11 // pred_check_branch
          %292 = sbr.rel (%p290) target = $region32
        $region31: #{transformer_forward.25} parent=11 // pred_region
          _
        $region32: #{transformer_forward.25} parent=11 // pred_fallthru
          _
        // Predicated region
        $region33: #{transformer_forward.25} parent=11 // pred_check
          %p293 = pneg %p195
        $region34: #{transformer_forward.25} parent=11 // pred_check_branch
          %295 = sbr.rel (%p293) target = $region36
        $region35: #{transformer_forward.25} parent=11 // pred_region
          _
        $region36: #{transformer_forward.25} parent=11 // pred_fallthru
          _
        // Predicated region
        $region37: #{transformer_forward.25} parent=11 // pred_check
          %p296 = pneg %p216
        $region38: #{transformer_forward.25} parent=11 // pred_check_branch
          %298 = sbr.rel (%p296) target = $region40
        $region39: #{transformer_forward.25} parent=11 // pred_region
          _
        $region40: #{transformer_forward.25} parent=11 // pred_fallthru
          _
        // Predicated region
        $region41: #{transformer_forward.25} parent=11 // pred_check
          %p299 = pneg %p237
        $region42: #{transformer_forward.25} parent=11 // pred_check_branch
          %301 = sbr.rel (%p299) target = $region44
        $region43: #{transformer_forward.25} parent=11 // pred_region
          %303 = vsyncadd [#allocation3], 0
          %s305 = sshll.u32 %s9, 4
          %s306 = int_to_ptr.hbm [resolvable:$true] %s305
          %s307 = sshll.u32 [#allocation2], 4
          %s308 = int_to_ptr.vmem [resolvable:$true] %s307
          %310 = dma.hbm_to_vmem [thread:$0]  %s306, 16, %s308, [#allocation3]
        $region44: #{transformer_forward.25} parent=11 // pred_fallthru
          _
      $region12: #{transformer_forward.25} parent=5 // pred_fallthru
        _
      %p311 = scmp.lt.s32.totalorder %s17, 2
      // Predicated region
      $region45: #{transformer_forward.25} parent=5 // pred_check
        %p312 = pneg %p311
      $region46: #{transformer_forward.25} parent=5 // pred_check_branch
        %314 = sbr.rel (%p312) target = $region48
      $region47: #{transformer_forward.25} parent=5 // pred_region
        // Predicated region
        $region49: #{transformer_forward.25} parent=47 // pred_check
          %p315 = pneg %p37
        $region50: #{transformer_forward.25} parent=47 // pred_check_branch
          %317 = sbr.rel (%p315) target = $region52
        $region51: #{transformer_forward.25} parent=47 // pred_region
          %p318 = scmp.lt.s32.totalorder %s17, 1
          %s319 = scalar_select %p318, %s17, 1
          %s320 = smul.addr %s319, 8
          %s321 = scalar_lea.vmem %s0, %s320
        $region52: #{transformer_forward.25} parent=47 // pred_fallthru
          _
        // Predicated region
        $region53: #{transformer_forward.25} parent=47 // pred_check
          %p322 = pneg %p63
        $region54: #{transformer_forward.25} parent=47 // pred_check_branch
          %324 = sbr.rel (%p322) target = $region56
        $region55: #{transformer_forward.25} parent=47 // pred_region
          %p325 = scmp.lt.s32.totalorder %s17, 1
          %s326 = scalar_select %p325, %s17, 1
          %s327 = smul.addr %s326, 8
          %s328 = scalar_lea.vmem %s1, %s327
        $region56: #{transformer_forward.25} parent=47 // pred_fallthru
          _
      $region48: #{transformer_forward.25} parent=5 // pred_fallthru
        _
      %p329 = scmp.le.s32.totalorder 1, %s17
      %p330 = scmp.lt.s32.totalorder %s17, 3
      %p331 = pnand %p329, %p330
      %p332 = pneg %p331
      // Predicated region
      $region57: #{transformer_forward.25} parent=5 // pred_check
        _
      $region58: #{transformer_forward.25} parent=5 // pred_check_branch
        %334 = sbr.rel (%p331) target = $region60
      $region59: #{transformer_forward.25} parent=5 // pred_region
        %s335 = ssub.s32 %s17, 1
        // Predicated region
        $region61: #{transformer_forward.25} parent=59 // pred_check
          %p336 = pneg %p237
        $region62: #{transformer_forward.25} parent=59 // pred_check_branch
          %338 = sbr.rel (%p336) target = $region64
        $region63: #{transformer_forward.25} parent=59 // pred_region
          %340 = dma.done [#allocation3], 16
        $region64: #{transformer_forward.25} parent=59 // pred_fallthru
          _
        %p341 = scmp.lt.s32.totalorder %s22, 1
        %s342 = scalar_select %p341, %s22, 1
        %s343 = smul.addr %s342, 8
        %s344 = scalar_lea.vmem %s0, %s343
        %p345 = pneg %p43
        %p346 = pneg %p40
        %p347 = scmp.lt.s32.totalorder %s22, 1
        %s348 = scalar_select %p347, %s22, 1
        %s349 = smul.addr %s348, 8
        %s350 = scalar_lea.vmem %s1, %s349
        %p351 = pneg %p69
        %p352 = pneg %p66
        %p353 = pneg %p90
        %p354 = pneg %p87
        %p355 = pneg %p111
        %p356 = pneg %p108
        %p357 = pneg %p132
        %p358 = pneg %p129
        %p359 = pneg %p153
        %p360 = pneg %p150
        %p361 = pneg %p174
        %p362 = pneg %p171
        %p363 = pneg %p195
        %p364 = pneg %p192
        %p365 = pneg %p216
        %p366 = pneg %p213
        %p367 = pneg %p237
        %p368 = pneg %p234
        %p369 = pneg %p263
        %p370 = pneg %p260
        %p371 = scmp.lt.s32.totalorder %s22, 1
        %s372 = scalar_select %p371, %s22, 1
        %s373 = smul.addr %s372, 8
        %s374 = scalar_lea.vmem %s10, %s373
        %p375 = scmp.lt.s32.totalorder %s22, 1
        %s376 = scalar_select %p375, %s22, 1
        %s377 = smul.addr %s376, 8
        %s378 = scalar_lea.vmem %s0, %s377
        %p379 = scmp.lt.s32.totalorder %s22, 1
        %s380 = scalar_select %p379, %s22, 1
        %s381 = smul.addr %s380, 8
        %s382 = scalar_lea.vmem %s1, %s381
        %p383 = scmp.lt.s32.totalorder %s22, 1
        %s384 = scalar_select %p383, %s22, 1
        %s385 = smul.addr %s384, 8
        %s386 = scalar_lea.vmem %s10, %s385
        %v388 = vld [vmem:[%s378] sm:$0xff]
        %v389 = vld [vmem:[%s382] sm:$0xff]
        %v390 = vpack.c.bf16 %v388, %v388
        %v391 = vld [vmem:[%s2] sm:$0xf]
        %v392 = vld [vmem:[%s2 + $0x4] sm:$0xf]
        %v393 = vld [vmem:[%s2 + $0x8] sm:$0xf]
        %v394 = vld [vmem:[%s2 + $0xc] sm:$0xf]
        %v395 = vld [vmem:[%s3] sm:$0x1]
        %v397 = vperm.slane %v395, 0
        %v403 = vunpack.c.l.b16 %v391
        %v404 = vunpack.c.l.b16 %v392
        %v405 = vunpack.c.l.b16 %v393
        %v406 = vunpack.c.l.b16 %v394
        %v407 = vpack.c.b16 %v404, %v403
        %v408 = vpack.c.b16 %v406, %v405
        %vm411 = vcmask 261120
        %v413 = vsel %vm411, %v390, 0
        %415 = vmatpush.bf16.msra.mxu0 0
        %416 = vmatpush.bf16.msra.mxu0 0
        %417 = vmatpush.bf16.msra.mxu0 0
        %418 = vmatpush.bf16.msra.mxu0 0
        %419 = vmatpush.bf16.msra.mxu0 0
        %420 = vmatpush.bf16.msra.mxu0 0
        %421 = vmatpush.bf16.msra.mxu0 %v408
        %422 = vmatpush.bf16.msra.mxu0 %v407
        %423 = vmatmul.bf16.gmra.mxu0 %v413
        %v424 = vpop.f32.mrf.mxu0
        %v425 = vadd.f32 %v397, %v424
        %v426 = vpop.f32.mrf.mxu0
        %427 = vdwg.mxu0
        %v428 = vpack.c.bf16 %v389, %v389
        %v429 = vld [vmem:[%s4] sm:$0xf]
        %v430 = vld [vmem:[%s4 + $0x4] sm:$0xf]
        %v431 = vld [vmem:[%s4 + $0x8] sm:$0xf]
        %v432 = vld [vmem:[%s4 + $0xc] sm:$0xf]
        %v433 = vld [vmem:[%s5] sm:$0x1]
        %v435 = vperm.slane %v433, 0
        %v441 = vunpack.c.l.b16 %v429
        %v442 = vunpack.c.l.b16 %v430
        %v443 = vunpack.c.l.b16 %v431
        %v444 = vunpack.c.l.b16 %v432
        %v445 = vpack.c.b16 %v442, %v441
        %v446 = vpack.c.b16 %v444, %v443
        %v450 = vsel %vm411, %v428, 0
        %452 = vmatpush.bf16.msra.mxu0 0
        %453 = vmatpush.bf16.msra.mxu0 0
        %454 = vmatpush.bf16.msra.mxu0 0
        %455 = vmatpush.bf16.msra.mxu0 0
        %456 = vmatpush.bf16.msra.mxu0 0
        %457 = vmatpush.bf16.msra.mxu0 0
        %458 = vmatpush.bf16.msra.mxu0 %v446
        %459 = vmatpush.bf16.msra.mxu0 %v445
        %460 = vmatmul.bf16.gmra.mxu0 %v450
        %v461 = vpop.f32.mrf.mxu0
        %v462 = vadd.f32 %v435, %v461
        %v463 = vpop.f32.mrf.mxu0
        %464 = vdwg.mxu0
        %v465 = vmul.f32 %v425, 0.35355338
        %v466 = vpack.c.bf16 %v465, %v465
        %v467 = vpack.c.bf16 %v462, %v462
        %vm468 = vcmask 64512
        %v470 = vsel %vm468, %v466, 0
        %v473 = vsel %vm468, %v467, 0
        %475 = vmatpush.bf16.xpose.msra.mxu0 0
        %476 = vmatpush.bf16.xpose.msra.mxu0 0
        %477 = vmatpush.bf16.xpose.msra.mxu0 0
        %478 = vmatpush.bf16.xpose.msra.mxu0 0
        %479 = vmatpush.bf16.xpose.msra.mxu0 0
        %480 = vmatpush.bf16.xpose.msra.mxu0 0
        %481 = vmatpush.bf16.xpose.msra.mxu0 0
        %482 = vmatpush.bf16.xpose.msra.mxu0 %v473
        %483 = vmatmul.bf16.gmra.mxu0 %v470
        %v484 = vpop.f32.mrf.mxu0
        %v485 = vadd.f32 0.0, %v484
        %v486 = vpop.f32.mrf.mxu0
        %487 = vdwg.mxu0
        %v488 = vsel %vm468, %v485, -inf
        %489 = vmax.xlane.f32.xlu0 %v488
        %v490 = vpop.xlane.xlu0 %489
        %v491 = vsub.f32 %v485, %v490
        %v492 = vmul.f32 %v491, 1.442695
        %v493 = vpow.pop %v492
        %v494 = vsel %vm468, %v493, 0.0
        %495 = vadd.xlane.f32.xlu0 %v494
        %v496 = vpop.xlane.xlu0 %495
        %v497 = vrcp.pop %v496
        %v498 = vmul.f32 %v493, %v497
        %v499 = vpack.c.bf16 %v498, %v498
        %501 = vrot.lane.b32.xlu0 %v467, 96
        %v502 = vpop.permute.xlu0 %501
        %v504 = vsel %vm468, %v499, 0
        %vm506 = vcmask 1043456
        %v508 = vsel %vm506, %v502, 0
        %510 = vmatpush.bf16.msra.mxu0 0
        %511 = vmatpush.bf16.msra.mxu0 0
        %512 = vmatpush.bf16.msra.mxu0 0
        %513 = vmatpush.bf16.msra.mxu0 0
        %514 = vmatpush.bf16.msra.mxu0 0
        %515 = vmatpush.bf16.msra.mxu0 0
        %516 = vmatpush.bf16.msra.mxu0 0
        %517 = vmatpush.bf16.msra.mxu0 %v508
        %518 = vmatmul.bf16.gmra.mxu0 %v504
        %v519 = vpop.f32.mrf.mxu0
        %v520 = vadd.f32 0.0, %v519
        %v521 = vpop.f32.mrf.mxu0
        %522 = vdwg.mxu0
        %v523 = vpack.c.bf16 %v520, %v520
        %v524 = vld [vmem:[%s6] sm:$0xf]
        %526 = vrot.lane.b32.xlu0 %v466, 120
        %v527 = vpop.permute.xlu0 %526
        %528 = vrot.lane.b32.xlu0 %v467, 120
        %v529 = vpop.permute.xlu0 %528
        %v531 = vsel %vm468, %v527, 0
        %v534 = vsel %vm468, %v529, 0
        %536 = vmatpush.bf16.xpose.msra.mxu0 0
        %537 = vmatpush.bf16.xpose.msra.mxu0 0
        %538 = vmatpush.bf16.xpose.msra.mxu0 0
        %539 = vmatpush.bf16.xpose.msra.mxu0 0
        %540 = vmatpush.bf16.xpose.msra.mxu0 0
        %541 = vmatpush.bf16.xpose.msra.mxu0 0
        %542 = vmatpush.bf16.xpose.msra.mxu0 0
        %543 = vmatpush.bf16.xpose.msra.mxu0 %v534
        %544 = vmatmul.bf16.gmra.mxu0 %v531
        %v545 = vpop.f32.mrf.mxu0
        %v546 = vadd.f32 0.0, %v545
        %v547 = vpop.f32.mrf.mxu0
        %548 = vdwg.mxu0
        %v549 = vsel %vm468, %v546, -inf
        %550 = vmax.xlane.f32.xlu0 %v549
        %v551 = vpop.xlane.xlu0 %550
        %v552 = vsub.f32 %v546, %v551
        %v553 = vmul.f32 %v552, 1.442695
        %v554 = vpow.pop %v553
        %v555 = vsel %vm468, %v554, 0.0
        %556 = vadd.xlane.f32.xlu0 %v555
        %v557 = vpop.xlane.xlu0 %556
        %v558 = vrcp.pop %v557
        %v559 = vmul.f32 %v554, %v558
        %v560 = vpack.c.bf16 %v559, %v559
        %561 = vrot.lane.b32.xlu0 %v467, 88
        %v562 = vpop.permute.xlu0 %561
        %v564 = vsel %vm468, %v560, 0
        %v567 = vsel %vm506, %v562, 0
        %569 = vmatpush.bf16.msra.mxu0 0
        %570 = vmatpush.bf16.msra.mxu0 0
        %571 = vmatpush.bf16.msra.mxu0 0
        %572 = vmatpush.bf16.msra.mxu0 0
        %573 = vmatpush.bf16.msra.mxu0 0
        %574 = vmatpush.bf16.msra.mxu0 0
        %575 = vmatpush.bf16.msra.mxu0 0
        %576 = vmatpush.bf16.msra.mxu0 %v567
        %577 = vmatmul.bf16.gmra.mxu0 %v564
        %v578 = vpop.f32.mrf.mxu0
        %v579 = vadd.f32 0.0, %v578
        %v580 = vpop.f32.mrf.mxu0
        %581 = vdwg.mxu0
        %v582 = vpack.c.bf16 %v579, %v579
        %s583 = scalar_lea.vmem %s6, 4
        %v584 = vld [vmem:[%s583] sm:$0xf]
        %v586 = vsel %vm468, %v582, 0
        %v589 = vsel %vm506, %v584, 0
        %591 = vmatpush.bf16.msra.mxu0 0
        %592 = vmatpush.bf16.msra.mxu0 0
        %593 = vmatpush.bf16.msra.mxu0 0
        %594 = vmatpush.bf16.msra.mxu0 0
        %595 = vmatpush.bf16.msra.mxu0 0
        %596 = vmatpush.bf16.msra.mxu0 0
        %597 = vmatpush.bf16.msra.mxu0 0
        %598 = vmatpush.bf16.msra.mxu0 %v589
        %599 = vmatmul.bf16.gmra.mxu0 %v586
        %v600 = vpop.f32.mrf.mxu0
        %v601 = vadd.f32 0.0, %v600
        %v602 = vpop.f32.mrf.mxu0
        %603 = vdwg.mxu0
        %v605 = vsel %vm468, %v523, 0
        %v608 = vsel %vm506, %v524, 0
        %610 = vmatpush.bf16.msra.mxu0 0
        %611 = vmatpush.bf16.msra.mxu0 0
        %612 = vmatpush.bf16.msra.mxu0 0
        %613 = vmatpush.bf16.msra.mxu0 0
        %614 = vmatpush.bf16.msra.mxu0 0
        %615 = vmatpush.bf16.msra.mxu0 0
        %616 = vmatpush.bf16.msra.mxu0 0
        %617 = vmatpush.bf16.msra.mxu0 %v608
        %618 = vmatmul.bf16.gmra.mxu0 %v605
        %v619 = vpop.f32.mrf.mxu0
        %v620 = vadd.f32 %v601, %v619
        %v621 = vpop.f32.mrf.mxu0
        %622 = vdwg.mxu0
        %623 = vrot.lane.b32.xlu0 %v466, 112
        %v624 = vpop.permute.xlu0 %623
        %625 = vrot.lane.b32.xlu0 %v467, 112
        %v626 = vpop.permute.xlu0 %625
        %v628 = vsel %vm468, %v624, 0
        %v631 = vsel %vm468, %v626, 0
        %633 = vmatpush.bf16.xpose.msra.mxu0 0
        %634 = vmatpush.bf16.xpose.msra.mxu0 0
        %635 = vmatpush.bf16.xpose.msra.mxu0 0
        %636 = vmatpush.bf16.xpose.msra.mxu0 0
        %637 = vmatpush.bf16.xpose.msra.mxu0 0
        %638 = vmatpush.bf16.xpose.msra.mxu0 0
        %639 = vmatpush.bf16.xpose.msra.mxu0 0
        %640 = vmatpush.bf16.xpose.msra.mxu0 %v631
        %641 = vmatmul.bf16.gmra.mxu0 %v628
        %v642 = vpop.f32.mrf.mxu0
        %v643 = vadd.f32 0.0, %v642
        %v644 = vpop.f32.mrf.mxu0
        %645 = vdwg.mxu0
        %v646 = vsel %vm468, %v643, -inf
        %647 = vmax.xlane.f32.xlu0 %v646
        %v648 = vpop.xlane.xlu0 %647
        %v649 = vsub.f32 %v643, %v648
        %v650 = vmul.f32 %v649, 1.442695
        %v651 = vpow.pop %v650
        %v652 = vsel %vm468, %v651, 0.0
        %653 = vadd.xlane.f32.xlu0 %v652
        %v654 = vpop.xlane.xlu0 %653
        %v655 = vrcp.pop %v654
        %v656 = vmul.f32 %v651, %v655
        %v657 = vpack.c.bf16 %v656, %v656
        %658 = vrot.lane.b32.xlu0 %v467, 80
        %v659 = vpop.permute.xlu0 %658
        %v661 = vsel %vm468, %v657, 0
        %v664 = vsel %vm506, %v659, 0
        %666 = vmatpush.bf16.msra.mxu0 0
        %667 = vmatpush.bf16.msra.mxu0 0
        %668 = vmatpush.bf16.msra.mxu0 0
        %669 = vmatpush.bf16.msra.mxu0 0
        %670 = vmatpush.bf16.msra.mxu0 0
        %671 = vmatpush.bf16.msra.mxu0 0
        %672 = vmatpush.bf16.msra.mxu0 0
        %673 = vmatpush.bf16.msra.mxu0 %v664
        %674 = vmatmul.bf16.gmra.mxu0 %v661
        %v675 = vpop.f32.mrf.mxu0
        %v676 = vadd.f32 0.0, %v675
        %v677 = vpop.f32.mrf.mxu0
        %678 = vdwg.mxu0
        %v679 = vpack.c.bf16 %v676, %v676
        %s680 = scalar_lea.vmem %s6, 8
        %v681 = vld [vmem:[%s680] sm:$0xf]
        %v683 = vsel %vm468, %v679, 0
        %v686 = vsel %vm506, %v681, 0
        %688 = vmatpush.bf16.msra.mxu0 0
        %689 = vmatpush.bf16.msra.mxu0 0
        %690 = vmatpush.bf16.msra.mxu0 0
        %691 = vmatpush.bf16.msra.mxu0 0
        %692 = vmatpush.bf16.msra.mxu0 0
        %693 = vmatpush.bf16.msra.mxu0 0
        %694 = vmatpush.bf16.msra.mxu0 0
        %695 = vmatpush.bf16.msra.mxu0 %v686
        %696 = vmatmul.bf16.gmra.mxu0 %v683
        %v697 = vpop.f32.mrf.mxu0
        %v698 = vadd.f32 0.0, %v697
        %v699 = vpop.f32.mrf.mxu0
        %700 = vdwg.mxu0
        %v701 = vadd.f32 %v620, %v698
        %702 = vrot.lane.b32.xlu0 %v466, 104
        %v703 = vpop.permute.xlu0 %702
        %704 = vrot.lane.b32.xlu0 %v467, 104
        %v705 = vpop.permute.xlu0 %704
        %v707 = vsel %vm468, %v703, 0
        %v710 = vsel %vm468, %v705, 0
        %712 = vmatpush.bf16.xpose.msra.mxu0 0
        %713 = vmatpush.bf16.xpose.msra.mxu0 0
        %714 = vmatpush.bf16.xpose.msra.mxu0 0
        %715 = vmatpush.bf16.xpose.msra.mxu0 0
        %716 = vmatpush.bf16.xpose.msra.mxu0 0
        %717 = vmatpush.bf16.xpose.msra.mxu0 0
        %718 = vmatpush.bf16.xpose.msra.mxu0 0
        %719 = vmatpush.bf16.xpose.msra.mxu0 %v710
        %720 = vmatmul.bf16.gmra.mxu0 %v707
        %v721 = vpop.f32.mrf.mxu0
        %v722 = vadd.f32 0.0, %v721
        %v723 = vpop.f32.mrf.mxu0
        %724 = vdwg.mxu0
        %v725 = vsel %vm468, %v722, -inf
        %726 = vmax.xlane.f32.xlu0 %v725
        %v727 = vpop.xlane.xlu0 %726
        %v728 = vsub.f32 %v722, %v727
        %v729 = vmul.f32 %v728, 1.442695
        %v730 = vpow.pop %v729
        %v731 = vsel %vm468, %v730, 0.0
        %732 = vadd.xlane.f32.xlu0 %v731
        %v733 = vpop.xlane.xlu0 %732
        %v734 = vrcp.pop %v733
        %v735 = vmul.f32 %v730, %v734
        %v736 = vpack.c.bf16 %v735, %v735
        %737 = vrot.lane.b32.xlu0 %v467, 72
        %v738 = vpop.permute.xlu0 %737
        %v740 = vsel %vm468, %v736, 0
        %v743 = vsel %vm506, %v738, 0
        %745 = vmatpush.bf16.msra.mxu0 0
        %746 = vmatpush.bf16.msra.mxu0 0
        %747 = vmatpush.bf16.msra.mxu0 0
        %748 = vmatpush.bf16.msra.mxu0 0
        %749 = vmatpush.bf16.msra.mxu0 0
        %750 = vmatpush.bf16.msra.mxu0 0
        %751 = vmatpush.bf16.msra.mxu0 0
        %752 = vmatpush.bf16.msra.mxu0 %v743
        %753 = vmatmul.bf16.gmra.mxu0 %v740
        %v754 = vpop.f32.mrf.mxu0
        %v755 = vadd.f32 0.0, %v754
        %v756 = vpop.f32.mrf.mxu0
        %757 = vdwg.mxu0
        %v758 = vpack.c.bf16 %v755, %v755
        %s759 = scalar_lea.vmem %s6, 12
        %v760 = vld [vmem:[%s759] sm:$0xf]
        %v762 = vsel %vm468, %v758, 0
        %v765 = vsel %vm506, %v760, 0
        %767 = vmatpush.bf16.msra.mxu0 0
        %768 = vmatpush.bf16.msra.mxu0 0
        %769 = vmatpush.bf16.msra.mxu0 0
        %770 = vmatpush.bf16.msra.mxu0 0
        %771 = vmatpush.bf16.msra.mxu0 0
        %772 = vmatpush.bf16.msra.mxu0 0
        %773 = vmatpush.bf16.msra.mxu0 0
        %774 = vmatpush.bf16.msra.mxu0 %v765
        %775 = vmatmul.bf16.gmra.mxu0 %v762
        %v776 = vpop.f32.mrf.mxu0
        %v777 = vadd.f32 0.0, %v776
        %v778 = vpop.f32.mrf.mxu0
        %779 = vdwg.mxu0
        %v780 = vadd.f32 %v701, %v777
        %v781 = vadd.f32 %v388, %v780
        %v782 = vld [vmem:[%s7] sm:$0x1]
        %v784 = vperm.slane %v782, 0
        %v786 = vadd.f32 %v781, %v784
        %v787 = vld [vmem:[%s8] sm:$0x1]
        %v788 = vld [vmem:[#allocation2] sm:$0x1]
        %v789 = vsel %vm411, %v786, 0.0
        %790 = vadd.xlane.f32.xlu0 %v789
        %v791 = vpop.xlane.xlu0 %790
        %v792 = vrcp.pop 32.0
        %v793 = vmul.f32 32.0, %v792
        %v794 = vsub.f32 1.0, %v793
        %v795 = vmul.f32 %v792, %v794
        %v796 = vadd.f32 %v792, %v795
        %vm797 = vweird.f32 %v792
        %v798 = vsel %vm797, %v792, %v796
        %v799 = vmul.f32 %v791, %v798
        %v800 = vsub.f32 %v786, %v799
        %v801 = vmul.f32 %v800, %v800
        %v802 = vsel %vm411, %v801, 0.0
        %803 = vadd.xlane.f32.xlu0 %v802
        %v804 = vpop.xlane.xlu0 %803
        %v805 = vmul.f32 %v804, %v798
        %v806 = vadd.f32 %v805, 1e-05
        %v807 = vrsqrt.pop %v806
        %v808 = vmul.f32 %v807, %v806
        %v809 = vmul.f32 %v808, %v807
        %v810 = vmul.f32 0.5, %v809
        %v811 = vsub.f32 1.5, %v810
        %v812 = vmul.f32 %v807, %v811
        %vm813 = vweird.f32 %v806
        %vm814 = vweird.f32 %v807
        %vm815 = vmor %vm813, %vm814
        %v816 = vsel %vm815, %v807, %v812
        %v817 = vmul.f32 %v800, %v816
        %v819 = vperm.slane %v787, 0
        %v821 = vmul.f32 %v817, %v819
        %v823 = vperm.slane %v788, 0
        %v825 = vadd.f32 %v821, %v823
        %826 = vst.msk [vmem:[%s386] sm:$0xff] %vm411, %v825
        %p827 = scmp.lt.s32.totalorder %s22, 1
        %s828 = scalar_select %p827, %s22, 1
        %s829 = smul.addr %s828, 8
        %s830 = scalar_lea.vmem %s10, %s829
        // Predicated region
        $region65: #{transformer_forward.25} parent=59 // pred_check
          %p831 = pneg %p260
        $region66: #{transformer_forward.25} parent=59 // pred_check_branch
          %833 = sbr.rel (%p831) target = $region68
        $region67: #{transformer_forward.25} parent=59 // pred_region
          _
        $region68: #{transformer_forward.25} parent=59 // pred_fallthru
          _
      $region60: #{transformer_forward.25} parent=5 // pred_fallthru
        _
      %p834 = scmp.le.s32.totalorder 2, %s17
      // Predicated region
      $region69: #{transformer_forward.25} parent=5 // pred_check
        %p835 = pneg %p834
      $region70: #{transformer_forward.25} parent=5 // pred_check_branch
        %837 = sbr.rel (%p835) target = $region72
      $region71: #{transformer_forward.25} parent=5 // pred_region
        %s838 = ssub.s32 %s17, 2
        // Predicated region
        $region73: #{transformer_forward.25} parent=71 // pred_check
          %p839 = pneg %p266
        $region74: #{transformer_forward.25} parent=71 // pred_check_branch
          %841 = sbr.rel (%p839) target = $region76
        $region75: #{transformer_forward.25} parent=71 // pred_region
          %p842 = scmp.lt.s32.totalorder %s23, 1
          %s843 = scalar_select %p842, %s23, 1
          %s844 = smul.addr %s843, 8
          %s845 = scalar_lea.vmem %s10, %s844
        $region76: #{transformer_forward.25} parent=71 // pred_fallthru
          _
      $region72: #{transformer_forward.25} parent=5 // pred_fallthru
        _
    $region6: #{transformer_forward.25} parent=1 // loop_footer
      %s21 = sadd.s32 1, %s17
    $region7: #{transformer_forward.25} parent=1 // loop_footer_branch
      %16 = sbr.rel target = $region3
    $region8: #{transformer_forward.25} parent=1 // loop_exit
      _
    %846 = vsyncpa [#allocation3], 1
    %s847 = scalar_lea.sflag [#allocation3], 1
    %848 = vsyncpa %s847, 1

</llo_original>
